<compile_context>
chip_gen: v7x
topology: tpu7x:2x2x1
jax: 0.10.0
libtpu: 0.0.40
codegen_flags: <defaults>
</compile_context>

<pallas_src>
import functools

import jax
import jax.numpy as jnp
from jax.experimental import pallas as pl
from jax.experimental.pallas import tpu as pltpu

EPS = 1e-5


# ----------------------------------------------------------------------------
# helpers
# ----------------------------------------------------------------------------
def _round_up(x, m):
    return (x + m - 1) // m * m


def _pad_cols(a, cols):
    return jnp.pad(a, ((0, 0), (0, cols - a.shape[1])))


def _pad2(a, rows, cols):
    return jnp.pad(a, ((0, rows - a.shape[0]), (0, cols - a.shape[1])))


def fold_bn(gamma, beta, mean, var):
    scale = gamma / jnp.sqrt(var + EPS)
    shift = beta - mean * scale
    return scale.astype(jnp.float32), shift.astype(jnp.float32)


def _vmem_limit_bytes():
    """~85% of this generation's per-core VMEM (never hardcode v7x's 64 MiB)."""
    try:
        cap = int(pltpu.get_tpu_info().vmem_capacity_bytes)
    except Exception:
        cap = 64 * 1024 * 1024          # conservative fallback
    return max(int(cap * 0.85), 32 * 1024 * 1024)


# ----------------------------------------------------------------------------
# fused Pallas kernel
# ----------------------------------------------------------------------------
def _make_bottleneck_kernel(m, wp, dil, cbp, residual_kind):
    """Fully fused pre-act bottleneck; one padded image (m = Hp*Wp rows) per step.

    residual_kind: 'conv' (projection shortcut), 'up' (squeeze residual passed
    in), or 'identity' (residual taken from the already-loaded x).
    """
    off = wp * dil   # flattened-row shift of one 3x3-kernel row

    def kernel(x_ref, mask_ref, pre1_ref, w1_ref, b2_ref, w2_ref, b3_ref,
               w3_ref, *rest):
        if residual_kind == 'conv':
            presc_ref, wsc_ref, o_ref, a3_ref = rest
        elif residual_kind == 'up':
            r_ref, o_ref, a3_ref = rest
        else:                                           # identity
            o_ref, a3_ref = rest

        x = x_ref[0].astype(jnp.float32)                # (m, Cin_p): bf16 HBM -> f32 math
        pre1 = pre1_ref[...]                            # (2, Cin_p): [bn1 scale ; shift]

        # ---- stage 1: a = relu(bn2(conv1(relu(bn1(x)))))   (bn2 scale folded in W1)
        t = jnp.maximum(x * pre1[0:1, :] + pre1[1:2, :], 0.0)
        a = jnp.dot(t.astype(jnp.bfloat16), w1_ref[...],
                    preferred_element_type=jnp.float32)
        a = jnp.maximum(a + b2_ref[...], 0.0) * mask_ref[...]   # zero the halo ring
        a_bf = a.astype(jnp.bfloat16)                   # cast ONCE, reused by all taps

        # ---- stage 2: 3x3 conv (stride 1, dilation `dil`) as 3 fat matmuls.
        # The scratch holds `a` in three lane bands (kw = 0/1/2) shifted by
        # +dil / 0 / -dil rows, so a single read row carries the three kw taps
        # of one kernel row kh and the contraction runs over K = 3*Cb_p.
        # Scratch rows that are never written are only ever read by halo
        # output rows, which the wrapper discards (halo width == dilation
        # keeps all interior reads inside the written bands).
        a3_ref[off + dil:off + dil + m, 0:cbp] = a_bf             # kw = 0
        a3_ref[off:off + m, cbp:2 * cbp] = a_bf                   # kw = 1
        a3_ref[off - dil:off - dil + m, 2 * cbp:3 * cbp] = a_bf   # kw = 2

        acc = jnp.dot(a3_ref[0:m, :], w2_ref[0],
                      preferred_element_type=jnp.float32)             # kh = 0
        acc = acc + jnp.dot(a3_ref[off:off + m, :], w2_ref[1],
                            preferred_element_type=jnp.float32)       # kh = 1
        acc = acc + jnp.dot(a3_ref[2 * off:2 * off + m, :], w2_ref[2],
                            preferred_element_type=jnp.float32)       # kh = 2
        b = jnp.maximum(acc + b3_ref[...], 0.0)   # relu(bn3(.)), bn3 scale folded in W2

        # ---- stage 3: out = conv3(b) + residual   (fused, lane-dense output)
        out = jnp.dot(b.astype(jnp.bfloat16), w3_ref[...],
                      preferred_element_type=jnp.float32)
        if residual_kind == 'conv':
            presc = presc_ref[...]
            rs = jnp.maximum(x * presc[0:1, :] + presc[1:2, :], 0.0)
            out = out + jnp.dot(rs.astype(jnp.bfloat16), wsc_ref[...],
                                preferred_element_type=jnp.float32)
        elif residual_kind == 'up':
            out = out + r_ref[0].astype(jnp.float32)
        else:                                           # identity: Cin_p == planes_p
            out = out + x

        o_ref[0] = out.astype(o_ref.dtype)

    return kernel


# ----------------------------------------------------------------------------
# wrapper
# ----------------------------------------------------------------------------
def bottleneck_forward(x_nchw, p, *, mode='NORM', stride=1, dilation=1, k=1):
    if stride != 1:
        # TODO(synk): stride > 1 needs in-kernel output decimation for the fused 3x3 path.
        raise NotImplementedError("fused Bottleneck kernel supports stride == 1")

    n, cin, h, w = x_nchw.shape
    d = dilation
    hp, wp = h + 2 * d, w + 2 * d
    m = hp * wp

    cb = p['conv1'].shape[0]
    planes = p['conv3'].shape[0]
    cinp = _round_up(cin, 128)        # lane-dense everything
    cbp = _round_up(cb, 128)
    planesp = _round_up(planes, 128)

    # NHWC, zero-pad the conv2 halo + lane-pad channels, flatten spatial, store bf16.
    x_nhwc = jnp.transpose(x_nchw, (0, 2, 3, 1)).astype(jnp.float32)
    xp = jnp.pad(x_nhwc, ((0, 0), (d, d), (d, d), (0, 0))).reshape(n, m, cin)
    xp2d = jnp.pad(xp, ((0, 0), (0, 0), (0, cinp - cin))).astype(jnp.bfloat16)

    s1, b1 = fold_bn(*p['bn1'])
    s2, b2 = fold_bn(*p['bn2'])
    s3, b3 = fold_bn(*p['bn3'])

    pre1 = _pad_cols(jnp.stack([s1, b1]), cinp)               # (2, Cin_p)

    w1 = p['conv1'][:, :, 0, 0].T * s2[None, :]               # (Cin, Cb), bn2 scale folded
    w1f = _pad2(w1, cinp, cbp).astype(jnp.bfloat16)

    b2r = _pad_cols(b2.reshape(1, cb), cbp)
    b3r = _pad_cols(b3.reshape(1, cb), cbp)

    w2 = jnp.transpose(p['conv2'], (2, 3, 1, 0)) * s3[None, None, None, :]  # (3,3,Cb,Cb)
    w2p = jnp.zeros((3, 3, cbp, cbp), jnp.float32).at[:, :, :cb, :cb].set(w2)
    w2g = w2p.reshape(3, 3 * cbp, cbp).astype(jnp.bfloat16)   # one fat K=3*Cb_p weight / kh

    w3 = p['conv3'][:, :, 0, 0].T                             # (Cb, planes)
    w3p = _pad2(w3, cbp, planesp).astype(jnp.bfloat16)

    # interior mask: 1 on real pixels, 0 on the conv2 zero-padding ring.
    mi = (jnp.arange(hp) >= d) & (jnp.arange(hp) < d + h)
    mj = (jnp.arange(wp) >= d) & (jnp.arange(wp) < d + w)
    mask = (mi[:, None] & mj[None, :]).astype(jnp.float32).reshape(m, 1)

    if mode != 'UP' and (cin != planes or stride > 1):
        residual_kind = 'conv'
    elif mode == 'UP':
        residual_kind = 'up'
    else:
        residual_kind = 'identity'

    inputs = [xp2d, mask, pre1, w1f, b2r, w2g, b3r, w3p]
    specs = [
        pl.BlockSpec((1, m, cinp), lambda i: (i, 0, 0)),
        pl.BlockSpec((m, 1), lambda i: (0, 0)),
        pl.BlockSpec((2, cinp), lambda i: (0, 0)),
        pl.BlockSpec((cinp, cbp), lambda i: (0, 0)),
        pl.BlockSpec((1, cbp), lambda i: (0, 0)),
        pl.BlockSpec((3, 3 * cbp, cbp), lambda i: (0, 0, 0)),
        pl.BlockSpec((1, cbp), lambda i: (0, 0)),
        pl.BlockSpec((cbp, planesp), lambda i: (0, 0)),
    ]

    flops = 2 * n * m * (cinp * cbp + 9 * cbp * cbp + cbp * planesp)
    bytes_accessed = (n * m * cinp * 2 + n * m * planesp * 4 + m * 4
                      + 2 * cinp * 4 + cinp * cbp * 2 + 2 * cbp * 4 * 2
                      + 9 * cbp * cbp * 2 + cbp * planesp * 2)

    if residual_kind == 'conv':
        ssc, bsc = fold_bn(*p['bn_sc'])
        presc = _pad_cols(jnp.stack([ssc, bsc]), cinp)
        wsc = p['conv_sc'][:, :, 0, 0].T                      # (Cin, planes)
        wscp = _pad2(wsc, cinp, planesp).astype(jnp.bfloat16)
        inputs += [presc, wscp]
        specs += [pl.BlockSpec((2, cinp), lambda i: (0, 0)),
                  pl.BlockSpec((cinp, planesp), lambda i: (0, 0))]
        flops += 2 * n * m * cinp * planesp
        bytes_accessed += 2 * cinp * 4 + cinp * planesp * 2
    elif residual_kind == 'up':
        # TODO(synk): squeeze_idt stays in plain JAX (assumes cin // k == planes, as the module does).
        r = xp.reshape(n, m, cin // k, k).sum(-1)
        r = jnp.pad(r, ((0, 0), (0, 0), (0, planesp - r.shape[-1])))
        inputs += [r]
        specs += [pl.BlockSpec((1, m, planesp), lambda i: (i, 0, 0))]
        bytes_accessed += n * m * planesp * 4
    else:
        assert cinp == planesp, "identity residual requires cin == planes"

    kernel = _make_bottleneck_kernel(m, wp, d, cbp, residual_kind)
    rows3 = m + 2 * wp * d            # row-padded scratch for the 3 kh read windows

    out = pl.pallas_call(
        kernel,
        out_shape=jax.ShapeDtypeStruct((n, m, planesp), jnp.float32),
        grid=(n,),
        in_specs=specs,
        out_specs=pl.BlockSpec((1, m, planesp), lambda i: (i, 0, 0)),
        scratch_shapes=[pltpu.VMEM((rows3, 3 * cbp), jnp.bfloat16)],
        compiler_params=pltpu.CompilerParams(
            dimension_semantics=("parallel",),
            vmem_limit_bytes=_vmem_limit_bytes()),
        cost_estimate=pl.CostEstimate(flops=int(flops), transcendentals=0,
                                      bytes_accessed=int(bytes_accessed)),
    )(*inputs)

    # drop the padded halo ring and the lane-padding channels, back to NCHW.
    out = out.reshape(n, hp, wp, planesp)[:, d:d + h, d:d + w, :planes]
    return jnp.transpose(out, (0, 3, 1, 2))


# ----------------------------------------------------------------------------
# Pure-JAX reference (mirrors the PyTorch module, BN in eval/inference mode)
# ----------------------------------------------------------------------------
def reference_forward(x, p, *, mode='NORM', stride=1, dilation=1, k=1):
    def bn(y, g, b, m, v):
        sh = (1, -1, 1, 1)
        return (y - m.reshape(sh)) / jnp.sqrt(v.reshape(sh) + EPS) * g.reshape(sh) + b.reshape(sh)

    def conv(y, wgt, s=1, d=1, pad=0):
        return jax.lax.conv_general_dilated(
            y, wgt, (s, s), [(pad, pad), (pad, pad)],
            rhs_dilation=(d, d), dimension_numbers=('NCHW', 'OIHW', 'NCHW'))

    out = jax.nn.relu(bn(x, *p['bn1']))
    out = conv(out, p['conv1'])
    out = jax.nn.relu(bn(out, *p['bn2']))
    out = conv(out, p['conv2'], s=stride, d=dilation, pad=dilation)
    out = jax.nn.relu(bn(out, *p['bn3']))
    out = conv(out, p['conv3'])
    planes = p['conv3'].shape[0]
    n, c, h, w = x.shape
    if mode == 'UP':
        residual = x.reshape(n, c // k, k, h, w).sum(2)
    elif (c != planes) or stride > 1:
        r = jax.nn.relu(bn(x, *p['bn_sc']))
        residual = conv(r, p['conv_sc'], s=stride)
    else:
        residual = x
    return out + residual


# ----------------------------------------------------------------------------
# Parameter construction + demo
# ----------------------------------------------------------------------------
def make_params(key, inplanes, planes):
    btnk = planes // 4
    ks = jax.random.split(key, 16)

    def bn_params(k0, k1, k2, k3, c):
        return (jax.random.uniform(k0, (c,), jnp.float32, 0.5, 1.5),   # gamma
                0.1 * jax.random.normal(k1, (c,), jnp.float32),        # beta
                0.1 * jax.random.normal(k2, (c,), jnp.float32),        # running mean
                jax.random.uniform(k3, (c,), jnp.float32, 0.5, 1.5))   # running var

    p = {
        'bn1': bn_params(ks[0], ks[1], ks[2], ks[3], inplanes),
        'conv1': 0.1 * jax.random.normal(ks[4], (btnk, inplanes, 1, 1), jnp.float32),
        'bn2': bn_params(ks[5], ks[6], ks[7], ks[8], btnk),
        'conv2': 0.1 * jax.random.normal(ks[9], (btnk, btnk, 3, 3), jnp.float32),
        'bn3': bn_params(ks[10], ks[11], ks[12], ks[13], btnk),
        'conv3': 0.1 * jax.random.normal(ks[14], (planes, btnk, 1, 1), jnp.float32),
    }
    k_sc = jax.random.split(ks[15], 5)
    p['bn_sc'] = bn_params(k_sc[0], k_sc[1], k_sc[2], k_sc[3], inplanes)
    p['conv_sc'] = 0.1 * jax.random.normal(k_sc[4], (planes, inplanes, 1, 1), jnp.float32)
    return p


if __name__ == "__main__":
    key = jax.random.PRNGKey(0)
    kx, kp, kx2, kp2 = jax.random.split(key, 4)

    fwd = functools.partial(bottleneck_forward, mode='NORM', stride=1,
                            dilation=1, k=1)
    jfwd = jax.jit(fwd)

    # config 1: Bottleneck(inplanes=8, planes=16) -> projection shortcut path
    N, INPLANES, PLANES, H, W = 2, 8, 16, 16, 16
    x = jax.random.normal(kx, (N, INPLANES, H, W), jnp.float32)
    params = make_params(kp, INPLANES, PLANES)
    out = jax.block_until_ready(jfwd(x, params))
    ref = reference_forward(x, params, mode='NORM', stride=1, dilation=1, k=1)
    assert out.shape == (N, PLANES, H, W), out.shape
    err = float(jnp.max(jnp.abs(out - ref)))
    # bf16 MXU operands + bf16 activation storage (f32 accumulation) -> relaxed tolerance.
    assert jnp.allclose(out, ref, atol=3e-2, rtol=3e-2), err

    # config 2: Bottleneck(inplanes=16, planes=16) -> fused in-kernel identity residual
    x2 = jax.random.normal(kx2, (N, 16, H, W), jnp.float32)
    params2 = make_params(kp2, 16, 16)
    out2 = jax.block_until_ready(jfwd(x2, params2))
    ref2 = reference_forward(x2, params2, mode='NORM', stride=1, dilation=1, k=1)
    assert out2.shape == (N, 16, H, W), out2.shape
    err2 = float(jnp.max(jnp.abs(out2 - ref2)))
    assert jnp.allclose(out2, ref2, atol=3e-2, rtol=3e-2), err2

    print("KERNEL_OK")
</pallas_src>

<mosaic_0001>
module attributes {stable_mosaic.version = 11 : i64} {
  func.func @kernel(%arg0: i32, %arg1: memref<1x324x128xbf16, #tpu.memory_space<vmem>>, %arg2: memref<324x1xf32, #tpu.memory_space<vmem>>, %arg3: memref<2x128xf32, #tpu.memory_space<vmem>>, %arg4: memref<128x128xbf16, #tpu.memory_space<vmem>>, %arg5: memref<1x128xf32, #tpu.memory_space<vmem>>, %arg6: memref<3x384x128xbf16, #tpu.memory_space<vmem>>, %arg7: memref<1x128xf32, #tpu.memory_space<vmem>>, %arg8: memref<128x128xbf16, #tpu.memory_space<vmem>>, %arg9: memref<2x128xf32, #tpu.memory_space<vmem>>, %arg10: memref<128x128xbf16, #tpu.memory_space<vmem>>, %arg11: memref<1x324x128xf32, #tpu.memory_space<vmem>>, %arg12: memref<360x384xbf16, #tpu.memory_space<vmem>>) attributes {dimension_semantics = [#tpu.dimension_semantics<parallel>], iteration_bounds = array<i64: 2>, scalar_prefetch = 0 : i64, scratch_operands = 1 : i64, tpu.core_type = #tpu.core_type<tc>, window_params = [{transform_indices = @transform_0, window_bounds = array<i64: 1, 324, 128>}, {pipeline_mode = #tpu.pipeline_mode<synchronous>, transform_indices = @transform_1, window_bounds = array<i64: 324, 1>}, {pipeline_mode = #tpu.pipeline_mode<synchronous>, transform_indices = @transform_2, window_bounds = array<i64: 2, 128>}, {pipeline_mode = #tpu.pipeline_mode<synchronous>, transform_indices = @transform_3, window_bounds = array<i64: 128, 128>}, {pipeline_mode = #tpu.pipeline_mode<synchronous>, transform_indices = @transform_4, window_bounds = array<i64: 1, 128>}, {pipeline_mode = #tpu.pipeline_mode<synchronous>, transform_indices = @transform_5, window_bounds = array<i64: 3, 384, 128>}, {pipeline_mode = #tpu.pipeline_mode<synchronous>, transform_indices = @transform_6, window_bounds = array<i64: 1, 128>}, {pipeline_mode = #tpu.pipeline_mode<synchronous>, transform_indices = @transform_7, window_bounds = array<i64: 128, 128>}, {pipeline_mode = #tpu.pipeline_mode<synchronous>, transform_indices = @transform_8, window_bounds = array<i64: 2, 128>}, {pipeline_mode = #tpu.pipeline_mode<synchronous>, transform_indices = @transform_9, window_bounds = array<i64: 128, 128>}, {transform_indices = @transform_10, window_bounds = array<i64: 1, 324, 128>}]} {
    %c0 = arith.constant 0 : index
    %c0_0 = arith.constant 0 : index
    %c0_1 = arith.constant 0 : index
    %0 = vector.load %arg1[%c0, %c0_0, %c0_1] : memref<1x324x128xbf16, #tpu.memory_space<vmem>>, vector<1x324x128xbf16>
    %1 = vector.shape_cast %0 : vector<1x324x128xbf16> to vector<324x128xbf16>
    %2 = arith.extf %1 : vector<324x128xbf16> to vector<324x128xf32>
    %c0_2 = arith.constant 0 : index
    %c0_3 = arith.constant 0 : index
    %3 = vector.load %arg3[%c0_2, %c0_3] : memref<2x128xf32, #tpu.memory_space<vmem>>, vector<2x128xf32>
    %4 = vector.extract_strided_slice %3 {offsets = [0, 0], sizes = [1, 128], strides = [1, 1]} : vector<2x128xf32> to vector<1x128xf32>
    %5 = vector.broadcast %4 : vector<1x128xf32> to vector<324x128xf32>
    %6 = arith.mulf %2, %5 : vector<324x128xf32>
    %7 = vector.extract_strided_slice %3 {offsets = [1, 0], sizes = [1, 128], strides = [1, 1]} : vector<2x128xf32> to vector<1x128xf32>
    %8 = vector.broadcast %7 : vector<1x128xf32> to vector<324x128xf32>
    %9 = arith.addf %6, %8 : vector<324x128xf32>
    %cst = arith.constant 0.000000e+00 : f32
    %10 = vector.broadcast %cst : f32 to vector<324x128xf32>
    %11 = arith.maximumf %9, %10 : vector<324x128xf32>
    %12 = arith.truncf %11 : vector<324x128xf32> to vector<324x128xbf16>
    %c0_4 = arith.constant 0 : index
    %c0_5 = arith.constant 0 : index
    %13 = vector.load %arg4[%c0_4, %c0_5] : memref<128x128xbf16, #tpu.memory_space<vmem>>, vector<128x128xbf16>
    %cst_6 = arith.constant dense<0.000000e+00> : vector<324x128xf32>
    %14 = tpu.matmul %12, %13, %cst_6 {dimension_numbers = #tpu.dot_dimension_numbers<[1], [0], [0], [1], [0, 0, 1, 1], [], []>} : vector<324x128xbf16>, vector<128x128xbf16>, vector<324x128xf32> -> vector<324x128xf32>
    %c0_7 = arith.constant 0 : index
    %c0_8 = arith.constant 0 : index
    %15 = vector.load %arg5[%c0_7, %c0_8] : memref<1x128xf32, #tpu.memory_space<vmem>>, vector<1x128xf32>
    %16 = vector.broadcast %15 : vector<1x128xf32> to vector<324x128xf32>
    %17 = arith.addf %14, %16 : vector<324x128xf32>
    %cst_9 = arith.constant 0.000000e+00 : f32
    %18 = vector.broadcast %cst_9 : f32 to vector<324x128xf32>
    %19 = arith.maximumf %17, %18 : vector<324x128xf32>
    %c0_10 = arith.constant 0 : index
    %c0_11 = arith.constant 0 : index
    %20 = vector.load %arg2[%c0_10, %c0_11] : memref<324x1xf32, #tpu.memory_space<vmem>>, vector<324x1xf32>
    %21 = vector.broadcast %20 : vector<324x1xf32> to vector<324x128xf32>
    %22 = arith.mulf %19, %21 : vector<324x128xf32>
    %23 = arith.truncf %22 : vector<324x128xf32> to vector<324x128xbf16>
    %c19 = arith.constant 19 : index
    %c0_12 = arith.constant 0 : index
    %24 = vector.load %arg12[%c19, %c0_12] : memref<360x384xbf16, #tpu.memory_space<vmem>>, vector<324x128xbf16>
    tpu.vector_store %arg12[%c19, %c0_12], %23 {strides = array<i32>} : memref<360x384xbf16, #tpu.memory_space<vmem>>, vector<324x128xbf16>,
    %c18 = arith.constant 18 : index
    %c128 = arith.constant 128 : index
    %25 = vector.load %arg12[%c18, %c128] : memref<360x384xbf16, #tpu.memory_space<vmem>>, vector<324x128xbf16>
    tpu.vector_store %arg12[%c18, %c128], %23 {strides = array<i32>} : memref<360x384xbf16, #tpu.memory_space<vmem>>, vector<324x128xbf16>,
    %c17 = arith.constant 17 : index
    %c256 = arith.constant 256 : index
    %26 = vector.load %arg12[%c17, %c256] : memref<360x384xbf16, #tpu.memory_space<vmem>>, vector<324x128xbf16>
    tpu.vector_store %arg12[%c17, %c256], %23 {strides = array<i32>} : memref<360x384xbf16, #tpu.memory_space<vmem>>, vector<324x128xbf16>,
    %c0_13 = arith.constant 0 : index
    %c0_14 = arith.constant 0 : index
    %27 = vector.load %arg12[%c0_13, %c0_14] : memref<360x384xbf16, #tpu.memory_space<vmem>>, vector<324x384xbf16>
    %c0_15 = arith.constant 0 : index
    %c0_16 = arith.constant 0 : index
    %c0_17 = arith.constant 0 : index
    %28 = vector.load %arg6[%c0_15, %c0_16, %c0_17] : memref<3x384x128xbf16, #tpu.memory_space<vmem>>, vector<1x384x128xbf16>
    %29 = vector.shape_cast %28 : vector<1x384x128xbf16> to vector<384x128xbf16>
    %cst_18 = arith.constant dense<0.000000e+00> : vector<324x128xf32>
    %30 = tpu.matmul %27, %29, %cst_18 {dimension_numbers = #tpu.dot_dimension_numbers<[1], [0], [0], [1], [0, 0, 1, 1], [], []>} : vector<324x384xbf16>, vector<384x128xbf16>, vector<324x128xf32> -> vector<324x128xf32>
    %c18_19 = arith.constant 18 : index
    %c0_20 = arith.constant 0 : index
    %31 = vector.load %arg12[%c18_19, %c0_20] : memref<360x384xbf16, #tpu.memory_space<vmem>>, vector<324x384xbf16>
    %c1 = arith.constant 1 : index
    %c0_21 = arith.constant 0 : index
    %c0_22 = arith.constant 0 : index
    %32 = vector.load %arg6[%c1, %c0_21, %c0_22] : memref<3x384x128xbf16, #tpu.memory_space<vmem>>, vector<1x384x128xbf16>
    %33 = vector.shape_cast %32 : vector<1x384x128xbf16> to vector<384x128xbf16>
    %cst_23 = arith.constant dense<0.000000e+00> : vector<324x128xf32>
    %34 = tpu.matmul %31, %33, %cst_23 {dimension_numbers = #tpu.dot_dimension_numbers<[1], [0], [0], [1], [0, 0, 1, 1], [], []>} : vector<324x384xbf16>, vector<384x128xbf16>, vector<324x128xf32> -> vector<324x128xf32>
    %35 = arith.addf %30, %34 : vector<324x128xf32>
    %c36 = arith.constant 36 : index
    %c0_24 = arith.constant 0 : index
    %36 = vector.load %arg12[%c36, %c0_24] : memref<360x384xbf16, #tpu.memory_space<vmem>>, vector<324x384xbf16>
    %c2 = arith.constant 2 : index
    %c0_25 = arith.constant 0 : index
    %c0_26 = arith.constant 0 : index
    %37 = vector.load %arg6[%c2, %c0_25, %c0_26] : memref<3x384x128xbf16, #tpu.memory_space<vmem>>, vector<1x384x128xbf16>
    %38 = vector.shape_cast %37 : vector<1x384x128xbf16> to vector<384x128xbf16>
    %cst_27 = arith.constant dense<0.000000e+00> : vector<324x128xf32>
    %39 = tpu.matmul %36, %38, %cst_27 {dimension_numbers = #tpu.dot_dimension_numbers<[1], [0], [0], [1], [0, 0, 1, 1], [], []>} : vector<324x384xbf16>, vector<384x128xbf16>, vector<324x128xf32> -> vector<324x128xf32>
    %40 = arith.addf %35, %39 : vector<324x128xf32>
    %c0_28 = arith.constant 0 : index
    %c0_29 = arith.constant 0 : index
    %41 = vector.load %arg7[%c0_28, %c0_29] : memref<1x128xf32, #tpu.memory_space<vmem>>, vector<1x128xf32>
    %42 = vector.broadcast %41 : vector<1x128xf32> to vector<324x128xf32>
    %43 = arith.addf %40, %42 : vector<324x128xf32>
    %cst_30 = arith.constant 0.000000e+00 : f32
    %44 = vector.broadcast %cst_30 : f32 to vector<324x128xf32>
    %45 = arith.maximumf %43, %44 : vector<324x128xf32>
    %46 = arith.truncf %45 : vector<324x128xf32> to vector<324x128xbf16>
    %c0_31 = arith.constant 0 : index
    %c0_32 = arith.constant 0 : index
    %47 = vector.load %arg8[%c0_31, %c0_32] : memref<128x128xbf16, #tpu.memory_space<vmem>>, vector<128x128xbf16>
    %cst_33 = arith.constant dense<0.000000e+00> : vector<324x128xf32>
    %48 = tpu.matmul %46, %47, %cst_33 {dimension_numbers = #tpu.dot_dimension_numbers<[1], [0], [0], [1], [0, 0, 1, 1], [], []>} : vector<324x128xbf16>, vector<128x128xbf16>, vector<324x128xf32> -> vector<324x128xf32>
    %c0_34 = arith.constant 0 : index
    %c0_35 = arith.constant 0 : index
    %49 = vector.load %arg9[%c0_34, %c0_35] : memref<2x128xf32, #tpu.memory_space<vmem>>, vector<2x128xf32>
    %50 = vector.extract_strided_slice %49 {offsets = [0, 0], sizes = [1, 128], strides = [1, 1]} : vector<2x128xf32> to vector<1x128xf32>
    %51 = vector.broadcast %50 : vector<1x128xf32> to vector<324x128xf32>
    %52 = arith.mulf %2, %51 : vector<324x128xf32>
    %53 = vector.extract_strided_slice %49 {offsets = [1, 0], sizes = [1, 128], strides = [1, 1]} : vector<2x128xf32> to vector<1x128xf32>
    %54 = vector.broadcast %53 : vector<1x128xf32> to vector<324x128xf32>
    %55 = arith.addf %52, %54 : vector<324x128xf32>
    %cst_36 = arith.constant 0.000000e+00 : f32
    %56 = vector.broadcast %cst_36 : f32 to vector<324x128xf32>
    %57 = arith.maximumf %55, %56 : vector<324x128xf32>
    %58 = arith.truncf %57 : vector<324x128xf32> to vector<324x128xbf16>
    %c0_37 = arith.constant 0 : index
    %c0_38 = arith.constant 0 : index
    %59 = vector.load %arg10[%c0_37, %c0_38] : memref<128x128xbf16, #tpu.memory_space<vmem>>, vector<128x128xbf16>
    %cst_39 = arith.constant dense<0.000000e+00> : vector<324x128xf32>
    %60 = tpu.matmul %58, %59, %cst_39 {dimension_numbers = #tpu.dot_dimension_numbers<[1], [0], [0], [1], [0, 0, 1, 1], [], []>} : vector<324x128xbf16>, vector<128x128xbf16>, vector<324x128xf32> -> vector<324x128xf32>
    %61 = arith.addf %48, %60 : vector<324x128xf32>
    %c0_40 = arith.constant 0 : index
    %c0_41 = arith.constant 0 : index
    %c0_42 = arith.constant 0 : index
    %62 = vector.load %arg11[%c0_40, %c0_41, %c0_42] : memref<1x324x128xf32, #tpu.memory_space<vmem>>, vector<1x324x128xf32>
    %63 = vector.shape_cast %62 : vector<1x324x128xf32> to vector<324x128xf32>
    %64 = vector.shape_cast %61 : vector<324x128xf32> to vector<1x324x128xf32>
    tpu.vector_store %arg11[%c0_40, %c0_41, %c0_42], %64 {strides = array<i32>} : memref<1x324x128xf32, #tpu.memory_space<vmem>>, vector<1x324x128xf32>,
    return
  }
  func.func @transform_0(%arg0: i32) -> (i32, i32, i32) {
    %c0_i32 = arith.constant 0 : i32
    %c0_i32_0 = arith.constant 0 : i32
    %c0_i32_1 = arith.constant 0 : i32
    return %arg0, %c0_i32, %c0_i32_0 : i32, i32, i32
  }
  func.func @transform_1(%arg0: i32) -> (i32, i32) {
    %c0_i32 = arith.constant 0 : i32
    %c0_i32_0 = arith.constant 0 : i32
    %c0_i32_1 = arith.constant 0 : i32
    return %c0_i32, %c0_i32_0 : i32, i32
  }
  func.func @transform_2(%arg0: i32) -> (i32, i32) {
    %c0_i32 = arith.constant 0 : i32
    %c0_i32_0 = arith.constant 0 : i32
    %c0_i32_1 = arith.constant 0 : i32
    return %c0_i32, %c0_i32_0 : i32, i32
  }
  func.func @transform_3(%arg0: i32) -> (i32, i32) {
    %c0_i32 = arith.constant 0 : i32
    %c0_i32_0 = arith.constant 0 : i32
    %c0_i32_1 = arith.constant 0 : i32
    return %c0_i32, %c0_i32_0 : i32, i32
  }
  func.func @transform_4(%arg0: i32) -> (i32, i32) {
    %c0_i32 = arith.constant 0 : i32
    %c0_i32_0 = arith.constant 0 : i32
    %c0_i32_1 = arith.constant 0 : i32
    return %c0_i32, %c0_i32_0 : i32, i32
  }
  func.func @transform_5(%arg0: i32) -> (i32, i32, i32) {
    %c0_i32 = arith.constant 0 : i32
    %c0_i32_0 = arith.constant 0 : i32
    %c0_i32_1 = arith.constant 0 : i32
    %c0_i32_2 = arith.constant 0 : i32
    return %c0_i32, %c0_i32_0, %c0_i32_1 : i32, i32, i32
  }
  func.func @transform_6(%arg0: i32) -> (i32, i32) {
    %c0_i32 = arith.constant 0 : i32
    %c0_i32_0 = arith.constant 0 : i32
    %c0_i32_1 = arith.constant 0 : i32
    return %c0_i32, %c0_i32_0 : i32, i32
  }
  func.func @transform_7(%arg0: i32) -> (i32, i32) {
    %c0_i32 = arith.constant 0 : i32
    %c0_i32_0 = arith.constant 0 : i32
    %c0_i32_1 = arith.constant 0 : i32
    return %c0_i32, %c0_i32_0 : i32, i32
  }
  func.func @transform_8(%arg0: i32) -> (i32, i32) {
    %c0_i32 = arith.constant 0 : i32
    %c0_i32_0 = arith.constant 0 : i32
    %c0_i32_1 = arith.constant 0 : i32
    return %c0_i32, %c0_i32_0 : i32, i32
  }
  func.func @transform_9(%arg0: i32) -> (i32, i32) {
    %c0_i32 = arith.constant 0 : i32
    %c0_i32_0 = arith.constant 0 : i32
    %c0_i32_1 = arith.constant 0 : i32
    return %c0_i32, %c0_i32_0 : i32, i32
  }
  func.func @transform_10(%arg0: i32) -> (i32, i32, i32) {
    %c0_i32 = arith.constant 0 : i32
    %c0_i32_0 = arith.constant 0 : i32
    %c0_i32_1 = arith.constant 0 : i32
    return %arg0, %c0_i32, %c0_i32_0 : i32, i32, i32
  }
}

</mosaic_0001>

<llo_original>
// kernel: bottleneck_forward.1
$region0: #{bottleneck_forward.1}
  #allocation0 [shape = 'u32[]', space=smem, size = 0x4, offset = 0x4, fixed_abs, tag = 'smem constant byte address 0x4 - core index']
  #allocation1 [shape = 'u32[144,128]{1,0:T(1,128)}', space=vmem, size = 0x12000, scoped, tag = 'internal scratch']
  #allocation2 [shape = 'bf16[360,384]{1,0:T(8,128)(2,1)}', space=vmem, size = 0x43800, scoped, tag = 'scratch operand']
  %s0 = inlined_call_operand.vmem [shape: bf16[2,324,128], index: 0, kind: input, shape index: {}]
  %s1 = inlined_call_operand.vmem [shape: f32[324,1], index: 1, kind: input, shape index: {}]
  %s2 = inlined_call_operand.vmem [shape: f32[2,128], index: 2, kind: input, shape index: {}]
  %s3 = inlined_call_operand.vmem [shape: bf16[128,128], index: 3, kind: input, shape index: {}]
  %s4 = inlined_call_operand.vmem [shape: f32[1,128], index: 4, kind: input, shape index: {}]
  %s5 = inlined_call_operand.vmem [shape: bf16[3,384,128], index: 5, kind: input, shape index: {}]
  %s6 = inlined_call_operand.vmem [shape: f32[1,128], index: 6, kind: input, shape index: {}]
  %s7 = inlined_call_operand.vmem [shape: bf16[128,128], index: 7, kind: input, shape index: {}]
  %s8 = inlined_call_operand.vmem [shape: f32[2,128], index: 8, kind: input, shape index: {}]
  %s9 = inlined_call_operand.vmem [shape: bf16[128,128], index: 9, kind: input, shape index: {}]
  %s10 = inlined_call_operand.vmem [shape: f32[2,324,128], index: 10, kind: output, shape index: {}]
  %s11 = sld [smem:[#allocation0]]
  $region73: #{bottleneck_forward.1} parent=0
    _
  %s13 = ssub.s32 1, %s11
  %s14 = scalar_select 0, %s13, %s11
  loop: start=0, step=1, limit=4
  $region2: #{bottleneck_forward.1} parent=0 // loop_pre_header
    _
  $region3: #{bottleneck_forward.1} parent=0 // loop_header
    %s16 = sphi 0, %s20
    %p17 = scmp.ge.s32.totalorder %s16, 4
    %s26 = sphi 0, %s28
    %s29 = sphi 0, %s26
    %s30 = sphi 0, %s29
    %s46 = sphi 0, %s30
    %s50 = sphi 0, %s50
    %s52 = sphi 0, %s50
    %s53 = sphi 0, %s52
    %s67 = sphi 0, %s53
    %s71 = sphi 0, %s71
    %s73 = sphi 0, %s71
    %s74 = sphi 0, %s73
    %s88 = sphi 0, %s74
    %s92 = sphi 0, %s92
    %s94 = sphi 0, %s92
    %s95 = sphi 0, %s94
    %s109 = sphi 0, %s95
    %s113 = sphi 0, %s113
    %s115 = sphi 0, %s113
    %s116 = sphi 0, %s115
    %s130 = sphi 0, %s116
    %s134 = sphi 0, %s134
    %s136 = sphi 0, %s134
    %s137 = sphi 0, %s136
    %s151 = sphi 0, %s137
    %s155 = sphi 0, %s155
    %s157 = sphi 0, %s155
    %s158 = sphi 0, %s157
    %s172 = sphi 0, %s158
    %s176 = sphi 0, %s176
    %s178 = sphi 0, %s176
    %s179 = sphi 0, %s178
    %s193 = sphi 0, %s179
    %s197 = sphi 0, %s197
    %s199 = sphi 0, %s197
    %s200 = sphi 0, %s199
    %s214 = sphi 0, %s200
    %s218 = sphi 0, %s218
    %s220 = sphi 0, %s218
    %s221 = sphi 0, %s220
    %s235 = sphi 0, %s221
    %s241 = sphi 0, %s243
    %s244 = sphi 0, %s241
    %s245 = sphi 0, %s244
    %s261 = sphi 0, %s245
  $region4: #{bottleneck_forward.1} parent=0 // loop_header_branch
    %19 = sbr.rel (%p17) target = $region8
  $region5: #{bottleneck_forward.1} parent=0 // loop_body
    %s21 = ssub.s32 %s16, 1
    %s22 = ssub.s32 %s16, 2
    %s23 = sadd.s32 %s16, 1
    %s24 = ssub.s32 %s16, %s23
    %p25 = scmp.eq.s32.totalorder %s24, 0
    %s27 = sadd.s32 %s26, 1
    %s28 = scalar_select %p25, %s26, %s27
    %p31 = pneg %p25
    %p32 = scmp.eq.s32.totalorder %s16, 1
    %p33 = por %p31, %p32
    %p34 = scmp.ne.s32.totalorder %s26, %s29
    %p35 = scmp.eq.s32.totalorder %s16, 0
    %p36 = por %p34, %p35
    %p37 = scmp.ne.s32.totalorder %s26, %s29
    %p38 = scmp.eq.s32.totalorder %s21, 1
    %p39 = por %p37, %p38
    %p40 = scmp.ne.s32.totalorder %s29, %s30
    %p41 = scmp.eq.s32.totalorder %s21, 0
    %p42 = por %p40, %p41
    %p43 = scmp.ne.s32.totalorder %s29, %s30
    %p44 = scmp.eq.s32.totalorder %s22, 1
    %p45 = por %p43, %p44
    %p47 = scmp.ne.s32.totalorder %s30, %s46
    %p48 = scmp.eq.s32.totalorder %s22, 0
    %p49 = por %p47, %p48
    %s51 = sadd.s32 %s50, 1
    %p54 = scmp.eq.s32.totalorder %s16, 1
    %p55 = scmp.ne.s32.totalorder %s50, %s52
    %p56 = scmp.eq.s32.totalorder %s16, 0
    %p57 = por %p55, %p56
    %p58 = scmp.ne.s32.totalorder %s50, %s52
    %p59 = scmp.eq.s32.totalorder %s21, 1
    %p60 = por %p58, %p59
    %p61 = scmp.ne.s32.totalorder %s52, %s53
    %p62 = scmp.eq.s32.totalorder %s21, 0
    %p63 = por %p61, %p62
    %p64 = scmp.ne.s32.totalorder %s52, %s53
    %p65 = scmp.eq.s32.totalorder %s22, 1
    %p66 = por %p64, %p65
    %p68 = scmp.ne.s32.totalorder %s53, %s67
    %p69 = scmp.eq.s32.totalorder %s22, 0
    %p70 = por %p68, %p69
    %s72 = sadd.s32 %s71, 1
    %p75 = scmp.eq.s32.totalorder %s16, 1
    %p76 = scmp.ne.s32.totalorder %s71, %s73
    %p77 = scmp.eq.s32.totalorder %s16, 0
    %p78 = por %p76, %p77
    %p79 = scmp.ne.s32.totalorder %s71, %s73
    %p80 = scmp.eq.s32.totalorder %s21, 1
    %p81 = por %p79, %p80
    %p82 = scmp.ne.s32.totalorder %s73, %s74
    %p83 = scmp.eq.s32.totalorder %s21, 0
    %p84 = por %p82, %p83
    %p85 = scmp.ne.s32.totalorder %s73, %s74
    %p86 = scmp.eq.s32.totalorder %s22, 1
    %p87 = por %p85, %p86
    %p89 = scmp.ne.s32.totalorder %s74, %s88
    %p90 = scmp.eq.s32.totalorder %s22, 0
    %p91 = por %p89, %p90
    %s93 = sadd.s32 %s92, 1
    %p96 = scmp.eq.s32.totalorder %s16, 1
    %p97 = scmp.ne.s32.totalorder %s92, %s94
    %p98 = scmp.eq.s32.totalorder %s16, 0
    %p99 = por %p97, %p98
    %p100 = scmp.ne.s32.totalorder %s92, %s94
    %p101 = scmp.eq.s32.totalorder %s21, 1
    %p102 = por %p100, %p101
    %p103 = scmp.ne.s32.totalorder %s94, %s95
    %p104 = scmp.eq.s32.totalorder %s21, 0
    %p105 = por %p103, %p104
    %p106 = scmp.ne.s32.totalorder %s94, %s95
    %p107 = scmp.eq.s32.totalorder %s22, 1
    %p108 = por %p106, %p107
    %p110 = scmp.ne.s32.totalorder %s95, %s109
    %p111 = scmp.eq.s32.totalorder %s22, 0
    %p112 = por %p110, %p111
    %s114 = sadd.s32 %s113, 1
    %p117 = scmp.eq.s32.totalorder %s16, 1
    %p118 = scmp.ne.s32.totalorder %s113, %s115
    %p119 = scmp.eq.s32.totalorder %s16, 0
    %p120 = por %p118, %p119
    %p121 = scmp.ne.s32.totalorder %s113, %s115
    %p122 = scmp.eq.s32.totalorder %s21, 1
    %p123 = por %p121, %p122
    %p124 = scmp.ne.s32.totalorder %s115, %s116
    %p125 = scmp.eq.s32.totalorder %s21, 0
    %p126 = por %p124, %p125
    %p127 = scmp.ne.s32.totalorder %s115, %s116
    %p128 = scmp.eq.s32.totalorder %s22, 1
    %p129 = por %p127, %p128
    %p131 = scmp.ne.s32.totalorder %s116, %s130
    %p132 = scmp.eq.s32.totalorder %s22, 0
    %p133 = por %p131, %p132
    %s135 = sadd.s32 %s134, 1
    %p138 = scmp.eq.s32.totalorder %s16, 1
    %p139 = scmp.ne.s32.totalorder %s134, %s136
    %p140 = scmp.eq.s32.totalorder %s16, 0
    %p141 = por %p139, %p140
    %p142 = scmp.ne.s32.totalorder %s134, %s136
    %p143 = scmp.eq.s32.totalorder %s21, 1
    %p144 = por %p142, %p143
    %p145 = scmp.ne.s32.totalorder %s136, %s137
    %p146 = scmp.eq.s32.totalorder %s21, 0
    %p147 = por %p145, %p146
    %p148 = scmp.ne.s32.totalorder %s136, %s137
    %p149 = scmp.eq.s32.totalorder %s22, 1
    %p150 = por %p148, %p149
    %p152 = scmp.ne.s32.totalorder %s137, %s151
    %p153 = scmp.eq.s32.totalorder %s22, 0
    %p154 = por %p152, %p153
    %s156 = sadd.s32 %s155, 1
    %p159 = scmp.eq.s32.totalorder %s16, 1
    %p160 = scmp.ne.s32.totalorder %s155, %s157
    %p161 = scmp.eq.s32.totalorder %s16, 0
    %p162 = por %p160, %p161
    %p163 = scmp.ne.s32.totalorder %s155, %s157
    %p164 = scmp.eq.s32.totalorder %s21, 1
    %p165 = por %p163, %p164
    %p166 = scmp.ne.s32.totalorder %s157, %s158
    %p167 = scmp.eq.s32.totalorder %s21, 0
    %p168 = por %p166, %p167
    %p169 = scmp.ne.s32.totalorder %s157, %s158
    %p170 = scmp.eq.s32.totalorder %s22, 1
    %p171 = por %p169, %p170
    %p173 = scmp.ne.s32.totalorder %s158, %s172
    %p174 = scmp.eq.s32.totalorder %s22, 0
    %p175 = por %p173, %p174
    %s177 = sadd.s32 %s176, 1
    %p180 = scmp.eq.s32.totalorder %s16, 1
    %p181 = scmp.ne.s32.totalorder %s176, %s178
    %p182 = scmp.eq.s32.totalorder %s16, 0
    %p183 = por %p181, %p182
    %p184 = scmp.ne.s32.totalorder %s176, %s178
    %p185 = scmp.eq.s32.totalorder %s21, 1
    %p186 = por %p184, %p185
    %p187 = scmp.ne.s32.totalorder %s178, %s179
    %p188 = scmp.eq.s32.totalorder %s21, 0
    %p189 = por %p187, %p188
    %p190 = scmp.ne.s32.totalorder %s178, %s179
    %p191 = scmp.eq.s32.totalorder %s22, 1
    %p192 = por %p190, %p191
    %p194 = scmp.ne.s32.totalorder %s179, %s193
    %p195 = scmp.eq.s32.totalorder %s22, 0
    %p196 = por %p194, %p195
    %s198 = sadd.s32 %s197, 1
    %p201 = scmp.eq.s32.totalorder %s16, 1
    %p202 = scmp.ne.s32.totalorder %s197, %s199
    %p203 = scmp.eq.s32.totalorder %s16, 0
    %p204 = por %p202, %p203
    %p205 = scmp.ne.s32.totalorder %s197, %s199
    %p206 = scmp.eq.s32.totalorder %s21, 1
    %p207 = por %p205, %p206
    %p208 = scmp.ne.s32.totalorder %s199, %s200
    %p209 = scmp.eq.s32.totalorder %s21, 0
    %p210 = por %p208, %p209
    %p211 = scmp.ne.s32.totalorder %s199, %s200
    %p212 = scmp.eq.s32.totalorder %s22, 1
    %p213 = por %p211, %p212
    %p215 = scmp.ne.s32.totalorder %s200, %s214
    %p216 = scmp.eq.s32.totalorder %s22, 0
    %p217 = por %p215, %p216
    %s219 = sadd.s32 %s218, 1
    %p222 = scmp.eq.s32.totalorder %s16, 1
    %p223 = scmp.ne.s32.totalorder %s218, %s220
    %p224 = scmp.eq.s32.totalorder %s16, 0
    %p225 = por %p223, %p224
    %p226 = scmp.ne.s32.totalorder %s218, %s220
    %p227 = scmp.eq.s32.totalorder %s21, 1
    %p228 = por %p226, %p227
    %p229 = scmp.ne.s32.totalorder %s220, %s221
    %p230 = scmp.eq.s32.totalorder %s21, 0
    %p231 = por %p229, %p230
    %p232 = scmp.ne.s32.totalorder %s220, %s221
    %p233 = scmp.eq.s32.totalorder %s22, 1
    %p234 = por %p232, %p233
    %p236 = scmp.ne.s32.totalorder %s221, %s235
    %p237 = scmp.eq.s32.totalorder %s22, 0
    %p238 = por %p236, %p237
    %s239 = ssub.s32 %s16, %s23
    %p240 = scmp.eq.s32.totalorder %s239, 0
    %s242 = sadd.s32 %s241, 1
    %s243 = scalar_select %p240, %s241, %s242
    %p246 = pneg %p240
    %p247 = scmp.eq.s32.totalorder %s16, 1
    %p248 = por %p246, %p247
    %p249 = scmp.ne.s32.totalorder %s241, %s244
    %p250 = scmp.eq.s32.totalorder %s16, 0
    %p251 = por %p249, %p250
    %p252 = scmp.ne.s32.totalorder %s241, %s244
    %p253 = scmp.eq.s32.totalorder %s21, 1
    %p254 = por %p252, %p253
    %p255 = scmp.ne.s32.totalorder %s244, %s245
    %p256 = scmp.eq.s32.totalorder %s21, 0
    %p257 = por %p255, %p256
    %p258 = scmp.ne.s32.totalorder %s244, %s245
    %p259 = scmp.eq.s32.totalorder %s22, 1
    %p260 = por %p258, %p259
    %p262 = scmp.ne.s32.totalorder %s245, %s261
    %p263 = scmp.eq.s32.totalorder %s22, 0
    %p264 = por %p262, %p263
    %p265 = scmp.le.s32.totalorder 1, %s16
    %p266 = scmp.lt.s32.totalorder %s16, 3
    %p267 = pnand %p265, %p266
    %p268 = pneg %p267
    // Predicated region
    $region9: #{bottleneck_forward.1} parent=5 // pred_check
      _
    $region10: #{bottleneck_forward.1} parent=5 // pred_check_branch
      %270 = sbr.rel (%p267) target = $region12
    $region11: #{bottleneck_forward.1} parent=5 // pred_region
      %s271 = ssub.s32 %s16, 1
      // Predicated region
      $region13: #{bottleneck_forward.1} parent=11 // pred_check
        %p272 = pneg %p63
      $region14: #{bottleneck_forward.1} parent=11 // pred_check_branch
        %274 = sbr.rel (%p272) target = $region16
      $region15: #{bottleneck_forward.1} parent=11 // pred_region
        _
      $region16: #{bottleneck_forward.1} parent=11 // pred_fallthru
        _
      // Predicated region
      $region17: #{bottleneck_forward.1} parent=11 // pred_check
        %p275 = pneg %p84
      $region18: #{bottleneck_forward.1} parent=11 // pred_check_branch
        %277 = sbr.rel (%p275) target = $region20
      $region19: #{bottleneck_forward.1} parent=11 // pred_region
        _
      $region20: #{bottleneck_forward.1} parent=11 // pred_fallthru
        _
      // Predicated region
      $region21: #{bottleneck_forward.1} parent=11 // pred_check
        %p278 = pneg %p105
      $region22: #{bottleneck_forward.1} parent=11 // pred_check_branch
        %280 = sbr.rel (%p278) target = $region24
      $region23: #{bottleneck_forward.1} parent=11 // pred_region
        _
      $region24: #{bottleneck_forward.1} parent=11 // pred_fallthru
        _
      // Predicated region
      $region25: #{bottleneck_forward.1} parent=11 // pred_check
        %p281 = pneg %p126
      $region26: #{bottleneck_forward.1} parent=11 // pred_check_branch
        %283 = sbr.rel (%p281) target = $region28
      $region27: #{bottleneck_forward.1} parent=11 // pred_region
        _
      $region28: #{bottleneck_forward.1} parent=11 // pred_fallthru
        _
      // Predicated region
      $region29: #{bottleneck_forward.1} parent=11 // pred_check
        %p284 = pneg %p147
      $region30: #{bottleneck_forward.1} parent=11 // pred_check_branch
        %286 = sbr.rel (%p284) target = $region32
      $region31: #{bottleneck_forward.1} parent=11 // pred_region
        _
      $region32: #{bottleneck_forward.1} parent=11 // pred_fallthru
        _
      // Predicated region
      $region33: #{bottleneck_forward.1} parent=11 // pred_check
        %p287 = pneg %p168
      $region34: #{bottleneck_forward.1} parent=11 // pred_check_branch
        %289 = sbr.rel (%p287) target = $region36
      $region35: #{bottleneck_forward.1} parent=11 // pred_region
        _
      $region36: #{bottleneck_forward.1} parent=11 // pred_fallthru
        _
      // Predicated region
      $region37: #{bottleneck_forward.1} parent=11 // pred_check
        %p290 = pneg %p189
      $region38: #{bottleneck_forward.1} parent=11 // pred_check_branch
        %292 = sbr.rel (%p290) target = $region40
      $region39: #{bottleneck_forward.1} parent=11 // pred_region
        _
      $region40: #{bottleneck_forward.1} parent=11 // pred_fallthru
        _
      // Predicated region
      $region41: #{bottleneck_forward.1} parent=11 // pred_check
        %p293 = pneg %p210
      $region42: #{bottleneck_forward.1} parent=11 // pred_check_branch
        %295 = sbr.rel (%p293) target = $region44
      $region43: #{bottleneck_forward.1} parent=11 // pred_region
        _
      $region44: #{bottleneck_forward.1} parent=11 // pred_fallthru
        _
      // Predicated region
      $region45: #{bottleneck_forward.1} parent=11 // pred_check
        %p296 = pneg %p231
      $region46: #{bottleneck_forward.1} parent=11 // pred_check_branch
        %298 = sbr.rel (%p296) target = $region48
      $region47: #{bottleneck_forward.1} parent=11 // pred_region
        _
      $region48: #{bottleneck_forward.1} parent=11 // pred_fallthru
        _
    $region12: #{bottleneck_forward.1} parent=5 // pred_fallthru
      _
    %p299 = scmp.lt.s32.totalorder %s16, 2
    // Predicated region
    $region49: #{bottleneck_forward.1} parent=5 // pred_check
      %p300 = pneg %p299
    $region50: #{bottleneck_forward.1} parent=5 // pred_check_branch
      %302 = sbr.rel (%p300) target = $region52
    $region51: #{bottleneck_forward.1} parent=5 // pred_region
      // Predicated region
      $region53: #{bottleneck_forward.1} parent=51 // pred_check
        %p303 = pneg %p36
      $region54: #{bottleneck_forward.1} parent=51 // pred_check_branch
        %305 = sbr.rel (%p303) target = $region56
      $region55: #{bottleneck_forward.1} parent=51 // pred_region
        %p306 = scmp.lt.s32.totalorder %s16, 1
        %s307 = scalar_select %p306, %s16, 1
        %s308 = smul.addr %s307, 41
        %s309 = smul.addr %s308, 4
        %s310 = scalar_lea.vmem %s0, %s309
      $region56: #{bottleneck_forward.1} parent=51 // pred_fallthru
        _
    $region52: #{bottleneck_forward.1} parent=5 // pred_fallthru
      _
    %p311 = scmp.le.s32.totalorder 1, %s16
    %p312 = scmp.lt.s32.totalorder %s16, 3
    %p313 = pnand %p311, %p312
    %p314 = pneg %p313
    // Predicated region
    $region57: #{bottleneck_forward.1} parent=5 // pred_check
      _
    $region58: #{bottleneck_forward.1} parent=5 // pred_check_branch
      %316 = sbr.rel (%p313) target = $region60
    $region59: #{bottleneck_forward.1} parent=5 // pred_region
      %s317 = ssub.s32 %s16, 1
      %p318 = scmp.lt.s32.totalorder %s21, 1
      %s319 = scalar_select %p318, %s21, 1
      %s320 = smul.addr %s319, 41
      %s321 = smul.addr %s320, 4
      %s322 = scalar_lea.vmem %s0, %s321
      %p323 = pneg %p42
      %p324 = pneg %p39
      %p325 = pneg %p63
      %p326 = pneg %p60
      %p327 = pneg %p84
      %p328 = pneg %p81
      %p329 = pneg %p105
      %p330 = pneg %p102
      %p331 = pneg %p126
      %p332 = pneg %p123
      %p333 = pneg %p147
      %p334 = pneg %p144
      %p335 = pneg %p168
      %p336 = pneg %p165
      %p337 = pneg %p189
      %p338 = pneg %p186
      %p339 = pneg %p210
      %p340 = pneg %p207
      %p341 = pneg %p231
      %p342 = pneg %p228
      %p343 = pneg %p257
      %p344 = pneg %p254
      %p345 = scmp.lt.s32.totalorder %s21, 1
      %s346 = scalar_select %p345, %s21, 1
      %s347 = smul.addr %s346, 41
      %s348 = smul.addr %s347, 8
      %s349 = scalar_lea.vmem %s10, %s348
      %p350 = scmp.lt.s32.totalorder %s21, 1
      %s351 = scalar_select %p350, %s21, 1
      %s352 = smul.addr %s351, 41
      %s353 = smul.addr %s352, 4
      %s354 = scalar_lea.vmem %s0, %s353
      %p355 = scmp.lt.s32.totalorder %s21, 1
      %s356 = scalar_select %p355, %s21, 1
      %s357 = smul.addr %s356, 41
      %s358 = smul.addr %s357, 8
      %s359 = scalar_lea.vmem %s10, %s358
      %v361 = vld [vmem:[%s354] sm:$0xf]
      %v362 = vld [vmem:[%s354 + $0x4] sm:$0xf]
      %v363 = vld [vmem:[%s354 + $0x8] sm:$0xf]
      %v364 = vld [vmem:[%s354 + $0xc] sm:$0xf]
      %v365 = vld [vmem:[%s354 + $0x10] sm:$0xf]
      %v366 = vld [vmem:[%s354 + $0x14] sm:$0xf]
      %v367 = vld [vmem:[%s354 + $0x18] sm:$0xf]
      %v368 = vld [vmem:[%s354 + $0x1c] sm:$0xf]
      %v369 = vld [vmem:[%s354 + $0x20] sm:$0xf]
      %v370 = vld [vmem:[%s354 + $0x24] sm:$0xf]
      %v371 = vld [vmem:[%s354 + $0x28] sm:$0xf]
      %v372 = vld [vmem:[%s354 + $0x2c] sm:$0xf]
      %v373 = vld [vmem:[%s354 + $0x30] sm:$0xf]
      %v374 = vld [vmem:[%s354 + $0x34] sm:$0xf]
      %v375 = vld [vmem:[%s354 + $0x38] sm:$0xf]
      %v376 = vld [vmem:[%s354 + $0x3c] sm:$0xf]
      %v377 = vld [vmem:[%s354 + $0x40] sm:$0xf]
      %v378 = vld [vmem:[%s354 + $0x44] sm:$0xf]
      %v379 = vld [vmem:[%s354 + $0x48] sm:$0xf]
      %v380 = vld [vmem:[%s354 + $0x4c] sm:$0xf]
      %v381 = vld [vmem:[%s354 + $0x50] sm:$0xf]
      %v382 = vld [vmem:[%s354 + $0x54] sm:$0xf]
      %v383 = vld [vmem:[%s354 + $0x58] sm:$0xf]
      %v384 = vld [vmem:[%s354 + $0x5c] sm:$0xf]
      %v385 = vld [vmem:[%s354 + $0x60] sm:$0xf]
      %v386 = vld [vmem:[%s354 + $0x64] sm:$0xf]
      %v387 = vld [vmem:[%s354 + $0x68] sm:$0xf]
      %v388 = vld [vmem:[%s354 + $0x6c] sm:$0xf]
      %v389 = vld [vmem:[%s354 + $0x70] sm:$0xf]
      %v390 = vld [vmem:[%s354 + $0x74] sm:$0xf]
      %v391 = vld [vmem:[%s354 + $0x78] sm:$0xf]
      %v392 = vld [vmem:[%s354 + $0x7c] sm:$0xf]
      %v393 = vld [vmem:[%s354 + $0x80] sm:$0xf]
      %v394 = vld [vmem:[%s354 + $0x84] sm:$0xf]
      %v395 = vld [vmem:[%s354 + $0x88] sm:$0xf]
      %v396 = vld [vmem:[%s354 + $0x8c] sm:$0xf]
      %v397 = vld [vmem:[%s354 + $0x90] sm:$0xf]
      %v398 = vld [vmem:[%s354 + $0x94] sm:$0xf]
      %v399 = vld [vmem:[%s354 + $0x98] sm:$0xf]
      %v400 = vld [vmem:[%s354 + $0x9c] sm:$0xf]
      %v401 = vld [vmem:[%s354 + $0xa0] sm:$0x3]
      %v402 = vunpack.c.l.bf16 %v361
      %v403 = vunpack.c.l.bf16 %v362
      %v404 = vunpack.c.l.bf16 %v363
      %v405 = vunpack.c.l.bf16 %v364
      %v406 = vunpack.c.l.bf16 %v365
      %v407 = vunpack.c.l.bf16 %v366
      %v408 = vunpack.c.l.bf16 %v367
      %v409 = vunpack.c.l.bf16 %v368
      %v410 = vunpack.c.l.bf16 %v369
      %v411 = vunpack.c.l.bf16 %v370
      %v412 = vunpack.c.l.bf16 %v371
      %v413 = vunpack.c.l.bf16 %v372
      %v414 = vunpack.c.l.bf16 %v373
      %v415 = vunpack.c.l.bf16 %v374
      %v416 = vunpack.c.l.bf16 %v375
      %v417 = vunpack.c.l.bf16 %v376
      %v418 = vunpack.c.l.bf16 %v377
      %v419 = vunpack.c.l.bf16 %v378
      %v420 = vunpack.c.l.bf16 %v379
      %v421 = vunpack.c.l.bf16 %v380
      %v422 = vunpack.c.l.bf16 %v381
      %v423 = vunpack.c.l.bf16 %v382
      %v424 = vunpack.c.l.bf16 %v383
      %v425 = vunpack.c.l.bf16 %v384
      %v426 = vunpack.c.l.bf16 %v385
      %v427 = vunpack.c.l.bf16 %v386
      %v428 = vunpack.c.l.bf16 %v387
      %v429 = vunpack.c.l.bf16 %v388
      %v430 = vunpack.c.l.bf16 %v389
      %v431 = vunpack.c.l.bf16 %v390
      %v432 = vunpack.c.l.bf16 %v391
      %v433 = vunpack.c.l.bf16 %v392
      %v434 = vunpack.c.l.bf16 %v393
      %v435 = vunpack.c.l.bf16 %v394
      %v436 = vunpack.c.l.bf16 %v395
      %v437 = vunpack.c.l.bf16 %v396
      %v438 = vunpack.c.l.bf16 %v397
      %v439 = vunpack.c.l.bf16 %v398
      %v440 = vunpack.c.l.bf16 %v399
      %v441 = vunpack.c.l.bf16 %v400
      %v442 = vunpack.c.l.bf16 %v401
      %v443 = vld [vmem:[%s2] sm:$0x3]
      %v444 = vlaneseq
      %v445 = vshrl.u32 %v444, 7
      %v446 = vsub.s32 0, %v445
      %v447 = vrot.slane %v443, %v446
      %v448 = vmul.f32 %v402, %v447
      %v449 = vmul.f32 %v403, %v447
      %v450 = vmul.f32 %v404, %v447
      %v451 = vmul.f32 %v405, %v447
      %v452 = vmul.f32 %v406, %v447
      %v453 = vmul.f32 %v407, %v447
      %v454 = vmul.f32 %v408, %v447
      %v455 = vmul.f32 %v409, %v447
      %v456 = vmul.f32 %v410, %v447
      %v457 = vmul.f32 %v411, %v447
      %v458 = vmul.f32 %v412, %v447
      %v459 = vmul.f32 %v413, %v447
      %v460 = vmul.f32 %v414, %v447
      %v461 = vmul.f32 %v415, %v447
      %v462 = vmul.f32 %v416, %v447
      %v463 = vmul.f32 %v417, %v447
      %v464 = vmul.f32 %v418, %v447
      %v465 = vmul.f32 %v419, %v447
      %v466 = vmul.f32 %v420, %v447
      %v467 = vmul.f32 %v421, %v447
      %v468 = vmul.f32 %v422, %v447
      %v469 = vmul.f32 %v423, %v447
      %v470 = vmul.f32 %v424, %v447
      %v471 = vmul.f32 %v425, %v447
      %v472 = vmul.f32 %v426, %v447
      %v473 = vmul.f32 %v427, %v447
      %v474 = vmul.f32 %v428, %v447
      %v475 = vmul.f32 %v429, %v447
      %v476 = vmul.f32 %v430, %v447
      %v477 = vmul.f32 %v431, %v447
      %v478 = vmul.f32 %v432, %v447
      %v479 = vmul.f32 %v433, %v447
      %v480 = vmul.f32 %v434, %v447
      %v481 = vmul.f32 %v435, %v447
      %v482 = vmul.f32 %v436, %v447
      %v483 = vmul.f32 %v437, %v447
      %v484 = vmul.f32 %v438, %v447
      %v485 = vmul.f32 %v439, %v447
      %v486 = vmul.f32 %v440, %v447
      %v487 = vmul.f32 %v441, %v447
      %v488 = vmul.f32 %v442, %v447
      %v489 = vlaneseq
      %v490 = vshrl.u32 %v489, 7
      %v491 = vsub.s32 1, %v490
      %v492 = vrot.slane %v443, %v491
      %v493 = vadd.f32 %v448, %v492
      %v494 = vadd.f32 %v449, %v492
      %v495 = vadd.f32 %v450, %v492
      %v496 = vadd.f32 %v451, %v492
      %v497 = vadd.f32 %v452, %v492
      %v498 = vadd.f32 %v453, %v492
      %v499 = vadd.f32 %v454, %v492
      %v500 = vadd.f32 %v455, %v492
      %v501 = vadd.f32 %v456, %v492
      %v502 = vadd.f32 %v457, %v492
      %v503 = vadd.f32 %v458, %v492
      %v504 = vadd.f32 %v459, %v492
      %v505 = vadd.f32 %v460, %v492
      %v506 = vadd.f32 %v461, %v492
      %v507 = vadd.f32 %v462, %v492
      %v508 = vadd.f32 %v463, %v492
      %v509 = vadd.f32 %v464, %v492
      %v510 = vadd.f32 %v465, %v492
      %v511 = vadd.f32 %v466, %v492
      %v512 = vadd.f32 %v467, %v492
      %v513 = vadd.f32 %v468, %v492
      %v514 = vadd.f32 %v469, %v492
      %v515 = vadd.f32 %v470, %v492
      %v516 = vadd.f32 %v471, %v492
      %v517 = vadd.f32 %v472, %v492
      %v518 = vadd.f32 %v473, %v492
      %v519 = vadd.f32 %v474, %v492
      %v520 = vadd.f32 %v475, %v492
      %v521 = vadd.f32 %v476, %v492
      %v522 = vadd.f32 %v477, %v492
      %v523 = vadd.f32 %v478, %v492
      %v524 = vadd.f32 %v479, %v492
      %v525 = vadd.f32 %v480, %v492
      %v526 = vadd.f32 %v481, %v492
      %v527 = vadd.f32 %v482, %v492
      %v528 = vadd.f32 %v483, %v492
      %v529 = vadd.f32 %v484, %v492
      %v530 = vadd.f32 %v485, %v492
      %v531 = vadd.f32 %v486, %v492
      %v532 = vadd.f32 %v487, %v492
      %v533 = vadd.f32 %v488, %v492
      %v534 = vmax.f32 %v493, 0.0
      %v535 = vmax.f32 %v494, 0.0
      %v536 = vmax.f32 %v495, 0.0
      %v537 = vmax.f32 %v496, 0.0
      %v538 = vmax.f32 %v497, 0.0
      %v539 = vmax.f32 %v498, 0.0
      %v540 = vmax.f32 %v499, 0.0
      %v541 = vmax.f32 %v500, 0.0
      %v542 = vmax.f32 %v501, 0.0
      %v543 = vmax.f32 %v502, 0.0
      %v544 = vmax.f32 %v503, 0.0
      %v545 = vmax.f32 %v504, 0.0
      %v546 = vmax.f32 %v505, 0.0
      %v547 = vmax.f32 %v506, 0.0
      %v548 = vmax.f32 %v507, 0.0
      %v549 = vmax.f32 %v508, 0.0
      %v550 = vmax.f32 %v509, 0.0
      %v551 = vmax.f32 %v510, 0.0
      %v552 = vmax.f32 %v511, 0.0
      %v553 = vmax.f32 %v512, 0.0
      %v554 = vmax.f32 %v513, 0.0
      %v555 = vmax.f32 %v514, 0.0
      %v556 = vmax.f32 %v515, 0.0
      %v557 = vmax.f32 %v516, 0.0
      %v558 = vmax.f32 %v517, 0.0
      %v559 = vmax.f32 %v518, 0.0
      %v560 = vmax.f32 %v519, 0.0
      %v561 = vmax.f32 %v520, 0.0
      %v562 = vmax.f32 %v521, 0.0
      %v563 = vmax.f32 %v522, 0.0
      %v564 = vmax.f32 %v523, 0.0
      %v565 = vmax.f32 %v524, 0.0
      %v566 = vmax.f32 %v525, 0.0
      %v567 = vmax.f32 %v526, 0.0
      %v568 = vmax.f32 %v527, 0.0
      %v569 = vmax.f32 %v528, 0.0
      %v570 = vmax.f32 %v529, 0.0
      %v571 = vmax.f32 %v530, 0.0
      %v572 = vmax.f32 %v531, 0.0
      %v573 = vmax.f32 %v532, 0.0
      %v574 = vmax.f32 %v533, 0.0
      %v575 = vpack.c.bf16 %v535, %v534
      %v576 = vpack.c.bf16 %v537, %v536
      %v577 = vpack.c.bf16 %v539, %v538
      %v578 = vpack.c.bf16 %v541, %v540
      %v579 = vpack.c.bf16 %v543, %v542
      %v580 = vpack.c.bf16 %v545, %v544
      %v581 = vpack.c.bf16 %v547, %v546
      %v582 = vpack.c.bf16 %v549, %v548
      %v583 = vpack.c.bf16 %v551, %v550
      %v584 = vpack.c.bf16 %v553, %v552
      %v585 = vpack.c.bf16 %v555, %v554
      %v586 = vpack.c.bf16 %v557, %v556
      %v587 = vpack.c.bf16 %v559, %v558
      %v588 = vpack.c.bf16 %v561, %v560
      %v589 = vpack.c.bf16 %v563, %v562
      %v590 = vpack.c.bf16 %v565, %v564
      %v591 = vpack.c.bf16 %v567, %v566
      %v592 = vpack.c.bf16 %v569, %v568
      %v593 = vpack.c.bf16 %v571, %v570
      %v594 = vpack.c.bf16 %v573, %v572
      %v595 = vpack.c.bf16 %v574, %v574
      %v596 = vld [vmem:[%s3] sm:$0xf]
      %v597 = vld [vmem:[%s3 + $0x4] sm:$0xf]
      %v598 = vld [vmem:[%s3 + $0x8] sm:$0xf]
      %v599 = vld [vmem:[%s3 + $0xc] sm:$0xf]
      %v600 = vld [vmem:[%s3 + $0x10] sm:$0xf]
      %v601 = vld [vmem:[%s3 + $0x14] sm:$0xf]
      %v602 = vld [vmem:[%s3 + $0x18] sm:$0xf]
      %v603 = vld [vmem:[%s3 + $0x1c] sm:$0xf]
      %v604 = vld [vmem:[%s3 + $0x20] sm:$0xf]
      %v605 = vld [vmem:[%s3 + $0x24] sm:$0xf]
      %v606 = vld [vmem:[%s3 + $0x28] sm:$0xf]
      %v607 = vld [vmem:[%s3 + $0x2c] sm:$0xf]
      %v608 = vld [vmem:[%s3 + $0x30] sm:$0xf]
      %v609 = vld [vmem:[%s3 + $0x34] sm:$0xf]
      %v610 = vld [vmem:[%s3 + $0x38] sm:$0xf]
      %v611 = vld [vmem:[%s3 + $0x3c] sm:$0xf]
      %v612 = vld [vmem:[%s4] sm:$0x1]
      %v614 = vlaneseq
      %v615 = vshrl.u32 %v614, 7
      %v616 = vsub.s32 0, %v615
      %v617 = vrot.slane %v612, %v616
      %v635 = vunpack.c.l.b16 %v596
      %v636 = vunpack.c.l.b16 %v597
      %v637 = vunpack.c.l.b16 %v598
      %v638 = vunpack.c.l.b16 %v599
      %v639 = vunpack.c.l.b16 %v600
      %v640 = vunpack.c.l.b16 %v601
      %v641 = vunpack.c.l.b16 %v602
      %v642 = vunpack.c.l.b16 %v603
      %v643 = vunpack.c.l.b16 %v604
      %v644 = vunpack.c.l.b16 %v605
      %v645 = vunpack.c.l.b16 %v606
      %v646 = vunpack.c.l.b16 %v607
      %v647 = vunpack.c.l.b16 %v608
      %v648 = vunpack.c.l.b16 %v609
      %v649 = vunpack.c.l.b16 %v610
      %v650 = vunpack.c.l.b16 %v611
      %v651 = vpack.c.b16 %v636, %v635
      %v652 = vpack.c.b16 %v638, %v637
      %v653 = vpack.c.b16 %v640, %v639
      %v654 = vpack.c.b16 %v642, %v641
      %v655 = vpack.c.b16 %v644, %v643
      %v656 = vpack.c.b16 %v646, %v645
      %v657 = vpack.c.b16 %v648, %v647
      %v658 = vpack.c.b16 %v650, %v649
      %667 = vmatprep.subr.bf16.mxu0 0
      %668 = vmatpush1.bf16.msra.mxu0 %v651
      %669 = vmatprep.subr.bf16.mxu0 0
      %670 = vmatpush1.bf16.msra.mxu0 %v652
      %671 = vmatprep.subr.bf16.mxu0 0
      %672 = vmatpush1.bf16.msra.mxu0 %v653
      %673 = vmatprep.subr.bf16.mxu0 0
      %674 = vmatpush1.bf16.msra.mxu0 %v654
      %675 = vmatprep.subr.bf16.mxu0 0
      %676 = vmatpush1.bf16.msra.mxu0 %v655
      %677 = vmatprep.subr.bf16.mxu0 0
      %678 = vmatpush1.bf16.msra.mxu0 %v656
      %679 = vmatprep.subr.bf16.mxu0 0
      %680 = vmatpush1.bf16.msra.mxu0 %v657
      %681 = vmatprep.subr.bf16.mxu0 0
      %682 = vmatpush1.bf16.msra.mxu0 %v658
      %683 = vmatprep.subr.bf16.mxu0 0
      %684 = vmatpush1.bf16.msra.mxu0 0
      %685 = vmatprep.subr.bf16.mxu0 0
      %686 = vmatpush1.bf16.msra.mxu0 0
      %687 = vmatprep.subr.bf16.mxu0 0
      %688 = vmatpush1.bf16.msra.mxu0 0
      %689 = vmatprep.subr.bf16.mxu0 0
      %690 = vmatpush1.bf16.msra.mxu0 0
      %691 = vmatprep.subr.bf16.mxu0 0
      %692 = vmatpush1.bf16.msra.mxu0 0
      %693 = vmatprep.subr.bf16.mxu0 0
      %694 = vmatpush1.bf16.msra.mxu0 0
      %695 = vmatprep.subr.bf16.mxu0 0
      %696 = vmatpush1.bf16.msra.mxu0 0
      %697 = vmatprep.subr.bf16.mxu0 0
      %698 = vmatpush1.bf16.msra.mxu0 0
      %699 = vmatprep.mubr.bf16.mxu0 0
      %700 = vmatmul.mubr.bf16.gmra.mrb[0].mxu0 %v575
      %v701 = vpop.f32.mrb[0].mxu0
      %v702 = vadd.f32 %v617, %v701
      %v703 = vpop.f32.mrb[0].mxu0
      %v704 = vpop.f32.mrb[0].mxu0
      %v705 = vadd.f32 %v617, %v704
      %v706 = vpop.f32.mrb[0].mxu0
      %707 = vmatprep.mubr.bf16.mxu0 0
      %708 = vmatmul.mubr.bf16.gmra.mrb[0].mxu0 %v576
      %v709 = vpop.f32.mrb[0].mxu0
      %v710 = vadd.f32 %v617, %v709
      %v711 = vpop.f32.mrb[0].mxu0
      %v712 = vpop.f32.mrb[0].mxu0
      %v713 = vadd.f32 %v617, %v712
      %v714 = vpop.f32.mrb[0].mxu0
      %715 = vmatprep.mubr.bf16.mxu0 0
      %716 = vmatmul.mubr.bf16.gmra.mrb[0].mxu0 %v577
      %v717 = vpop.f32.mrb[0].mxu0
      %v718 = vadd.f32 %v617, %v717
      %v719 = vpop.f32.mrb[0].mxu0
      %v720 = vpop.f32.mrb[0].mxu0
      %v721 = vadd.f32 %v617, %v720
      %v722 = vpop.f32.mrb[0].mxu0
      %723 = vmatprep.mubr.bf16.mxu0 0
      %724 = vmatmul.mubr.bf16.gmra.mrb[0].mxu0 %v578
      %v725 = vpop.f32.mrb[0].mxu0
      %v726 = vadd.f32 %v617, %v725
      %v727 = vpop.f32.mrb[0].mxu0
      %v728 = vpop.f32.mrb[0].mxu0
      %v729 = vadd.f32 %v617, %v728
      %v730 = vpop.f32.mrb[0].mxu0
      %731 = vmatprep.mubr.bf16.mxu0 0
      %732 = vmatmul.mubr.bf16.gmra.mrb[0].mxu0 %v579
      %v733 = vpop.f32.mrb[0].mxu0
      %v734 = vadd.f32 %v617, %v733
      %v735 = vpop.f32.mrb[0].mxu0
      %v736 = vpop.f32.mrb[0].mxu0
      %v737 = vadd.f32 %v617, %v736
      %v738 = vpop.f32.mrb[0].mxu0
      %739 = vmatprep.mubr.bf16.mxu0 0
      %740 = vmatmul.mubr.bf16.gmra.mrb[0].mxu0 %v580
      %v741 = vpop.f32.mrb[0].mxu0
      %v742 = vadd.f32 %v617, %v741
      %v743 = vpop.f32.mrb[0].mxu0
      %v744 = vpop.f32.mrb[0].mxu0
      %v745 = vadd.f32 %v617, %v744
      %v746 = vpop.f32.mrb[0].mxu0
      %747 = vmatprep.mubr.bf16.mxu0 0
      %748 = vmatmul.mubr.bf16.gmra.mrb[0].mxu0 %v581
      %v749 = vpop.f32.mrb[0].mxu0
      %v750 = vadd.f32 %v617, %v749
      %v751 = vpop.f32.mrb[0].mxu0
      %v752 = vpop.f32.mrb[0].mxu0
      %v753 = vadd.f32 %v617, %v752
      %v754 = vpop.f32.mrb[0].mxu0
      %755 = vmatprep.mubr.bf16.mxu0 0
      %756 = vmatmul.mubr.bf16.gmra.mrb[0].mxu0 %v582
      %v757 = vpop.f32.mrb[0].mxu0
      %v758 = vadd.f32 %v617, %v757
      %v759 = vpop.f32.mrb[0].mxu0
      %v760 = vpop.f32.mrb[0].mxu0
      %v761 = vadd.f32 %v617, %v760
      %v762 = vpop.f32.mrb[0].mxu0
      %763 = vmatprep.mubr.bf16.mxu0 0
      %764 = vmatmul.mubr.bf16.gmra.mrb[0].mxu0 %v583
      %v765 = vpop.f32.mrb[0].mxu0
      %v766 = vadd.f32 %v617, %v765
      %v767 = vpop.f32.mrb[0].mxu0
      %v768 = vpop.f32.mrb[0].mxu0
      %v769 = vadd.f32 %v617, %v768
      %v770 = vpop.f32.mrb[0].mxu0
      %771 = vmatprep.mubr.bf16.mxu0 0
      %772 = vmatmul.mubr.bf16.gmra.mrb[0].mxu0 %v584
      %v773 = vpop.f32.mrb[0].mxu0
      %v774 = vadd.f32 %v617, %v773
      %v775 = vpop.f32.mrb[0].mxu0
      %v776 = vpop.f32.mrb[0].mxu0
      %v777 = vadd.f32 %v617, %v776
      %v778 = vpop.f32.mrb[0].mxu0
      %779 = vmatprep.mubr.bf16.mxu0 0
      %780 = vmatmul.mubr.bf16.gmra.mrb[0].mxu0 %v585
      %v781 = vpop.f32.mrb[0].mxu0
      %v782 = vadd.f32 %v617, %v781
      %v783 = vpop.f32.mrb[0].mxu0
      %v784 = vpop.f32.mrb[0].mxu0
      %v785 = vadd.f32 %v617, %v784
      %v786 = vpop.f32.mrb[0].mxu0
      %787 = vmatprep.mubr.bf16.mxu0 0
      %788 = vmatmul.mubr.bf16.gmra.mrb[0].mxu0 %v586
      %v789 = vpop.f32.mrb[0].mxu0
      %v790 = vadd.f32 %v617, %v789
      %v791 = vpop.f32.mrb[0].mxu0
      %v792 = vpop.f32.mrb[0].mxu0
      %v793 = vadd.f32 %v617, %v792
      %v794 = vpop.f32.mrb[0].mxu0
      %795 = vmatprep.mubr.bf16.mxu0 0
      %796 = vmatmul.mubr.bf16.gmra.mrb[0].mxu0 %v587
      %v797 = vpop.f32.mrb[0].mxu0
      %v798 = vadd.f32 %v617, %v797
      %v799 = vpop.f32.mrb[0].mxu0
      %v800 = vpop.f32.mrb[0].mxu0
      %v801 = vadd.f32 %v617, %v800
      %v802 = vpop.f32.mrb[0].mxu0
      %803 = vmatprep.mubr.bf16.mxu0 0
      %804 = vmatmul.mubr.bf16.gmra.mrb[0].mxu0 %v588
      %v805 = vpop.f32.mrb[0].mxu0
      %v806 = vadd.f32 %v617, %v805
      %v807 = vpop.f32.mrb[0].mxu0
      %v808 = vpop.f32.mrb[0].mxu0
      %v809 = vadd.f32 %v617, %v808
      %v810 = vpop.f32.mrb[0].mxu0
      %811 = vmatprep.mubr.bf16.mxu0 0
      %812 = vmatmul.mubr.bf16.gmra.mrb[0].mxu0 %v589
      %v813 = vpop.f32.mrb[0].mxu0
      %v814 = vadd.f32 %v617, %v813
      %v815 = vpop.f32.mrb[0].mxu0
      %v816 = vpop.f32.mrb[0].mxu0
      %v817 = vadd.f32 %v617, %v816
      %v818 = vpop.f32.mrb[0].mxu0
      %819 = vmatprep.mubr.bf16.mxu0 0
      %820 = vmatmul.mubr.bf16.gmra.mrb[0].mxu0 %v590
      %v821 = vpop.f32.mrb[0].mxu0
      %v822 = vadd.f32 %v617, %v821
      %v823 = vpop.f32.mrb[0].mxu0
      %v824 = vpop.f32.mrb[0].mxu0
      %v825 = vadd.f32 %v617, %v824
      %v826 = vpop.f32.mrb[0].mxu0
      %827 = vmatprep.mubr.bf16.mxu0 0
      %828 = vmatmul.mubr.bf16.gmra.mrb[0].mxu0 %v591
      %v829 = vpop.f32.mrb[0].mxu0
      %v830 = vadd.f32 %v617, %v829
      %v831 = vpop.f32.mrb[0].mxu0
      %v832 = vpop.f32.mrb[0].mxu0
      %v833 = vadd.f32 %v617, %v832
      %v834 = vpop.f32.mrb[0].mxu0
      %835 = vmatprep.mubr.bf16.mxu0 0
      %836 = vmatmul.mubr.bf16.gmra.mrb[0].mxu0 %v592
      %v837 = vpop.f32.mrb[0].mxu0
      %v838 = vadd.f32 %v617, %v837
      %v839 = vpop.f32.mrb[0].mxu0
      %v840 = vpop.f32.mrb[0].mxu0
      %v841 = vadd.f32 %v617, %v840
      %v842 = vpop.f32.mrb[0].mxu0
      %843 = vmatprep.mubr.bf16.mxu0 0
      %844 = vmatmul.mubr.bf16.gmra.mrb[0].mxu0 %v593
      %v845 = vpop.f32.mrb[0].mxu0
      %v846 = vadd.f32 %v617, %v845
      %v847 = vpop.f32.mrb[0].mxu0
      %v848 = vpop.f32.mrb[0].mxu0
      %v849 = vadd.f32 %v617, %v848
      %v850 = vpop.f32.mrb[0].mxu0
      %851 = vmatprep.mubr.bf16.mxu0 0
      %852 = vmatmul.mubr.bf16.gmra.mrb[0].mxu0 %v594
      %v853 = vpop.f32.mrb[0].mxu0
      %v854 = vadd.f32 %v617, %v853
      %v855 = vpop.f32.mrb[0].mxu0
      %v856 = vpop.f32.mrb[0].mxu0
      %v857 = vadd.f32 %v617, %v856
      %v858 = vpop.f32.mrb[0].mxu0
      %859 = vmatprep.mubr.bf16.mxu0 0
      %860 = vmatmul.mubr.bf16.gmra.mrb[0].mxu0 %v595
      %v861 = vpop.f32.mrb[0].mxu0
      %v862 = vadd.f32 %v617, %v861
      %v863 = vpop.f32.mrb[0].mxu0
      %v864 = vpop.f32.mrb[0].mxu0
      %v865 = vpop.f32.mrb[0].mxu0
      %866 = vdwg.mxu0
      %v867 = vmax.f32 %v702, 0.0
      %v868 = vmax.f32 %v705, 0.0
      %v869 = vmax.f32 %v710, 0.0
      %v870 = vmax.f32 %v713, 0.0
      %v871 = vmax.f32 %v718, 0.0
      %v872 = vmax.f32 %v721, 0.0
      %v873 = vmax.f32 %v726, 0.0
      %v874 = vmax.f32 %v729, 0.0
      %v875 = vmax.f32 %v734, 0.0
      %v876 = vmax.f32 %v737, 0.0
      %v877 = vmax.f32 %v742, 0.0
      %v878 = vmax.f32 %v745, 0.0
      %v879 = vmax.f32 %v750, 0.0
      %v880 = vmax.f32 %v753, 0.0
      %v881 = vmax.f32 %v758, 0.0
      %v882 = vmax.f32 %v761, 0.0
      %v883 = vmax.f32 %v766, 0.0
      %v884 = vmax.f32 %v769, 0.0
      %v885 = vmax.f32 %v774, 0.0
      %v886 = vmax.f32 %v777, 0.0
      %v887 = vmax.f32 %v782, 0.0
      %v888 = vmax.f32 %v785, 0.0
      %v889 = vmax.f32 %v790, 0.0
      %v890 = vmax.f32 %v793, 0.0
      %v891 = vmax.f32 %v798, 0.0
      %v892 = vmax.f32 %v801, 0.0
      %v893 = vmax.f32 %v806, 0.0
      %v894 = vmax.f32 %v809, 0.0
      %v895 = vmax.f32 %v814, 0.0
      %v896 = vmax.f32 %v817, 0.0
      %v897 = vmax.f32 %v822, 0.0
      %v898 = vmax.f32 %v825, 0.0
      %v899 = vmax.f32 %v830, 0.0
      %v900 = vmax.f32 %v833, 0.0
      %v901 = vmax.f32 %v838, 0.0
      %v902 = vmax.f32 %v841, 0.0
      %v903 = vmax.f32 %v846, 0.0
      %v904 = vmax.f32 %v849, 0.0
      %v905 = vmax.f32 %v854, 0.0
      %v906 = vmax.f32 %v857, 0.0
      %v907 = vmax.f32 %v862, 0.0
      %v908 = vld [vmem:[%s1] sm:$0xff]
      %v909 = vld [vmem:[%s1 + $0x8] sm:$0xff]
      %v910 = vld [vmem:[%s1 + $0x10] sm:$0xff]
      %v911 = vld [vmem:[%s1 + $0x18] sm:$0xff]
      %v912 = vld [vmem:[%s1 + $0x20] sm:$0xff]
      %v913 = vld [vmem:[%s1 + $0x28] sm:$0xff]
      %v914 = vld [vmem:[%s1 + $0x30] sm:$0xff]
      %v915 = vld [vmem:[%s1 + $0x38] sm:$0xff]
      %v916 = vld [vmem:[%s1 + $0x40] sm:$0xff]
      %v917 = vld [vmem:[%s1 + $0x48] sm:$0xff]
      %v918 = vld [vmem:[%s1 + $0x50] sm:$0xff]
      %v919 = vld [vmem:[%s1 + $0x58] sm:$0xff]
      %v920 = vld [vmem:[%s1 + $0x60] sm:$0xff]
      %v921 = vld [vmem:[%s1 + $0x68] sm:$0xff]
      %v922 = vld [vmem:[%s1 + $0x70] sm:$0xff]
      %v923 = vld [vmem:[%s1 + $0x78] sm:$0xff]
      %v924 = vld [vmem:[%s1 + $0x80] sm:$0xff]
      %v925 = vld [vmem:[%s1 + $0x88] sm:$0xff]
      %v926 = vld [vmem:[%s1 + $0x90] sm:$0xff]
      %v927 = vld [vmem:[%s1 + $0x98] sm:$0xff]
      %v928 = vld [vmem:[%s1 + $0xa0] sm:$0xff]
      %v929 = vld [vmem:[%s1 + $0xa8] sm:$0xff]
      %v930 = vld [vmem:[%s1 + $0xb0] sm:$0xff]
      %v931 = vld [vmem:[%s1 + $0xb8] sm:$0xff]
      %v932 = vld [vmem:[%s1 + $0xc0] sm:$0xff]
      %v933 = vld [vmem:[%s1 + $0xc8] sm:$0xff]
      %v934 = vld [vmem:[%s1 + $0xd0] sm:$0xff]
      %v935 = vld [vmem:[%s1 + $0xd8] sm:$0xff]
      %v936 = vld [vmem:[%s1 + $0xe0] sm:$0xff]
      %v937 = vld [vmem:[%s1 + $0xe8] sm:$0xff]
      %v938 = vld [vmem:[%s1 + $0xf0] sm:$0xff]
      %v939 = vld [vmem:[%s1 + $0xf8] sm:$0xff]
      %v940 = vld [vmem:[%s1 + $0x100] sm:$0xff]
      %v941 = vld [vmem:[%s1 + $0x108] sm:$0xff]
      %v942 = vld [vmem:[%s1 + $0x110] sm:$0xff]
      %v943 = vld [vmem:[%s1 + $0x118] sm:$0xff]
      %v944 = vld [vmem:[%s1 + $0x120] sm:$0xff]
      %v945 = vld [vmem:[%s1 + $0x128] sm:$0xff]
      %v946 = vld [vmem:[%s1 + $0x130] sm:$0xff]
      %v947 = vld [vmem:[%s1 + $0x138] sm:$0xff]
      %v948 = vld [vmem:[%s1 + $0x140] sm:$0xf]
      %950 = vset.pattern.permute.xlu0 0
      %951 = vperm.xlu0 %950, %v908
      %v952 = vpop.permute.xlu0 %951
      %955 = vset.pattern.permute.xlu0 0
      %956 = vperm.xlu0 %955, %v909
      %v957 = vpop.permute.xlu0 %956
      %960 = vset.pattern.permute.xlu0 0
      %961 = vperm.xlu0 %960, %v910
      %v962 = vpop.permute.xlu0 %961
      %965 = vset.pattern.permute.xlu0 0
      %966 = vperm.xlu0 %965, %v911
      %v967 = vpop.permute.xlu0 %966
      %970 = vset.pattern.permute.xlu0 0
      %971 = vperm.xlu0 %970, %v912
      %v972 = vpop.permute.xlu0 %971
      %975 = vset.pattern.permute.xlu0 0
      %976 = vperm.xlu0 %975, %v913
      %v977 = vpop.permute.xlu0 %976
      %980 = vset.pattern.permute.xlu0 0
      %981 = vperm.xlu0 %980, %v914
      %v982 = vpop.permute.xlu0 %981
      %985 = vset.pattern.permute.xlu0 0
      %986 = vperm.xlu0 %985, %v915
      %v987 = vpop.permute.xlu0 %986
      %990 = vset.pattern.permute.xlu0 0
      %991 = vperm.xlu0 %990, %v916
      %v992 = vpop.permute.xlu0 %991
      %995 = vset.pattern.permute.xlu0 0
      %996 = vperm.xlu0 %995, %v917
      %v997 = vpop.permute.xlu0 %996
      %1000 = vset.pattern.permute.xlu0 0
      %1001 = vperm.xlu0 %1000, %v918
      %v1002 = vpop.permute.xlu0 %1001
      %1005 = vset.pattern.permute.xlu0 0
      %1006 = vperm.xlu0 %1005, %v919
      %v1007 = vpop.permute.xlu0 %1006
      %1010 = vset.pattern.permute.xlu0 0
      %1011 = vperm.xlu0 %1010, %v920
      %v1012 = vpop.permute.xlu0 %1011
      %1015 = vset.pattern.permute.xlu0 0
      %1016 = vperm.xlu0 %1015, %v921
      %v1017 = vpop.permute.xlu0 %1016
      %1020 = vset.pattern.permute.xlu0 0
      %1021 = vperm.xlu0 %1020, %v922
      %v1022 = vpop.permute.xlu0 %1021
      %1025 = vset.pattern.permute.xlu0 0
      %1026 = vperm.xlu0 %1025, %v923
      %v1027 = vpop.permute.xlu0 %1026
      %1030 = vset.pattern.permute.xlu0 0
      %1031 = vperm.xlu0 %1030, %v924
      %v1032 = vpop.permute.xlu0 %1031
      %1035 = vset.pattern.permute.xlu0 0
      %1036 = vperm.xlu0 %1035, %v925
      %v1037 = vpop.permute.xlu0 %1036
      %1040 = vset.pattern.permute.xlu0 0
      %1041 = vperm.xlu0 %1040, %v926
      %v1042 = vpop.permute.xlu0 %1041
      %1045 = vset.pattern.permute.xlu0 0
      %1046 = vperm.xlu0 %1045, %v927
      %v1047 = vpop.permute.xlu0 %1046
      %1050 = vset.pattern.permute.xlu0 0
      %1051 = vperm.xlu0 %1050, %v928
      %v1052 = vpop.permute.xlu0 %1051
      %1055 = vset.pattern.permute.xlu0 0
      %1056 = vperm.xlu0 %1055, %v929
      %v1057 = vpop.permute.xlu0 %1056
      %1060 = vset.pattern.permute.xlu0 0
      %1061 = vperm.xlu0 %1060, %v930
      %v1062 = vpop.permute.xlu0 %1061
      %1065 = vset.pattern.permute.xlu0 0
      %1066 = vperm.xlu0 %1065, %v931
      %v1067 = vpop.permute.xlu0 %1066
      %1070 = vset.pattern.permute.xlu0 0
      %1071 = vperm.xlu0 %1070, %v932
      %v1072 = vpop.permute.xlu0 %1071
      %1075 = vset.pattern.permute.xlu0 0
      %1076 = vperm.xlu0 %1075, %v933
      %v1077 = vpop.permute.xlu0 %1076
      %1080 = vset.pattern.permute.xlu0 0
      %1081 = vperm.xlu0 %1080, %v934
      %v1082 = vpop.permute.xlu0 %1081
      %1085 = vset.pattern.permute.xlu0 0
      %1086 = vperm.xlu0 %1085, %v935
      %v1087 = vpop.permute.xlu0 %1086
      %1090 = vset.pattern.permute.xlu0 0
      %1091 = vperm.xlu0 %1090, %v936
      %v1092 = vpop.permute.xlu0 %1091
      %1095 = vset.pattern.permute.xlu0 0
      %1096 = vperm.xlu0 %1095, %v937
      %v1097 = vpop.permute.xlu0 %1096
      %1100 = vset.pattern.permute.xlu0 0
      %1101 = vperm.xlu0 %1100, %v938
      %v1102 = vpop.permute.xlu0 %1101
      %1105 = vset.pattern.permute.xlu0 0
      %1106 = vperm.xlu0 %1105, %v939
      %v1107 = vpop.permute.xlu0 %1106
      %1110 = vset.pattern.permute.xlu0 0
      %1111 = vperm.xlu0 %1110, %v940
      %v1112 = vpop.permute.xlu0 %1111
      %1115 = vset.pattern.permute.xlu0 0
      %1116 = vperm.xlu0 %1115, %v941
      %v1117 = vpop.permute.xlu0 %1116
      %1120 = vset.pattern.permute.xlu0 0
      %1121 = vperm.xlu0 %1120, %v942
      %v1122 = vpop.permute.xlu0 %1121
      %1125 = vset.pattern.permute.xlu0 0
      %1126 = vperm.xlu0 %1125, %v943
      %v1127 = vpop.permute.xlu0 %1126
      %1130 = vset.pattern.permute.xlu0 0
      %1131 = vperm.xlu0 %1130, %v944
      %v1132 = vpop.permute.xlu0 %1131
      %1135 = vset.pattern.permute.xlu0 0
      %1136 = vperm.xlu0 %1135, %v945
      %v1137 = vpop.permute.xlu0 %1136
      %1140 = vset.pattern.permute.xlu0 0
      %1141 = vperm.xlu0 %1140, %v946
      %v1142 = vpop.permute.xlu0 %1141
      %1145 = vset.pattern.permute.xlu0 0
      %1146 = vperm.xlu0 %1145, %v947
      %v1147 = vpop.permute.xlu0 %1146
      %1150 = vset.pattern.permute.xlu0 0
      %1151 = vperm.xlu0 %1150, %v948
      %v1152 = vpop.permute.xlu0 %1151
      %v1154 = vmul.f32 %v867, %v952
      %v1155 = vmul.f32 %v868, %v957
      %v1156 = vmul.f32 %v869, %v962
      %v1157 = vmul.f32 %v870, %v967
      %v1158 = vmul.f32 %v871, %v972
      %v1159 = vmul.f32 %v872, %v977
      %v1160 = vmul.f32 %v873, %v982
      %v1161 = vmul.f32 %v874, %v987
      %v1162 = vmul.f32 %v875, %v992
      %v1163 = vmul.f32 %v876, %v997
      %v1164 = vmul.f32 %v877, %v1002
      %v1165 = vmul.f32 %v878, %v1007
      %v1166 = vmul.f32 %v879, %v1012
      %v1167 = vmul.f32 %v880, %v1017
      %v1168 = vmul.f32 %v881, %v1022
      %v1169 = vmul.f32 %v882, %v1027
      %v1170 = vmul.f32 %v883, %v1032
      %v1171 = vmul.f32 %v884, %v1037
      %v1172 = vmul.f32 %v885, %v1042
      %v1173 = vmul.f32 %v886, %v1047
      %v1174 = vmul.f32 %v887, %v1052
      %v1175 = vmul.f32 %v888, %v1057
      %v1176 = vmul.f32 %v889, %v1062
      %v1177 = vmul.f32 %v890, %v1067
      %v1178 = vmul.f32 %v891, %v1072
      %v1179 = vmul.f32 %v892, %v1077
      %v1180 = vmul.f32 %v893, %v1082
      %v1181 = vmul.f32 %v894, %v1087
      %v1182 = vmul.f32 %v895, %v1092
      %v1183 = vmul.f32 %v896, %v1097
      %v1184 = vmul.f32 %v897, %v1102
      %v1185 = vmul.f32 %v898, %v1107
      %v1186 = vmul.f32 %v899, %v1112
      %v1187 = vmul.f32 %v900, %v1117
      %v1188 = vmul.f32 %v901, %v1122
      %v1189 = vmul.f32 %v902, %v1127
      %v1190 = vmul.f32 %v903, %v1132
      %v1191 = vmul.f32 %v904, %v1137
      %v1192 = vmul.f32 %v905, %v1142
      %v1193 = vmul.f32 %v906, %v1147
      %v1194 = vmul.f32 %v907, %v1152
      %v1195 = vpack.c.bf16 %v1155, %v1154
      %v1196 = vpack.c.bf16 %v1157, %v1156
      %v1197 = vpack.c.bf16 %v1159, %v1158
      %v1198 = vpack.c.bf16 %v1161, %v1160
      %v1199 = vpack.c.bf16 %v1163, %v1162
      %v1200 = vpack.c.bf16 %v1165, %v1164
      %v1201 = vpack.c.bf16 %v1167, %v1166
      %v1202 = vpack.c.bf16 %v1169, %v1168
      %v1203 = vpack.c.bf16 %v1171, %v1170
      %v1204 = vpack.c.bf16 %v1173, %v1172
      %v1205 = vpack.c.bf16 %v1175, %v1174
      %v1206 = vpack.c.bf16 %v1177, %v1176
      %v1207 = vpack.c.bf16 %v1179, %v1178
      %v1208 = vpack.c.bf16 %v1181, %v1180
      %v1209 = vpack.c.bf16 %v1183, %v1182
      %v1210 = vpack.c.bf16 %v1185, %v1184
      %v1211 = vpack.c.bf16 %v1187, %v1186
      %v1212 = vpack.c.bf16 %v1189, %v1188
      %v1213 = vpack.c.bf16 %v1191, %v1190
      %v1214 = vpack.c.bf16 %v1193, %v1192
      %v1215 = vpack.c.bf16 %v1194, %v1194
      %v1237 = vunpack.c.l.b16 %v1195
      %v1238 = vunpack.c.h.b16 %v1195
      %v1239 = vunpack.c.l.b16 %v1196
      %v1240 = vunpack.c.h.b16 %v1196
      %v1241 = vunpack.c.l.b16 %v1197
      %v1242 = vunpack.c.h.b16 %v1197
      %v1243 = vunpack.c.l.b16 %v1198
      %v1244 = vunpack.c.h.b16 %v1198
      %v1245 = vunpack.c.l.b16 %v1199
      %v1246 = vunpack.c.h.b16 %v1199
      %v1247 = vunpack.c.l.b16 %v1200
      %v1248 = vunpack.c.h.b16 %v1200
      %v1249 = vunpack.c.l.b16 %v1201
      %v1250 = vunpack.c.h.b16 %v1201
      %v1251 = vunpack.c.l.b16 %v1202
      %v1252 = vunpack.c.h.b16 %v1202
      %v1253 = vunpack.c.l.b16 %v1203
      %v1254 = vunpack.c.h.b16 %v1203
      %v1255 = vunpack.c.l.b16 %v1204
      %v1256 = vunpack.c.h.b16 %v1204
      %v1257 = vunpack.c.l.b16 %v1205
      %v1258 = vunpack.c.h.b16 %v1205
      %v1259 = vunpack.c.l.b16 %v1206
      %v1260 = vunpack.c.h.b16 %v1206
      %v1261 = vunpack.c.l.b16 %v1207
      %v1262 = vunpack.c.h.b16 %v1207
      %v1263 = vunpack.c.l.b16 %v1208
      %v1264 = vunpack.c.h.b16 %v1208
      %v1265 = vunpack.c.l.b16 %v1209
      %v1266 = vunpack.c.h.b16 %v1209
      %v1267 = vunpack.c.l.b16 %v1210
      %v1268 = vunpack.c.h.b16 %v1210
      %v1269 = vunpack.c.l.b16 %v1211
      %v1270 = vunpack.c.h.b16 %v1211
      %v1271 = vunpack.c.l.b16 %v1212
      %v1272 = vunpack.c.h.b16 %v1212
      %v1273 = vunpack.c.l.b16 %v1213
      %v1274 = vunpack.c.h.b16 %v1213
      %v1275 = vunpack.c.l.b16 %v1214
      %v1276 = vunpack.c.h.b16 %v1214
      %v1277 = vunpack.c.l.b16 %v1215
      %v1278 = vpack.c.b16 %v1237, %v1237
      %v1279 = vpack.c.b16 %v1238, %v1238
      %v1280 = vpack.c.b16 %v1239, %v1239
      %v1281 = vpack.c.b16 %v1240, %v1240
      %v1282 = vpack.c.b16 %v1241, %v1241
      %v1283 = vpack.c.b16 %v1242, %v1242
      %v1284 = vpack.c.b16 %v1243, %v1243
      %v1285 = vpack.c.b16 %v1244, %v1244
      %v1286 = vpack.c.b16 %v1245, %v1245
      %v1287 = vpack.c.b16 %v1246, %v1246
      %v1288 = vpack.c.b16 %v1247, %v1247
      %v1289 = vpack.c.b16 %v1248, %v1248
      %v1290 = vpack.c.b16 %v1249, %v1249
      %v1291 = vpack.c.b16 %v1250, %v1250
      %v1292 = vpack.c.b16 %v1251, %v1251
      %v1293 = vpack.c.b16 %v1252, %v1252
      %v1294 = vpack.c.b16 %v1253, %v1253
      %v1295 = vpack.c.b16 %v1254, %v1254
      %v1296 = vpack.c.b16 %v1255, %v1255
      %v1297 = vpack.c.b16 %v1256, %v1256
      %v1298 = vpack.c.b16 %v1257, %v1257
      %v1299 = vpack.c.b16 %v1258, %v1258
      %v1300 = vpack.c.b16 %v1259, %v1259
      %v1301 = vpack.c.b16 %v1260, %v1260
      %v1302 = vpack.c.b16 %v1261, %v1261
      %v1303 = vpack.c.b16 %v1262, %v1262
      %v1304 = vpack.c.b16 %v1263, %v1263
      %v1305 = vpack.c.b16 %v1264, %v1264
      %v1306 = vpack.c.b16 %v1265, %v1265
      %v1307 = vpack.c.b16 %v1266, %v1266
      %v1308 = vpack.c.b16 %v1267, %v1267
      %v1309 = vpack.c.b16 %v1268, %v1268
      %v1310 = vpack.c.b16 %v1269, %v1269
      %v1311 = vpack.c.b16 %v1270, %v1270
      %v1312 = vpack.c.b16 %v1271, %v1271
      %v1313 = vpack.c.b16 %v1272, %v1272
      %v1314 = vpack.c.b16 %v1273, %v1273
      %v1315 = vpack.c.b16 %v1274, %v1274
      %v1316 = vpack.c.b16 %v1275, %v1275
      %v1317 = vpack.c.b16 %v1276, %v1276
      %v1318 = vpack.c.b16 %v1277, %v1277
      %vm1319 = vsmask.f32 1280
      %vm1320 = vsmask.f32 5392
      %vm1321 = vmor %vm1319, %vm1320
      %v1323 = vshrl.u32 %v1278, 16
      %v1325 = vrot.slane %v1323, 6
      %v1326 = vshll.u32 %v1278, 16
      %v1328 = vrot.slane %v1326, 7
      %v1329 = vor.u32 %v1325, %v1328
      %v1330 = vrot.slane %v1329, 4
      %v1332 = vshrl.u32 %v1279, 16
      %v1334 = vrot.slane %v1332, 6
      %v1335 = vshll.u32 %v1279, 16
      %v1337 = vrot.slane %v1335, 7
      %v1338 = vor.u32 %v1334, %v1337
      %v1339 = vsel %vm1321, %v1330, %v1338
      %v1340 = vrot.slane %v1338, 4
      %v1342 = vshrl.u32 %v1280, 16
      %v1344 = vrot.slane %v1342, 6
      %v1345 = vshll.u32 %v1280, 16
      %v1347 = vrot.slane %v1345, 7
      %v1348 = vor.u32 %v1344, %v1347
      %v1349 = vsel %vm1321, %v1340, %v1348
      %v1350 = vrot.slane %v1348, 4
      %v1352 = vshrl.u32 %v1281, 16
      %v1354 = vrot.slane %v1352, 6
      %v1355 = vshll.u32 %v1281, 16
      %v1357 = vrot.slane %v1355, 7
      %v1358 = vor.u32 %v1354, %v1357
      %v1359 = vsel %vm1321, %v1350, %v1358
      %v1360 = vrot.slane %v1358, 4
      %v1362 = vshrl.u32 %v1282, 16
      %v1364 = vrot.slane %v1362, 6
      %v1365 = vshll.u32 %v1282, 16
      %v1367 = vrot.slane %v1365, 7
      %v1368 = vor.u32 %v1364, %v1367
      %v1369 = vsel %vm1321, %v1360, %v1368
      %v1370 = vrot.slane %v1368, 4
      %v1372 = vshrl.u32 %v1283, 16
      %v1374 = vrot.slane %v1372, 6
      %v1375 = vshll.u32 %v1283, 16
      %v1377 = vrot.slane %v1375, 7
      %v1378 = vor.u32 %v1374, %v1377
      %v1379 = vsel %vm1321, %v1370, %v1378
      %v1380 = vrot.slane %v1378, 4
      %v1382 = vshrl.u32 %v1284, 16
      %v1384 = vrot.slane %v1382, 6
      %v1385 = vshll.u32 %v1284, 16
      %v1387 = vrot.slane %v1385, 7
      %v1388 = vor.u32 %v1384, %v1387
      %v1389 = vsel %vm1321, %v1380, %v1388
      %v1390 = vrot.slane %v1388, 4
      %v1392 = vshrl.u32 %v1285, 16
      %v1394 = vrot.slane %v1392, 6
      %v1395 = vshll.u32 %v1285, 16
      %v1397 = vrot.slane %v1395, 7
      %v1398 = vor.u32 %v1394, %v1397
      %v1399 = vsel %vm1321, %v1390, %v1398
      %v1400 = vrot.slane %v1398, 4
      %v1402 = vshrl.u32 %v1286, 16
      %v1404 = vrot.slane %v1402, 6
      %v1405 = vshll.u32 %v1286, 16
      %v1407 = vrot.slane %v1405, 7
      %v1408 = vor.u32 %v1404, %v1407
      %v1409 = vsel %vm1321, %v1400, %v1408
      %v1410 = vrot.slane %v1408, 4
      %v1412 = vshrl.u32 %v1287, 16
      %v1414 = vrot.slane %v1412, 6
      %v1415 = vshll.u32 %v1287, 16
      %v1417 = vrot.slane %v1415, 7
      %v1418 = vor.u32 %v1414, %v1417
      %v1419 = vsel %vm1321, %v1410, %v1418
      %v1420 = vrot.slane %v1418, 4
      %v1422 = vshrl.u32 %v1288, 16
      %v1424 = vrot.slane %v1422, 6
      %v1425 = vshll.u32 %v1288, 16
      %v1427 = vrot.slane %v1425, 7
      %v1428 = vor.u32 %v1424, %v1427
      %v1429 = vsel %vm1321, %v1420, %v1428
      %v1430 = vrot.slane %v1428, 4
      %v1432 = vshrl.u32 %v1289, 16
      %v1434 = vrot.slane %v1432, 6
      %v1435 = vshll.u32 %v1289, 16
      %v1437 = vrot.slane %v1435, 7
      %v1438 = vor.u32 %v1434, %v1437
      %v1439 = vsel %vm1321, %v1430, %v1438
      %v1440 = vrot.slane %v1438, 4
      %v1442 = vshrl.u32 %v1290, 16
      %v1444 = vrot.slane %v1442, 6
      %v1445 = vshll.u32 %v1290, 16
      %v1447 = vrot.slane %v1445, 7
      %v1448 = vor.u32 %v1444, %v1447
      %v1449 = vsel %vm1321, %v1440, %v1448
      %v1450 = vrot.slane %v1448, 4
      %v1452 = vshrl.u32 %v1291, 16
      %v1454 = vrot.slane %v1452, 6
      %v1455 = vshll.u32 %v1291, 16
      %v1457 = vrot.slane %v1455, 7
      %v1458 = vor.u32 %v1454, %v1457
      %v1459 = vsel %vm1321, %v1450, %v1458
      %v1460 = vrot.slane %v1458, 4
      %v1462 = vshrl.u32 %v1292, 16
      %v1464 = vrot.slane %v1462, 6
      %v1465 = vshll.u32 %v1292, 16
      %v1467 = vrot.slane %v1465, 7
      %v1468 = vor.u32 %v1464, %v1467
      %v1469 = vsel %vm1321, %v1460, %v1468
      %v1470 = vrot.slane %v1468, 4
      %v1472 = vshrl.u32 %v1293, 16
      %v1474 = vrot.slane %v1472, 6
      %v1475 = vshll.u32 %v1293, 16
      %v1477 = vrot.slane %v1475, 7
      %v1478 = vor.u32 %v1474, %v1477
      %v1479 = vsel %vm1321, %v1470, %v1478
      %v1480 = vrot.slane %v1478, 4
      %v1482 = vshrl.u32 %v1294, 16
      %v1484 = vrot.slane %v1482, 6
      %v1485 = vshll.u32 %v1294, 16
      %v1487 = vrot.slane %v1485, 7
      %v1488 = vor.u32 %v1484, %v1487
      %v1489 = vsel %vm1321, %v1480, %v1488
      %v1490 = vrot.slane %v1488, 4
      %v1492 = vshrl.u32 %v1295, 16
      %v1494 = vrot.slane %v1492, 6
      %v1495 = vshll.u32 %v1295, 16
      %v1497 = vrot.slane %v1495, 7
      %v1498 = vor.u32 %v1494, %v1497
      %v1499 = vsel %vm1321, %v1490, %v1498
      %v1500 = vrot.slane %v1498, 4
      %v1502 = vshrl.u32 %v1296, 16
      %v1504 = vrot.slane %v1502, 6
      %v1505 = vshll.u32 %v1296, 16
      %v1507 = vrot.slane %v1505, 7
      %v1508 = vor.u32 %v1504, %v1507
      %v1509 = vsel %vm1321, %v1500, %v1508
      %v1510 = vrot.slane %v1508, 4
      %v1512 = vshrl.u32 %v1297, 16
      %v1514 = vrot.slane %v1512, 6
      %v1515 = vshll.u32 %v1297, 16
      %v1517 = vrot.slane %v1515, 7
      %v1518 = vor.u32 %v1514, %v1517
      %v1519 = vsel %vm1321, %v1510, %v1518
      %v1520 = vrot.slane %v1518, 4
      %v1522 = vshrl.u32 %v1298, 16
      %v1524 = vrot.slane %v1522, 6
      %v1525 = vshll.u32 %v1298, 16
      %v1527 = vrot.slane %v1525, 7
      %v1528 = vor.u32 %v1524, %v1527
      %v1529 = vsel %vm1321, %v1520, %v1528
      %v1530 = vrot.slane %v1528, 4
      %v1532 = vshrl.u32 %v1299, 16
      %v1534 = vrot.slane %v1532, 6
      %v1535 = vshll.u32 %v1299, 16
      %v1537 = vrot.slane %v1535, 7
      %v1538 = vor.u32 %v1534, %v1537
      %v1539 = vsel %vm1321, %v1530, %v1538
      %v1540 = vrot.slane %v1538, 4
      %v1542 = vshrl.u32 %v1300, 16
      %v1544 = vrot.slane %v1542, 6
      %v1545 = vshll.u32 %v1300, 16
      %v1547 = vrot.slane %v1545, 7
      %v1548 = vor.u32 %v1544, %v1547
      %v1549 = vsel %vm1321, %v1540, %v1548
      %v1550 = vrot.slane %v1548, 4
      %v1552 = vshrl.u32 %v1301, 16
      %v1554 = vrot.slane %v1552, 6
      %v1555 = vshll.u32 %v1301, 16
      %v1557 = vrot.slane %v1555, 7
      %v1558 = vor.u32 %v1554, %v1557
      %v1559 = vsel %vm1321, %v1550, %v1558
      %v1560 = vrot.slane %v1558, 4
      %v1562 = vshrl.u32 %v1302, 16
      %v1564 = vrot.slane %v1562, 6
      %v1565 = vshll.u32 %v1302, 16
      %v1567 = vrot.slane %v1565, 7
      %v1568 = vor.u32 %v1564, %v1567
      %v1569 = vsel %vm1321, %v1560, %v1568
      %v1570 = vrot.slane %v1568, 4
      %v1572 = vshrl.u32 %v1303, 16
      %v1574 = vrot.slane %v1572, 6
      %v1575 = vshll.u32 %v1303, 16
      %v1577 = vrot.slane %v1575, 7
      %v1578 = vor.u32 %v1574, %v1577
      %v1579 = vsel %vm1321, %v1570, %v1578
      %v1580 = vrot.slane %v1578, 4
      %v1582 = vshrl.u32 %v1304, 16
      %v1584 = vrot.slane %v1582, 6
      %v1585 = vshll.u32 %v1304, 16
      %v1587 = vrot.slane %v1585, 7
      %v1588 = vor.u32 %v1584, %v1587
      %v1589 = vsel %vm1321, %v1580, %v1588
      %v1590 = vrot.slane %v1588, 4
      %v1592 = vshrl.u32 %v1305, 16
      %v1594 = vrot.slane %v1592, 6
      %v1595 = vshll.u32 %v1305, 16
      %v1597 = vrot.slane %v1595, 7
      %v1598 = vor.u32 %v1594, %v1597
      %v1599 = vsel %vm1321, %v1590, %v1598
      %v1600 = vrot.slane %v1598, 4
      %v1602 = vshrl.u32 %v1306, 16
      %v1604 = vrot.slane %v1602, 6
      %v1605 = vshll.u32 %v1306, 16
      %v1607 = vrot.slane %v1605, 7
      %v1608 = vor.u32 %v1604, %v1607
      %v1609 = vsel %vm1321, %v1600, %v1608
      %v1610 = vrot.slane %v1608, 4
      %v1612 = vshrl.u32 %v1307, 16
      %v1614 = vrot.slane %v1612, 6
      %v1615 = vshll.u32 %v1307, 16
      %v1617 = vrot.slane %v1615, 7
      %v1618 = vor.u32 %v1614, %v1617
      %v1619 = vsel %vm1321, %v1610, %v1618
      %v1620 = vrot.slane %v1618, 4
      %v1622 = vshrl.u32 %v1308, 16
      %v1624 = vrot.slane %v1622, 6
      %v1625 = vshll.u32 %v1308, 16
      %v1627 = vrot.slane %v1625, 7
      %v1628 = vor.u32 %v1624, %v1627
      %v1629 = vsel %vm1321, %v1620, %v1628
      %v1630 = vrot.slane %v1628, 4
      %v1632 = vshrl.u32 %v1309, 16
      %v1634 = vrot.slane %v1632, 6
      %v1635 = vshll.u32 %v1309, 16
      %v1637 = vrot.slane %v1635, 7
      %v1638 = vor.u32 %v1634, %v1637
      %v1639 = vsel %vm1321, %v1630, %v1638
      %v1640 = vrot.slane %v1638, 4
      %v1642 = vshrl.u32 %v1310, 16
      %v1644 = vrot.slane %v1642, 6
      %v1645 = vshll.u32 %v1310, 16
      %v1647 = vrot.slane %v1645, 7
      %v1648 = vor.u32 %v1644, %v1647
      %v1649 = vsel %vm1321, %v1640, %v1648
      %v1650 = vrot.slane %v1648, 4
      %v1652 = vshrl.u32 %v1311, 16
      %v1654 = vrot.slane %v1652, 6
      %v1655 = vshll.u32 %v1311, 16
      %v1657 = vrot.slane %v1655, 7
      %v1658 = vor.u32 %v1654, %v1657
      %v1659 = vsel %vm1321, %v1650, %v1658
      %v1660 = vrot.slane %v1658, 4
      %v1662 = vshrl.u32 %v1312, 16
      %v1664 = vrot.slane %v1662, 6
      %v1665 = vshll.u32 %v1312, 16
      %v1667 = vrot.slane %v1665, 7
      %v1668 = vor.u32 %v1664, %v1667
      %v1669 = vsel %vm1321, %v1660, %v1668
      %v1670 = vrot.slane %v1668, 4
      %v1672 = vshrl.u32 %v1313, 16
      %v1674 = vrot.slane %v1672, 6
      %v1675 = vshll.u32 %v1313, 16
      %v1677 = vrot.slane %v1675, 7
      %v1678 = vor.u32 %v1674, %v1677
      %v1679 = vsel %vm1321, %v1670, %v1678
      %v1680 = vrot.slane %v1678, 4
      %v1682 = vshrl.u32 %v1314, 16
      %v1684 = vrot.slane %v1682, 6
      %v1685 = vshll.u32 %v1314, 16
      %v1687 = vrot.slane %v1685, 7
      %v1688 = vor.u32 %v1684, %v1687
      %v1689 = vsel %vm1321, %v1680, %v1688
      %v1690 = vrot.slane %v1688, 4
      %v1692 = vshrl.u32 %v1315, 16
      %v1694 = vrot.slane %v1692, 6
      %v1695 = vshll.u32 %v1315, 16
      %v1697 = vrot.slane %v1695, 7
      %v1698 = vor.u32 %v1694, %v1697
      %v1699 = vsel %vm1321, %v1690, %v1698
      %v1700 = vrot.slane %v1698, 4
      %v1702 = vshrl.u32 %v1316, 16
      %v1704 = vrot.slane %v1702, 6
      %v1705 = vshll.u32 %v1316, 16
      %v1707 = vrot.slane %v1705, 7
      %v1708 = vor.u32 %v1704, %v1707
      %v1709 = vsel %vm1321, %v1700, %v1708
      %v1710 = vrot.slane %v1708, 4
      %v1712 = vshrl.u32 %v1317, 16
      %v1714 = vrot.slane %v1712, 6
      %v1715 = vshll.u32 %v1317, 16
      %v1717 = vrot.slane %v1715, 7
      %v1718 = vor.u32 %v1714, %v1717
      %v1719 = vsel %vm1321, %v1710, %v1718
      %v1720 = vrot.slane %v1718, 4
      %v1722 = vshrl.u32 %v1318, 16
      %v1724 = vrot.slane %v1722, 6
      %v1725 = vshll.u32 %v1318, 16
      %v1727 = vrot.slane %v1725, 7
      %v1728 = vor.u32 %v1724, %v1727
      %v1729 = vsel %vm1321, %v1720, %v1728
      %vm1771 = vcmask 1043457
      %vm1772 = vsmask.f32 7942
      %vm1773 = vmand %vm1771, %vm1772
      %v1774 = vld [vmem:[#allocation2 + $0x18] sm:$0xe]
      %v1775 = vsel %vm1773, %v1329, %v1774
      %1776 = vst [vmem:[#allocation2 + $0x18] sm:$0xe] %v1775
      %1777 = vst [vmem:[#allocation2 + $0x24] sm:$0xf] %v1339
      %1778 = vst [vmem:[#allocation2 + $0x30] sm:$0xf] %v1349
      %1779 = vst [vmem:[#allocation2 + $0x3c] sm:$0xf] %v1359
      %1780 = vst [vmem:[#allocation2 + $0x48] sm:$0xf] %v1369
      %1781 = vst [vmem:[#allocation2 + $0x54] sm:$0xf] %v1379
      %1782 = vst [vmem:[#allocation2 + $0x60] sm:$0xf] %v1389
      %1783 = vst [vmem:[#allocation2 + $0x6c] sm:$0xf] %v1399
      %1784 = vst [vmem:[#allocation2 + $0x78] sm:$0xf] %v1409
      %1785 = vst [vmem:[#allocation2 + $0x84] sm:$0xf] %v1419
      %1786 = vst [vmem:[#allocation2 + $0x90] sm:$0xf] %v1429
      %1787 = vst [vmem:[#allocation2 + $0x9c] sm:$0xf] %v1439
      %1788 = vst [vmem:[#allocation2 + $0xa8] sm:$0xf] %v1449
      %1789 = vst [vmem:[#allocation2 + $0xb4] sm:$0xf] %v1459
      %1790 = vst [vmem:[#allocation2 + $0xc0] sm:$0xf] %v1469
      %1791 = vst [vmem:[#allocation2 + $0xcc] sm:$0xf] %v1479
      %1792 = vst [vmem:[#allocation2 + $0xd8] sm:$0xf] %v1489
      %1793 = vst [vmem:[#allocation2 + $0xe4] sm:$0xf] %v1499
      %1794 = vst [vmem:[#allocation2 + $0xf0] sm:$0xf] %v1509
      %1795 = vst [vmem:[#allocation2 + $0xfc] sm:$0xf] %v1519
      %1796 = vst [vmem:[#allocation2 + $0x108] sm:$0xf] %v1529
      %1797 = vst [vmem:[#allocation2 + $0x114] sm:$0xf] %v1539
      %1798 = vst [vmem:[#allocation2 + $0x120] sm:$0xf] %v1549
      %1799 = vst [vmem:[#allocation2 + $0x12c] sm:$0xf] %v1559
      %1800 = vst [vmem:[#allocation2 + $0x138] sm:$0xf] %v1569
      %1801 = vst [vmem:[#allocation2 + $0x144] sm:$0xf] %v1579
      %1802 = vst [vmem:[#allocation2 + $0x150] sm:$0xf] %v1589
      %1803 = vst [vmem:[#allocation2 + $0x15c] sm:$0xf] %v1599
      %1804 = vst [vmem:[#allocation2 + $0x168] sm:$0xf] %v1609
      %1805 = vst [vmem:[#allocation2 + $0x174] sm:$0xf] %v1619
      %1806 = vst [vmem:[#allocation2 + $0x180] sm:$0xf] %v1629
      %1807 = vst [vmem:[#allocation2 + $0x18c] sm:$0xf] %v1639
      %1808 = vst [vmem:[#allocation2 + $0x198] sm:$0xf] %v1649
      %1809 = vst [vmem:[#allocation2 + $0x1a4] sm:$0xf] %v1659
      %1810 = vst [vmem:[#allocation2 + $0x1b0] sm:$0xf] %v1669
      %1811 = vst [vmem:[#allocation2 + $0x1bc] sm:$0xf] %v1679
      %1812 = vst [vmem:[#allocation2 + $0x1c8] sm:$0xf] %v1689
      %1813 = vst [vmem:[#allocation2 + $0x1d4] sm:$0xf] %v1699
      %1814 = vst [vmem:[#allocation2 + $0x1e0] sm:$0xf] %v1709
      %1815 = vst [vmem:[#allocation2 + $0x1ec] sm:$0xf] %v1719
      %vm1816 = vcmask 1043456
      %vm1817 = vsmask.f32 3328
      %vm1818 = vmand %vm1816, %vm1817
      %v1819 = vld [vmem:[#allocation2 + $0x1f8] sm:$0xf]
      %v1820 = vsel %vm1818, %v1729, %v1819
      %1821 = vst [vmem:[#allocation2 + $0x1f8] sm:$0xf] %v1820
      %vm1822 = vcmask 1040384
      %vm1823 = vcmask 1044484
      %vm1824 = vmor %vm1822, %vm1823
      %v1825 = vrot.slane %v1278, 7
      %v1826 = vrot.slane %v1825, 4
      %v1827 = vrot.slane %v1279, 7
      %v1828 = vsel %vm1824, %v1826, %v1827
      %v1829 = vrot.slane %v1827, 4
      %v1830 = vrot.slane %v1280, 7
      %v1831 = vsel %vm1824, %v1829, %v1830
      %v1832 = vrot.slane %v1830, 4
      %v1833 = vrot.slane %v1281, 7
      %v1834 = vsel %vm1824, %v1832, %v1833
      %v1835 = vrot.slane %v1833, 4
      %v1836 = vrot.slane %v1282, 7
      %v1837 = vsel %vm1824, %v1835, %v1836
      %v1838 = vrot.slane %v1836, 4
      %v1839 = vrot.slane %v1283, 7
      %v1840 = vsel %vm1824, %v1838, %v1839
      %v1841 = vrot.slane %v1839, 4
      %v1842 = vrot.slane %v1284, 7
      %v1843 = vsel %vm1824, %v1841, %v1842
      %v1844 = vrot.slane %v1842, 4
      %v1845 = vrot.slane %v1285, 7
      %v1846 = vsel %vm1824, %v1844, %v1845
      %v1847 = vrot.slane %v1845, 4
      %v1848 = vrot.slane %v1286, 7
      %v1849 = vsel %vm1824, %v1847, %v1848
      %v1850 = vrot.slane %v1848, 4
      %v1851 = vrot.slane %v1287, 7
      %v1852 = vsel %vm1824, %v1850, %v1851
      %v1853 = vrot.slane %v1851, 4
      %v1854 = vrot.slane %v1288, 7
      %v1855 = vsel %vm1824, %v1853, %v1854
      %v1856 = vrot.slane %v1854, 4
      %v1857 = vrot.slane %v1289, 7
      %v1858 = vsel %vm1824, %v1856, %v1857
      %v1859 = vrot.slane %v1857, 4
      %v1860 = vrot.slane %v1290, 7
      %v1861 = vsel %vm1824, %v1859, %v1860
      %v1862 = vrot.slane %v1860, 4
      %v1863 = vrot.slane %v1291, 7
      %v1864 = vsel %vm1824, %v1862, %v1863
      %v1865 = vrot.slane %v1863, 4
      %v1866 = vrot.slane %v1292, 7
      %v1867 = vsel %vm1824, %v1865, %v1866
      %v1868 = vrot.slane %v1866, 4
      %v1869 = vrot.slane %v1293, 7
      %v1870 = vsel %vm1824, %v1868, %v1869
      %v1871 = vrot.slane %v1869, 4
      %v1872 = vrot.slane %v1294, 7
      %v1873 = vsel %vm1824, %v1871, %v1872
      %v1874 = vrot.slane %v1872, 4
      %v1875 = vrot.slane %v1295, 7
      %v1876 = vsel %vm1824, %v1874, %v1875
      %v1877 = vrot.slane %v1875, 4
      %v1878 = vrot.slane %v1296, 7
      %v1879 = vsel %vm1824, %v1877, %v1878
      %v1880 = vrot.slane %v1878, 4
      %v1881 = vrot.slane %v1297, 7
      %v1882 = vsel %vm1824, %v1880, %v1881
      %v1883 = vrot.slane %v1881, 4
      %v1884 = vrot.slane %v1298, 7
      %v1885 = vsel %vm1824, %v1883, %v1884
      %v1886 = vrot.slane %v1884, 4
      %v1887 = vrot.slane %v1299, 7
      %v1888 = vsel %vm1824, %v1886, %v1887
      %v1889 = vrot.slane %v1887, 4
      %v1890 = vrot.slane %v1300, 7
      %v1891 = vsel %vm1824, %v1889, %v1890
      %v1892 = vrot.slane %v1890, 4
      %v1893 = vrot.slane %v1301, 7
      %v1894 = vsel %vm1824, %v1892, %v1893
      %v1895 = vrot.slane %v1893, 4
      %v1896 = vrot.slane %v1302, 7
      %v1897 = vsel %vm1824, %v1895, %v1896
      %v1898 = vrot.slane %v1896, 4
      %v1899 = vrot.slane %v1303, 7
      %v1900 = vsel %vm1824, %v1898, %v1899
      %v1901 = vrot.slane %v1899, 4
      %v1902 = vrot.slane %v1304, 7
      %v1903 = vsel %vm1824, %v1901, %v1902
      %v1904 = vrot.slane %v1902, 4
      %v1905 = vrot.slane %v1305, 7
      %v1906 = vsel %vm1824, %v1904, %v1905
      %v1907 = vrot.slane %v1905, 4
      %v1908 = vrot.slane %v1306, 7
      %v1909 = vsel %vm1824, %v1907, %v1908
      %v1910 = vrot.slane %v1908, 4
      %v1911 = vrot.slane %v1307, 7
      %v1912 = vsel %vm1824, %v1910, %v1911
      %v1913 = vrot.slane %v1911, 4
      %v1914 = vrot.slane %v1308, 7
      %v1915 = vsel %vm1824, %v1913, %v1914
      %v1916 = vrot.slane %v1914, 4
      %v1917 = vrot.slane %v1309, 7
      %v1918 = vsel %vm1824, %v1916, %v1917
      %v1919 = vrot.slane %v1917, 4
      %v1920 = vrot.slane %v1310, 7
      %v1921 = vsel %vm1824, %v1919, %v1920
      %v1922 = vrot.slane %v1920, 4
      %v1923 = vrot.slane %v1311, 7
      %v1924 = vsel %vm1824, %v1922, %v1923
      %v1925 = vrot.slane %v1923, 4
      %v1926 = vrot.slane %v1312, 7
      %v1927 = vsel %vm1824, %v1925, %v1926
      %v1928 = vrot.slane %v1926, 4
      %v1929 = vrot.slane %v1313, 7
      %v1930 = vsel %vm1824, %v1928, %v1929
      %v1931 = vrot.slane %v1929, 4
      %v1932 = vrot.slane %v1314, 7
      %v1933 = vsel %vm1824, %v1931, %v1932
      %v1934 = vrot.slane %v1932, 4
      %v1935 = vrot.slane %v1315, 7
      %v1936 = vsel %vm1824, %v1934, %v1935
      %v1937 = vrot.slane %v1935, 4
      %v1938 = vrot.slane %v1316, 7
      %v1939 = vsel %vm1824, %v1937, %v1938
      %v1940 = vrot.slane %v1938, 4
      %v1941 = vrot.slane %v1317, 7
      %v1942 = vsel %vm1824, %v1940, %v1941
      %v1943 = vrot.slane %v1941, 4
      %v1944 = vrot.slane %v1318, 7
      %v1945 = vsel %vm1824, %v1943, %v1944
      %1987 = vst [vmem:[#allocation2 + $0x1c] sm:$0xe] %v1825
      %1988 = vst [vmem:[#allocation2 + $0x28] sm:$0xf] %v1828
      %1989 = vst [vmem:[#allocation2 + $0x34] sm:$0xf] %v1831
      %1990 = vst [vmem:[#allocation2 + $0x40] sm:$0xf] %v1834
      %1991 = vst [vmem:[#allocation2 + $0x4c] sm:$0xf] %v1837
      %1992 = vst [vmem:[#allocation2 + $0x58] sm:$0xf] %v1840
      %1993 = vst [vmem:[#allocation2 + $0x64] sm:$0xf] %v1843
      %1994 = vst [vmem:[#allocation2 + $0x70] sm:$0xf] %v1846
      %1995 = vst [vmem:[#allocation2 + $0x7c] sm:$0xf] %v1849
      %1996 = vst [vmem:[#allocation2 + $0x88] sm:$0xf] %v1852
      %1997 = vst [vmem:[#allocation2 + $0x94] sm:$0xf] %v1855
      %1998 = vst [vmem:[#allocation2 + $0xa0] sm:$0xf] %v1858
      %1999 = vst [vmem:[#allocation2 + $0xac] sm:$0xf] %v1861
      %2000 = vst [vmem:[#allocation2 + $0xb8] sm:$0xf] %v1864
      %2001 = vst [vmem:[#allocation2 + $0xc4] sm:$0xf] %v1867
      %2002 = vst [vmem:[#allocation2 + $0xd0] sm:$0xf] %v1870
      %2003 = vst [vmem:[#allocation2 + $0xdc] sm:$0xf] %v1873
      %2004 = vst [vmem:[#allocation2 + $0xe8] sm:$0xf] %v1876
      %2005 = vst [vmem:[#allocation2 + $0xf4] sm:$0xf] %v1879
      %2006 = vst [vmem:[#allocation2 + $0x100] sm:$0xf] %v1882
      %2007 = vst [vmem:[#allocation2 + $0x10c] sm:$0xf] %v1885
      %2008 = vst [vmem:[#allocation2 + $0x118] sm:$0xf] %v1888
      %2009 = vst [vmem:[#allocation2 + $0x124] sm:$0xf] %v1891
      %2010 = vst [vmem:[#allocation2 + $0x130] sm:$0xf] %v1894
      %2011 = vst [vmem:[#allocation2 + $0x13c] sm:$0xf] %v1897
      %2012 = vst [vmem:[#allocation2 + $0x148] sm:$0xf] %v1900
      %2013 = vst [vmem:[#allocation2 + $0x154] sm:$0xf] %v1903
      %2014 = vst [vmem:[#allocation2 + $0x160] sm:$0xf] %v1906
      %2015 = vst [vmem:[#allocation2 + $0x16c] sm:$0xf] %v1909
      %2016 = vst [vmem:[#allocation2 + $0x178] sm:$0xf] %v1912
      %2017 = vst [vmem:[#allocation2 + $0x184] sm:$0xf] %v1915
      %2018 = vst [vmem:[#allocation2 + $0x190] sm:$0xf] %v1918
      %2019 = vst [vmem:[#allocation2 + $0x19c] sm:$0xf] %v1921
      %2020 = vst [vmem:[#allocation2 + $0x1a8] sm:$0xf] %v1924
      %2021 = vst [vmem:[#allocation2 + $0x1b4] sm:$0xf] %v1927
      %2022 = vst [vmem:[#allocation2 + $0x1c0] sm:$0xf] %v1930
      %2023 = vst [vmem:[#allocation2 + $0x1cc] sm:$0xf] %v1933
      %2024 = vst [vmem:[#allocation2 + $0x1d8] sm:$0xf] %v1936
      %2025 = vst [vmem:[#allocation2 + $0x1e4] sm:$0xf] %v1939
      %2026 = vst [vmem:[#allocation2 + $0x1f0] sm:$0xf] %v1942
      %2027 = vst [vmem:[#allocation2 + $0x1fc] sm:$0x7] %v1945
      %vm2028 = vsmask.f32 256
      %vm2029 = vsmask.f32 4368
      %vm2030 = vmor %vm2028, %vm2029
      %v2031 = vrot.slane %v1323, 7
      %v2032 = vor.u32 %v2031, %v1326
      %v2033 = vrot.slane %v2031, 4
      %v2034 = vrot.slane %v1332, 7
      %v2035 = vor.u32 %v2034, %v1335
      %v2036 = vsel %vm2030, %v2033, %v2035
      %v2037 = vrot.slane %v2034, 4
      %v2038 = vrot.slane %v1342, 7
      %v2039 = vor.u32 %v2038, %v1345
      %v2040 = vsel %vm2030, %v2037, %v2039
      %v2041 = vrot.slane %v2038, 4
      %v2042 = vrot.slane %v1352, 7
      %v2043 = vor.u32 %v2042, %v1355
      %v2044 = vsel %vm2030, %v2041, %v2043
      %v2045 = vrot.slane %v2042, 4
      %v2046 = vrot.slane %v1362, 7
      %v2047 = vor.u32 %v2046, %v1365
      %v2048 = vsel %vm2030, %v2045, %v2047
      %v2049 = vrot.slane %v2046, 4
      %v2050 = vrot.slane %v1372, 7
      %v2051 = vor.u32 %v2050, %v1375
      %v2052 = vsel %vm2030, %v2049, %v2051
      %v2053 = vrot.slane %v2050, 4
      %v2054 = vrot.slane %v1382, 7
      %v2055 = vor.u32 %v2054, %v1385
      %v2056 = vsel %vm2030, %v2053, %v2055
      %v2057 = vrot.slane %v2054, 4
      %v2058 = vrot.slane %v1392, 7
      %v2059 = vor.u32 %v2058, %v1395
      %v2060 = vsel %vm2030, %v2057, %v2059
      %v2061 = vrot.slane %v2058, 4
      %v2062 = vrot.slane %v1402, 7
      %v2063 = vor.u32 %v2062, %v1405
      %v2064 = vsel %vm2030, %v2061, %v2063
      %v2065 = vrot.slane %v2062, 4
      %v2066 = vrot.slane %v1412, 7
      %v2067 = vor.u32 %v2066, %v1415
      %v2068 = vsel %vm2030, %v2065, %v2067
      %v2069 = vrot.slane %v2066, 4
      %v2070 = vrot.slane %v1422, 7
      %v2071 = vor.u32 %v2070, %v1425
      %v2072 = vsel %vm2030, %v2069, %v2071
      %v2073 = vrot.slane %v2070, 4
      %v2074 = vrot.slane %v1432, 7
      %v2075 = vor.u32 %v2074, %v1435
      %v2076 = vsel %vm2030, %v2073, %v2075
      %v2077 = vrot.slane %v2074, 4
      %v2078 = vrot.slane %v1442, 7
      %v2079 = vor.u32 %v2078, %v1445
      %v2080 = vsel %vm2030, %v2077, %v2079
      %v2081 = vrot.slane %v2078, 4
      %v2082 = vrot.slane %v1452, 7
      %v2083 = vor.u32 %v2082, %v1455
      %v2084 = vsel %vm2030, %v2081, %v2083
      %v2085 = vrot.slane %v2082, 4
      %v2086 = vrot.slane %v1462, 7
      %v2087 = vor.u32 %v2086, %v1465
      %v2088 = vsel %vm2030, %v2085, %v2087
      %v2089 = vrot.slane %v2086, 4
      %v2090 = vrot.slane %v1472, 7
      %v2091 = vor.u32 %v2090, %v1475
      %v2092 = vsel %vm2030, %v2089, %v2091
      %v2093 = vrot.slane %v2090, 4
      %v2094 = vrot.slane %v1482, 7
      %v2095 = vor.u32 %v2094, %v1485
      %v2096 = vsel %vm2030, %v2093, %v2095
      %v2097 = vrot.slane %v2094, 4
      %v2098 = vrot.slane %v1492, 7
      %v2099 = vor.u32 %v2098, %v1495
      %v2100 = vsel %vm2030, %v2097, %v2099
      %v2101 = vrot.slane %v2098, 4
      %v2102 = vrot.slane %v1502, 7
      %v2103 = vor.u32 %v2102, %v1505
      %v2104 = vsel %vm2030, %v2101, %v2103
      %v2105 = vrot.slane %v2102, 4
      %v2106 = vrot.slane %v1512, 7
      %v2107 = vor.u32 %v2106, %v1515
      %v2108 = vsel %vm2030, %v2105, %v2107
      %v2109 = vrot.slane %v2106, 4
      %v2110 = vrot.slane %v1522, 7
      %v2111 = vor.u32 %v2110, %v1525
      %v2112 = vsel %vm2030, %v2109, %v2111
      %v2113 = vrot.slane %v2110, 4
      %v2114 = vrot.slane %v1532, 7
      %v2115 = vor.u32 %v2114, %v1535
      %v2116 = vsel %vm2030, %v2113, %v2115
      %v2117 = vrot.slane %v2114, 4
      %v2118 = vrot.slane %v1542, 7
      %v2119 = vor.u32 %v2118, %v1545
      %v2120 = vsel %vm2030, %v2117, %v2119
      %v2121 = vrot.slane %v2118, 4
      %v2122 = vrot.slane %v1552, 7
      %v2123 = vor.u32 %v2122, %v1555
      %v2124 = vsel %vm2030, %v2121, %v2123
      %v2125 = vrot.slane %v2122, 4
      %v2126 = vrot.slane %v1562, 7
      %v2127 = vor.u32 %v2126, %v1565
      %v2128 = vsel %vm2030, %v2125, %v2127
      %v2129 = vrot.slane %v2126, 4
      %v2130 = vrot.slane %v1572, 7
      %v2131 = vor.u32 %v2130, %v1575
      %v2132 = vsel %vm2030, %v2129, %v2131
      %v2133 = vrot.slane %v2130, 4
      %v2134 = vrot.slane %v1582, 7
      %v2135 = vor.u32 %v2134, %v1585
      %v2136 = vsel %vm2030, %v2133, %v2135
      %v2137 = vrot.slane %v2134, 4
      %v2138 = vrot.slane %v1592, 7
      %v2139 = vor.u32 %v2138, %v1595
      %v2140 = vsel %vm2030, %v2137, %v2139
      %v2141 = vrot.slane %v2138, 4
      %v2142 = vrot.slane %v1602, 7
      %v2143 = vor.u32 %v2142, %v1605
      %v2144 = vsel %vm2030, %v2141, %v2143
      %v2145 = vrot.slane %v2142, 4
      %v2146 = vrot.slane %v1612, 7
      %v2147 = vor.u32 %v2146, %v1615
      %v2148 = vsel %vm2030, %v2145, %v2147
      %v2149 = vrot.slane %v2146, 4
      %v2150 = vrot.slane %v1622, 7
      %v2151 = vor.u32 %v2150, %v1625
      %v2152 = vsel %vm2030, %v2149, %v2151
      %v2153 = vrot.slane %v2150, 4
      %v2154 = vrot.slane %v1632, 7
      %v2155 = vor.u32 %v2154, %v1635
      %v2156 = vsel %vm2030, %v2153, %v2155
      %v2157 = vrot.slane %v2154, 4
      %v2158 = vrot.slane %v1642, 7
      %v2159 = vor.u32 %v2158, %v1645
      %v2160 = vsel %vm2030, %v2157, %v2159
      %v2161 = vrot.slane %v2158, 4
      %v2162 = vrot.slane %v1652, 7
      %v2163 = vor.u32 %v2162, %v1655
      %v2164 = vsel %vm2030, %v2161, %v2163
      %v2165 = vrot.slane %v2162, 4
      %v2166 = vrot.slane %v1662, 7
      %v2167 = vor.u32 %v2166, %v1665
      %v2168 = vsel %vm2030, %v2165, %v2167
      %v2169 = vrot.slane %v2166, 4
      %v2170 = vrot.slane %v1672, 7
      %v2171 = vor.u32 %v2170, %v1675
      %v2172 = vsel %vm2030, %v2169, %v2171
      %v2173 = vrot.slane %v2170, 4
      %v2174 = vrot.slane %v1682, 7
      %v2175 = vor.u32 %v2174, %v1685
      %v2176 = vsel %vm2030, %v2173, %v2175
      %v2177 = vrot.slane %v2174, 4
      %v2178 = vrot.slane %v1692, 7
      %v2179 = vor.u32 %v2178, %v1695
      %v2180 = vsel %vm2030, %v2177, %v2179
      %v2181 = vrot.slane %v2178, 4
      %v2182 = vrot.slane %v1702, 7
      %v2183 = vor.u32 %v2182, %v1705
      %v2184 = vsel %vm2030, %v2181, %v2183
      %v2185 = vrot.slane %v2182, 4
      %v2186 = vrot.slane %v1712, 7
      %v2187 = vor.u32 %v2186, %v1715
      %v2188 = vsel %vm2030, %v2185, %v2187
      %v2189 = vrot.slane %v2186, 4
      %v2190 = vrot.slane %v1722, 7
      %v2191 = vor.u32 %v2190, %v1725
      %v2192 = vsel %vm2030, %v2189, %v2191
      %vm2234 = vsmask.f32 7938
      %vm2235 = vmand %vm1816, %vm2234
      %v2236 = vld [vmem:[#allocation2 + $0x20] sm:$0xf]
      %v2237 = vsel %vm2235, %v2032, %v2236
      %2238 = vst [vmem:[#allocation2 + $0x20] sm:$0xf] %v2237
      %2239 = vst [vmem:[#allocation2 + $0x2c] sm:$0xf] %v2036
      %2240 = vst [vmem:[#allocation2 + $0x38] sm:$0xf] %v2040
      %2241 = vst [vmem:[#allocation2 + $0x44] sm:$0xf] %v2044
      %2242 = vst [vmem:[#allocation2 + $0x50] sm:$0xf] %v2048
      %2243 = vst [vmem:[#allocation2 + $0x5c] sm:$0xf] %v2052
      %2244 = vst [vmem:[#allocation2 + $0x68] sm:$0xf] %v2056
      %2245 = vst [vmem:[#allocation2 + $0x74] sm:$0xf] %v2060
      %2246 = vst [vmem:[#allocation2 + $0x80] sm:$0xf] %v2064
      %2247 = vst [vmem:[#allocation2 + $0x8c] sm:$0xf] %v2068
      %2248 = vst [vmem:[#allocation2 + $0x98] sm:$0xf] %v2072
      %2249 = vst [vmem:[#allocation2 + $0xa4] sm:$0xf] %v2076
      %2250 = vst [vmem:[#allocation2 + $0xb0] sm:$0xf] %v2080
      %2251 = vst [vmem:[#allocation2 + $0xbc] sm:$0xf] %v2084
      %2252 = vst [vmem:[#allocation2 + $0xc8] sm:$0xf] %v2088
      %2253 = vst [vmem:[#allocation2 + $0xd4] sm:$0xf] %v2092
      %2254 = vst [vmem:[#allocation2 + $0xe0] sm:$0xf] %v2096
      %2255 = vst [vmem:[#allocation2 + $0xec] sm:$0xf] %v2100
      %2256 = vst [vmem:[#allocation2 + $0xf8] sm:$0xf] %v2104
      %2257 = vst [vmem:[#allocation2 + $0x104] sm:$0xf] %v2108
      %2258 = vst [vmem:[#allocation2 + $0x110] sm:$0xf] %v2112
      %2259 = vst [vmem:[#allocation2 + $0x11c] sm:$0xf] %v2116
      %2260 = vst [vmem:[#allocation2 + $0x128] sm:$0xf] %v2120
      %2261 = vst [vmem:[#allocation2 + $0x134] sm:$0xf] %v2124
      %2262 = vst [vmem:[#allocation2 + $0x140] sm:$0xf] %v2128
      %2263 = vst [vmem:[#allocation2 + $0x14c] sm:$0xf] %v2132
      %2264 = vst [vmem:[#allocation2 + $0x158] sm:$0xf] %v2136
      %2265 = vst [vmem:[#allocation2 + $0x164] sm:$0xf] %v2140
      %2266 = vst [vmem:[#allocation2 + $0x170] sm:$0xf] %v2144
      %2267 = vst [vmem:[#allocation2 + $0x17c] sm:$0xf] %v2148
      %2268 = vst [vmem:[#allocation2 + $0x188] sm:$0xf] %v2152
      %2269 = vst [vmem:[#allocation2 + $0x194] sm:$0xf] %v2156
      %2270 = vst [vmem:[#allocation2 + $0x1a0] sm:$0xf] %v2160
      %2271 = vst [vmem:[#allocation2 + $0x1ac] sm:$0xf] %v2164
      %2272 = vst [vmem:[#allocation2 + $0x1b8] sm:$0xf] %v2168
      %2273 = vst [vmem:[#allocation2 + $0x1c4] sm:$0xf] %v2172
      %2274 = vst [vmem:[#allocation2 + $0x1d0] sm:$0xf] %v2176
      %2275 = vst [vmem:[#allocation2 + $0x1dc] sm:$0xf] %v2180
      %2276 = vst [vmem:[#allocation2 + $0x1e8] sm:$0xf] %v2184
      %2277 = vst [vmem:[#allocation2 + $0x1f4] sm:$0xf] %v2188
      %vm2278 = vcmask 1042432
      %vm2279 = vsmask.f32 2304
      %vm2280 = vmand %vm2278, %vm2279
      %v2281 = vld [vmem:[#allocation2 + $0x200] sm:$0x7]
      %v2282 = vsel %vm2280, %v2192, %v2281
      %2283 = vst [vmem:[#allocation2 + $0x200] sm:$0x7] %v2282
      %v2284 = vld [vmem:[#allocation2] sm:$0xff]
      %v2285 = vld [vmem:[#allocation2 + $0x8] sm:$0xf]
      %v2286 = vld [vmem:[#allocation2 + $0xc] sm:$0xff]
      %v2287 = vld [vmem:[#allocation2 + $0x14] sm:$0xf]
      %v2288 = vld [vmem:[#allocation2 + $0x18] sm:$0xff]
      %v2289 = vld [vmem:[#allocation2 + $0x20] sm:$0xf]
      %v2290 = vld [vmem:[#allocation2 + $0x24] sm:$0xff]
      %v2291 = vld [vmem:[#allocation2 + $0x2c] sm:$0xf]
      %v2292 = vld [vmem:[#allocation2 + $0x30] sm:$0xff]
      %v2293 = vld [vmem:[#allocation2 + $0x38] sm:$0xf]
      %v2294 = vld [vmem:[#allocation2 + $0x3c] sm:$0xff]
      %v2295 = vld [vmem:[#allocation2 + $0x44] sm:$0xf]
      %v2296 = vld [vmem:[#allocation2 + $0x48] sm:$0xff]
      %v2297 = vld [vmem:[#allocation2 + $0x50] sm:$0xf]
      %v2298 = vld [vmem:[#allocation2 + $0x54] sm:$0xff]
      %v2299 = vld [vmem:[#allocation2 + $0x5c] sm:$0xf]
      %v2300 = vld [vmem:[#allocation2 + $0x60] sm:$0xff]
      %v2301 = vld [vmem:[#allocation2 + $0x68] sm:$0xf]
      %v2302 = vld [vmem:[#allocation2 + $0x6c] sm:$0xff]
      %v2303 = vld [vmem:[#allocation2 + $0x74] sm:$0xf]
      %v2304 = vld [vmem:[#allocation2 + $0x78] sm:$0xff]
      %v2305 = vld [vmem:[#allocation2 + $0x80] sm:$0xf]
      %v2306 = vld [vmem:[#allocation2 + $0x84] sm:$0xff]
      %v2307 = vld [vmem:[#allocation2 + $0x8c] sm:$0xf]
      %v2308 = vld [vmem:[#allocation2 + $0x90] sm:$0xff]
      %v2309 = vld [vmem:[#allocation2 + $0x98] sm:$0xf]
      %v2310 = vld [vmem:[#allocation2 + $0x9c] sm:$0xff]
      %v2311 = vld [vmem:[#allocation2 + $0xa4] sm:$0xf]
      %v2312 = vld [vmem:[#allocation2 + $0xa8] sm:$0xff]
      %v2313 = vld [vmem:[#allocation2 + $0xb0] sm:$0xf]
      %v2314 = vld [vmem:[#allocation2 + $0xb4] sm:$0xff]
      %v2315 = vld [vmem:[#allocation2 + $0xbc] sm:$0xf]
      %v2316 = vld [vmem:[#allocation2 + $0xc0] sm:$0xff]
      %v2317 = vld [vmem:[#allocation2 + $0xc8] sm:$0xf]
      %v2318 = vld [vmem:[#allocation2 + $0xcc] sm:$0xff]
      %v2319 = vld [vmem:[#allocation2 + $0xd4] sm:$0xf]
      %v2320 = vld [vmem:[#allocation2 + $0xd8] sm:$0xff]
      %v2321 = vld [vmem:[#allocation2 + $0xe0] sm:$0xf]
      %v2322 = vld [vmem:[#allocation2 + $0xe4] sm:$0xff]
      %v2323 = vld [vmem:[#allocation2 + $0xec] sm:$0xf]
      %v2324 = vld [vmem:[#allocation2 + $0xf0] sm:$0xff]
      %v2325 = vld [vmem:[#allocation2 + $0xf8] sm:$0xf]
      %v2326 = vld [vmem:[#allocation2 + $0xfc] sm:$0xff]
      %v2327 = vld [vmem:[#allocation2 + $0x104] sm:$0xf]
      %v2328 = vld [vmem:[#allocation2 + $0x108] sm:$0xff]
      %v2329 = vld [vmem:[#allocation2 + $0x110] sm:$0xf]
      %v2330 = vld [vmem:[#allocation2 + $0x114] sm:$0xff]
      %v2331 = vld [vmem:[#allocation2 + $0x11c] sm:$0xf]
      %v2332 = vld [vmem:[#allocation2 + $0x120] sm:$0xff]
      %v2333 = vld [vmem:[#allocation2 + $0x128] sm:$0xf]
      %v2334 = vld [vmem:[#allocation2 + $0x12c] sm:$0xff]
      %v2335 = vld [vmem:[#allocation2 + $0x134] sm:$0xf]
      %v2336 = vld [vmem:[#allocation2 + $0x138] sm:$0xff]
      %v2337 = vld [vmem:[#allocation2 + $0x140] sm:$0xf]
      %v2338 = vld [vmem:[#allocation2 + $0x144] sm:$0xff]
      %v2339 = vld [vmem:[#allocation2 + $0x14c] sm:$0xf]
      %v2340 = vld [vmem:[#allocation2 + $0x150] sm:$0xff]
      %v2341 = vld [vmem:[#allocation2 + $0x158] sm:$0xf]
      %v2342 = vld [vmem:[#allocation2 + $0x15c] sm:$0xff]
      %v2343 = vld [vmem:[#allocation2 + $0x164] sm:$0xf]
      %v2344 = vld [vmem:[#allocation2 + $0x168] sm:$0xff]
      %v2345 = vld [vmem:[#allocation2 + $0x170] sm:$0xf]
      %v2346 = vld [vmem:[#allocation2 + $0x174] sm:$0xff]
      %v2347 = vld [vmem:[#allocation2 + $0x17c] sm:$0xf]
      %v2348 = vld [vmem:[#allocation2 + $0x180] sm:$0xff]
      %v2349 = vld [vmem:[#allocation2 + $0x188] sm:$0xf]
      %v2350 = vld [vmem:[#allocation2 + $0x18c] sm:$0xff]
      %v2351 = vld [vmem:[#allocation2 + $0x194] sm:$0xf]
      %v2352 = vld [vmem:[#allocation2 + $0x198] sm:$0xff]
      %v2353 = vld [vmem:[#allocation2 + $0x1a0] sm:$0xf]
      %v2354 = vld [vmem:[#allocation2 + $0x1a4] sm:$0xff]
      %v2355 = vld [vmem:[#allocation2 + $0x1ac] sm:$0xf]
      %v2356 = vld [vmem:[#allocation2 + $0x1b0] sm:$0xff]
      %v2357 = vld [vmem:[#allocation2 + $0x1b8] sm:$0xf]
      %v2358 = vld [vmem:[#allocation2 + $0x1bc] sm:$0xff]
      %v2359 = vld [vmem:[#allocation2 + $0x1c4] sm:$0xf]
      %v2360 = vld [vmem:[#allocation2 + $0x1c8] sm:$0xff]
      %v2361 = vld [vmem:[#allocation2 + $0x1d0] sm:$0xf]
      %v2362 = vld [vmem:[#allocation2 + $0x1d4] sm:$0xff]
      %v2363 = vld [vmem:[#allocation2 + $0x1dc] sm:$0xf]
      %v2364 = vld [vmem:[#allocation2 + $0x1e0] sm:$0x33]
      %v2365 = vld [vmem:[#allocation2 + $0x1e8] sm:$0x3]
      %v2366 = vld [vmem:[%s5] sm:$0xf]
      %v2367 = vld [vmem:[%s5 + $0x4] sm:$0xf]
      %v2368 = vld [vmem:[%s5 + $0x8] sm:$0xf]
      %v2369 = vld [vmem:[%s5 + $0xc] sm:$0xf]
      %v2370 = vld [vmem:[%s5 + $0x10] sm:$0xf]
      %v2371 = vld [vmem:[%s5 + $0x14] sm:$0xf]
      %v2372 = vld [vmem:[%s5 + $0x18] sm:$0xf]
      %v2373 = vld [vmem:[%s5 + $0x1c] sm:$0xf]
      %v2374 = vld [vmem:[%s5 + $0x20] sm:$0xf]
      %v2375 = vld [vmem:[%s5 + $0x24] sm:$0xf]
      %v2376 = vld [vmem:[%s5 + $0x28] sm:$0xf]
      %v2377 = vld [vmem:[%s5 + $0x2c] sm:$0xf]
      %v2378 = vld [vmem:[%s5 + $0x30] sm:$0xf]
      %v2379 = vld [vmem:[%s5 + $0x34] sm:$0xf]
      %v2380 = vld [vmem:[%s5 + $0x38] sm:$0xf]
      %v2381 = vld [vmem:[%s5 + $0x3c] sm:$0xf]
      %v2382 = vld [vmem:[%s5 + $0x40] sm:$0xf]
      %v2383 = vld [vmem:[%s5 + $0x44] sm:$0xf]
      %v2384 = vld [vmem:[%s5 + $0x48] sm:$0xf]
      %v2385 = vld [vmem:[%s5 + $0x4c] sm:$0xf]
      %v2386 = vld [vmem:[%s5 + $0x50] sm:$0xf]
      %v2387 = vld [vmem:[%s5 + $0x54] sm:$0xf]
      %v2388 = vld [vmem:[%s5 + $0x58] sm:$0xf]
      %v2389 = vld [vmem:[%s5 + $0x5c] sm:$0xf]
      %v2390 = vld [vmem:[%s5 + $0x60] sm:$0xf]
      %v2391 = vld [vmem:[%s5 + $0x64] sm:$0xf]
      %v2392 = vld [vmem:[%s5 + $0x68] sm:$0xf]
      %v2393 = vld [vmem:[%s5 + $0x6c] sm:$0xf]
      %v2394 = vld [vmem:[%s5 + $0x70] sm:$0xf]
      %v2395 = vld [vmem:[%s5 + $0x74] sm:$0xf]
      %v2396 = vld [vmem:[%s5 + $0x78] sm:$0xf]
      %v2397 = vld [vmem:[%s5 + $0x7c] sm:$0xf]
      %v2398 = vld [vmem:[%s5 + $0x80] sm:$0xf]
      %v2399 = vld [vmem:[%s5 + $0x84] sm:$0xf]
      %v2400 = vld [vmem:[%s5 + $0x88] sm:$0xf]
      %v2401 = vld [vmem:[%s5 + $0x8c] sm:$0xf]
      %v2402 = vld [vmem:[%s5 + $0x90] sm:$0xf]
      %v2403 = vld [vmem:[%s5 + $0x94] sm:$0xf]
      %v2404 = vld [vmem:[%s5 + $0x98] sm:$0xf]
      %v2405 = vld [vmem:[%s5 + $0x9c] sm:$0xf]
      %v2406 = vld [vmem:[%s5 + $0xa0] sm:$0xf]
      %v2407 = vld [vmem:[%s5 + $0xa4] sm:$0xf]
      %v2408 = vld [vmem:[%s5 + $0xa8] sm:$0xf]
      %v2409 = vld [vmem:[%s5 + $0xac] sm:$0xf]
      %v2410 = vld [vmem:[%s5 + $0xb0] sm:$0xf]
      %v2411 = vld [vmem:[%s5 + $0xb4] sm:$0xf]
      %v2412 = vld [vmem:[%s5 + $0xb8] sm:$0xf]
      %v2413 = vld [vmem:[%s5 + $0xbc] sm:$0xf]
      %v2414 = vld [vmem:[#allocation2 + $0x18] sm:$0xee]
      %v2415 = vld [vmem:[#allocation2 + $0x20] sm:$0xe]
      %v2416 = vld [vmem:[#allocation2 + $0x1e0] sm:$0xff]
      %v2417 = vld [vmem:[#allocation2 + $0x1e8] sm:$0xf]
      %v2418 = vld [vmem:[#allocation2 + $0x1ec] sm:$0xff]
      %v2419 = vld [vmem:[#allocation2 + $0x1f4] sm:$0xf]
      %v2420 = vld [vmem:[#allocation2 + $0x1f8] sm:$0x77]
      %v2421 = vld [vmem:[#allocation2 + $0x200] sm:$0x7]
      %s2422 = scalar_lea.vmem %s5, 192
      %v2423 = vld [vmem:[%s2422] sm:$0xf]
      %v2424 = vld [vmem:[%s2422 + $0x4] sm:$0xf]
      %v2425 = vld [vmem:[%s2422 + $0x8] sm:$0xf]
      %v2426 = vld [vmem:[%s2422 + $0xc] sm:$0xf]
      %v2427 = vld [vmem:[%s2422 + $0x10] sm:$0xf]
      %v2428 = vld [vmem:[%s2422 + $0x14] sm:$0xf]
      %v2429 = vld [vmem:[%s2422 + $0x18] sm:$0xf]
      %v2430 = vld [vmem:[%s2422 + $0x1c] sm:$0xf]
      %v2431 = vld [vmem:[%s2422 + $0x20] sm:$0xf]
      %v2432 = vld [vmem:[%s2422 + $0x24] sm:$0xf]
      %v2433 = vld [vmem:[%s2422 + $0x28] sm:$0xf]
      %v2434 = vld [vmem:[%s2422 + $0x2c] sm:$0xf]
      %v2435 = vld [vmem:[%s2422 + $0x30] sm:$0xf]
      %v2436 = vld [vmem:[%s2422 + $0x34] sm:$0xf]
      %v2437 = vld [vmem:[%s2422 + $0x38] sm:$0xf]
      %v2438 = vld [vmem:[%s2422 + $0x3c] sm:$0xf]
      %v2439 = vld [vmem:[%s2422 + $0x40] sm:$0xf]
      %v2440 = vld [vmem:[%s2422 + $0x44] sm:$0xf]
      %v2441 = vld [vmem:[%s2422 + $0x48] sm:$0xf]
      %v2442 = vld [vmem:[%s2422 + $0x4c] sm:$0xf]
      %v2443 = vld [vmem:[%s2422 + $0x50] sm:$0xf]
      %v2444 = vld [vmem:[%s2422 + $0x54] sm:$0xf]
      %v2445 = vld [vmem:[%s2422 + $0x58] sm:$0xf]
      %v2446 = vld [vmem:[%s2422 + $0x5c] sm:$0xf]
      %v2447 = vld [vmem:[%s2422 + $0x60] sm:$0xf]
      %v2448 = vld [vmem:[%s2422 + $0x64] sm:$0xf]
      %v2449 = vld [vmem:[%s2422 + $0x68] sm:$0xf]
      %v2450 = vld [vmem:[%s2422 + $0x6c] sm:$0xf]
      %v2451 = vld [vmem:[%s2422 + $0x70] sm:$0xf]
      %v2452 = vld [vmem:[%s2422 + $0x74] sm:$0xf]
      %v2453 = vld [vmem:[%s2422 + $0x78] sm:$0xf]
      %v2454 = vld [vmem:[%s2422 + $0x7c] sm:$0xf]
      %v2455 = vld [vmem:[%s2422 + $0x80] sm:$0xf]
      %v2456 = vld [vmem:[%s2422 + $0x84] sm:$0xf]
      %v2457 = vld [vmem:[%s2422 + $0x88] sm:$0xf]
      %v2458 = vld [vmem:[%s2422 + $0x8c] sm:$0xf]
      %v2459 = vld [vmem:[%s2422 + $0x90] sm:$0xf]
      %v2460 = vld [vmem:[%s2422 + $0x94] sm:$0xf]
      %v2461 = vld [vmem:[%s2422 + $0x98] sm:$0xf]
      %v2462 = vld [vmem:[%s2422 + $0x9c] sm:$0xf]
      %v2463 = vld [vmem:[%s2422 + $0xa0] sm:$0xf]
      %v2464 = vld [vmem:[%s2422 + $0xa4] sm:$0xf]
      %v2465 = vld [vmem:[%s2422 + $0xa8] sm:$0xf]
      %v2466 = vld [vmem:[%s2422 + $0xac] sm:$0xf]
      %v2467 = vld [vmem:[%s2422 + $0xb0] sm:$0xf]
      %v2468 = vld [vmem:[%s2422 + $0xb4] sm:$0xf]
      %v2469 = vld [vmem:[%s2422 + $0xb8] sm:$0xf]
      %v2470 = vld [vmem:[%s2422 + $0xbc] sm:$0xf]
      %v2553 = vunpack.c.l.b16 %v2414
      %v2554 = vunpack.c.h.b16 %v2414
      %v2555 = vunpack.c.l.b16 %v2415
      %v2556 = vunpack.c.l.b16 %v2290
      %v2557 = vunpack.c.h.b16 %v2290
      %v2558 = vunpack.c.l.b16 %v2291
      %v2559 = vunpack.c.l.b16 %v2292
      %v2560 = vunpack.c.h.b16 %v2292
      %v2561 = vunpack.c.l.b16 %v2293
      %v2562 = vunpack.c.l.b16 %v2294
      %v2563 = vunpack.c.h.b16 %v2294
      %v2564 = vunpack.c.l.b16 %v2295
      %v2565 = vunpack.c.l.b16 %v2296
      %v2566 = vunpack.c.h.b16 %v2296
      %v2567 = vunpack.c.l.b16 %v2297
      %v2568 = vunpack.c.l.b16 %v2298
      %v2569 = vunpack.c.h.b16 %v2298
      %v2570 = vunpack.c.l.b16 %v2299
      %v2571 = vunpack.c.l.b16 %v2300
      %v2572 = vunpack.c.h.b16 %v2300
      %v2573 = vunpack.c.l.b16 %v2301
      %v2574 = vunpack.c.l.b16 %v2302
      %v2575 = vunpack.c.h.b16 %v2302
      %v2576 = vunpack.c.l.b16 %v2303
      %v2577 = vunpack.c.l.b16 %v2304
      %v2578 = vunpack.c.h.b16 %v2304
      %v2579 = vunpack.c.l.b16 %v2305
      %v2580 = vunpack.c.l.b16 %v2306
      %v2581 = vunpack.c.h.b16 %v2306
      %v2582 = vunpack.c.l.b16 %v2307
      %v2583 = vunpack.c.l.b16 %v2308
      %v2584 = vunpack.c.h.b16 %v2308
      %v2585 = vunpack.c.l.b16 %v2309
      %v2586 = vunpack.c.l.b16 %v2310
      %v2587 = vunpack.c.h.b16 %v2310
      %v2588 = vunpack.c.l.b16 %v2311
      %v2589 = vunpack.c.l.b16 %v2312
      %v2590 = vunpack.c.h.b16 %v2312
      %v2591 = vunpack.c.l.b16 %v2313
      %v2592 = vunpack.c.l.b16 %v2314
      %v2593 = vunpack.c.h.b16 %v2314
      %v2594 = vunpack.c.l.b16 %v2315
      %v2595 = vunpack.c.l.b16 %v2316
      %v2596 = vunpack.c.h.b16 %v2316
      %v2597 = vunpack.c.l.b16 %v2317
      %v2598 = vunpack.c.l.b16 %v2318
      %v2599 = vunpack.c.h.b16 %v2318
      %v2600 = vunpack.c.l.b16 %v2319
      %v2601 = vunpack.c.l.b16 %v2320
      %v2602 = vunpack.c.h.b16 %v2320
      %v2603 = vunpack.c.l.b16 %v2321
      %v2604 = vunpack.c.l.b16 %v2322
      %v2605 = vunpack.c.h.b16 %v2322
      %v2606 = vunpack.c.l.b16 %v2323
      %v2607 = vunpack.c.l.b16 %v2324
      %v2608 = vunpack.c.h.b16 %v2324
      %v2609 = vunpack.c.l.b16 %v2325
      %v2610 = vunpack.c.l.b16 %v2326
      %v2611 = vunpack.c.h.b16 %v2326
      %v2612 = vunpack.c.l.b16 %v2327
      %v2613 = vunpack.c.l.b16 %v2328
      %v2614 = vunpack.c.h.b16 %v2328
      %v2615 = vunpack.c.l.b16 %v2329
      %v2616 = vunpack.c.l.b16 %v2330
      %v2617 = vunpack.c.h.b16 %v2330
      %v2618 = vunpack.c.l.b16 %v2331
      %v2619 = vunpack.c.l.b16 %v2332
      %v2620 = vunpack.c.h.b16 %v2332
      %v2621 = vunpack.c.l.b16 %v2333
      %v2622 = vunpack.c.l.b16 %v2334
      %v2623 = vunpack.c.h.b16 %v2334
      %v2624 = vunpack.c.l.b16 %v2335
      %v2625 = vunpack.c.l.b16 %v2336
      %v2626 = vunpack.c.h.b16 %v2336
      %v2627 = vunpack.c.l.b16 %v2337
      %v2628 = vunpack.c.l.b16 %v2338
      %v2629 = vunpack.c.h.b16 %v2338
      %v2630 = vunpack.c.l.b16 %v2339
      %v2631 = vunpack.c.l.b16 %v2340
      %v2632 = vunpack.c.h.b16 %v2340
      %v2633 = vunpack.c.l.b16 %v2341
      %v2634 = vunpack.c.l.b16 %v2342
      %v2635 = vunpack.c.h.b16 %v2342
      %v2636 = vunpack.c.l.b16 %v2343
      %v2637 = vunpack.c.l.b16 %v2344
      %v2638 = vunpack.c.h.b16 %v2344
      %v2639 = vunpack.c.l.b16 %v2345
      %v2640 = vunpack.c.l.b16 %v2346
      %v2641 = vunpack.c.h.b16 %v2346
      %v2642 = vunpack.c.l.b16 %v2347
      %v2643 = vunpack.c.l.b16 %v2348
      %v2644 = vunpack.c.h.b16 %v2348
      %v2645 = vunpack.c.l.b16 %v2349
      %v2646 = vunpack.c.l.b16 %v2350
      %v2647 = vunpack.c.h.b16 %v2350
      %v2648 = vunpack.c.l.b16 %v2351
      %v2649 = vunpack.c.l.b16 %v2352
      %v2650 = vunpack.c.h.b16 %v2352
      %v2651 = vunpack.c.l.b16 %v2353
      %v2652 = vunpack.c.l.b16 %v2354
      %v2653 = vunpack.c.h.b16 %v2354
      %v2654 = vunpack.c.l.b16 %v2355
      %v2655 = vunpack.c.l.b16 %v2356
      %v2656 = vunpack.c.h.b16 %v2356
      %v2657 = vunpack.c.l.b16 %v2357
      %v2658 = vunpack.c.l.b16 %v2358
      %v2659 = vunpack.c.h.b16 %v2358
      %v2660 = vunpack.c.l.b16 %v2359
      %v2661 = vunpack.c.l.b16 %v2360
      %v2662 = vunpack.c.h.b16 %v2360
      %v2663 = vunpack.c.l.b16 %v2361
      %v2664 = vunpack.c.l.b16 %v2362
      %v2665 = vunpack.c.h.b16 %v2362
      %v2666 = vunpack.c.l.b16 %v2363
      %v2667 = vunpack.c.l.b16 %v2416
      %v2668 = vunpack.c.h.b16 %v2416
      %v2669 = vunpack.c.l.b16 %v2417
      %v2670 = vunpack.c.l.b16 %v2418
      %v2671 = vunpack.c.h.b16 %v2418
      %v2672 = vunpack.c.l.b16 %v2419
      %v2673 = vunpack.c.l.b16 %v2420
      %v2674 = vunpack.c.h.b16 %v2420
      %v2675 = vunpack.c.l.b16 %v2421
      %v2676 = vpack.c.b16 %v2556, %v2553
      %v2677 = vpack.c.b16 %v2557, %v2554
      %v2678 = vpack.c.b16 %v2558, %v2555
      %v2679 = vpack.c.b16 %v2562, %v2559
      %v2680 = vpack.c.b16 %v2563, %v2560
      %v2681 = vpack.c.b16 %v2564, %v2561
      %v2682 = vpack.c.b16 %v2568, %v2565
      %v2683 = vpack.c.b16 %v2569, %v2566
      %v2684 = vpack.c.b16 %v2570, %v2567
      %v2685 = vpack.c.b16 %v2574, %v2571
      %v2686 = vpack.c.b16 %v2575, %v2572
      %v2687 = vpack.c.b16 %v2576, %v2573
      %v2688 = vpack.c.b16 %v2580, %v2577
      %v2689 = vpack.c.b16 %v2581, %v2578
      %v2690 = vpack.c.b16 %v2582, %v2579
      %v2691 = vpack.c.b16 %v2586, %v2583
      %v2692 = vpack.c.b16 %v2587, %v2584
      %v2693 = vpack.c.b16 %v2588, %v2585
      %v2694 = vpack.c.b16 %v2592, %v2589
      %v2695 = vpack.c.b16 %v2593, %v2590
      %v2696 = vpack.c.b16 %v2594, %v2591
      %v2697 = vpack.c.b16 %v2598, %v2595
      %v2698 = vpack.c.b16 %v2599, %v2596
      %v2699 = vpack.c.b16 %v2600, %v2597
      %v2700 = vpack.c.b16 %v2604, %v2601
      %v2701 = vpack.c.b16 %v2605, %v2602
      %v2702 = vpack.c.b16 %v2606, %v2603
      %v2703 = vpack.c.b16 %v2610, %v2607
      %v2704 = vpack.c.b16 %v2611, %v2608
      %v2705 = vpack.c.b16 %v2612, %v2609
      %v2706 = vpack.c.b16 %v2616, %v2613
      %v2707 = vpack.c.b16 %v2617, %v2614
      %v2708 = vpack.c.b16 %v2618, %v2615
      %v2709 = vpack.c.b16 %v2622, %v2619
      %v2710 = vpack.c.b16 %v2623, %v2620
      %v2711 = vpack.c.b16 %v2624, %v2621
      %v2712 = vpack.c.b16 %v2628, %v2625
      %v2713 = vpack.c.b16 %v2629, %v2626
      %v2714 = vpack.c.b16 %v2630, %v2627
      %v2715 = vpack.c.b16 %v2634, %v2631
      %v2716 = vpack.c.b16 %v2635, %v2632
      %v2717 = vpack.c.b16 %v2636, %v2633
      %v2718 = vpack.c.b16 %v2640, %v2637
      %v2719 = vpack.c.b16 %v2641, %v2638
      %v2720 = vpack.c.b16 %v2642, %v2639
      %v2721 = vpack.c.b16 %v2646, %v2643
      %v2722 = vpack.c.b16 %v2647, %v2644
      %v2723 = vpack.c.b16 %v2648, %v2645
      %v2724 = vpack.c.b16 %v2652, %v2649
      %v2725 = vpack.c.b16 %v2653, %v2650
      %v2726 = vpack.c.b16 %v2654, %v2651
      %v2727 = vpack.c.b16 %v2658, %v2655
      %v2728 = vpack.c.b16 %v2659, %v2656
      %v2729 = vpack.c.b16 %v2660, %v2657
      %v2730 = vpack.c.b16 %v2664, %v2661
      %v2731 = vpack.c.b16 %v2665, %v2662
      %v2732 = vpack.c.b16 %v2666, %v2663
      %v2733 = vpack.c.b16 %v2670, %v2667
      %v2734 = vpack.c.b16 %v2671, %v2668
      %v2735 = vpack.c.b16 %v2672, %v2669
      %v2736 = vpack.c.b16 %v2673, %v2673
      %v2737 = vpack.c.b16 %v2674, %v2674
      %v2738 = vpack.c.b16 %v2675, %v2675
      %vm2739 = vcmask 1046528
      %v2740 = vrot.slane %v2676, 1
      %v2741 = vrot.slane %v2679, 1
      %v2742 = vsel %vm2739, %v2740, %v2741
      %v2743 = vrot.slane %v2677, 1
      %v2744 = vrot.slane %v2680, 1
      %v2745 = vsel %vm2739, %v2743, %v2744
      %v2746 = vrot.slane %v2678, 1
      %v2747 = vrot.slane %v2681, 1
      %v2748 = vsel %vm2739, %v2746, %v2747
      %v2749 = vrot.slane %v2682, 1
      %v2750 = vsel %vm2739, %v2741, %v2749
      %v2751 = vrot.slane %v2683, 1
      %v2752 = vsel %vm2739, %v2744, %v2751
      %v2753 = vrot.slane %v2684, 1
      %v2754 = vsel %vm2739, %v2747, %v2753
      %v2755 = vrot.slane %v2685, 1
      %v2756 = vsel %vm2739, %v2749, %v2755
      %v2757 = vrot.slane %v2686, 1
      %v2758 = vsel %vm2739, %v2751, %v2757
      %v2759 = vrot.slane %v2687, 1
      %v2760 = vsel %vm2739, %v2753, %v2759
      %v2761 = vrot.slane %v2688, 1
      %v2762 = vsel %vm2739, %v2755, %v2761
      %v2763 = vrot.slane %v2689, 1
      %v2764 = vsel %vm2739, %v2757, %v2763
      %v2765 = vrot.slane %v2690, 1
      %v2766 = vsel %vm2739, %v2759, %v2765
      %v2767 = vrot.slane %v2691, 1
      %v2768 = vsel %vm2739, %v2761, %v2767
      %v2769 = vrot.slane %v2692, 1
      %v2770 = vsel %vm2739, %v2763, %v2769
      %v2771 = vrot.slane %v2693, 1
      %v2772 = vsel %vm2739, %v2765, %v2771
      %v2773 = vrot.slane %v2694, 1
      %v2774 = vsel %vm2739, %v2767, %v2773
      %v2775 = vrot.slane %v2695, 1
      %v2776 = vsel %vm2739, %v2769, %v2775
      %v2777 = vrot.slane %v2696, 1
      %v2778 = vsel %vm2739, %v2771, %v2777
      %v2779 = vrot.slane %v2697, 1
      %v2780 = vsel %vm2739, %v2773, %v2779
      %v2781 = vrot.slane %v2698, 1
      %v2782 = vsel %vm2739, %v2775, %v2781
      %v2783 = vrot.slane %v2699, 1
      %v2784 = vsel %vm2739, %v2777, %v2783
      %v2785 = vrot.slane %v2700, 1
      %v2786 = vsel %vm2739, %v2779, %v2785
      %v2787 = vrot.slane %v2701, 1
      %v2788 = vsel %vm2739, %v2781, %v2787
      %v2789 = vrot.slane %v2702, 1
      %v2790 = vsel %vm2739, %v2783, %v2789
      %v2791 = vrot.slane %v2703, 1
      %v2792 = vsel %vm2739, %v2785, %v2791
      %v2793 = vrot.slane %v2704, 1
      %v2794 = vsel %vm2739, %v2787, %v2793
      %v2795 = vrot.slane %v2705, 1
      %v2796 = vsel %vm2739, %v2789, %v2795
      %v2797 = vrot.slane %v2706, 1
      %v2798 = vsel %vm2739, %v2791, %v2797
      %v2799 = vrot.slane %v2707, 1
      %v2800 = vsel %vm2739, %v2793, %v2799
      %v2801 = vrot.slane %v2708, 1
      %v2802 = vsel %vm2739, %v2795, %v2801
      %v2803 = vrot.slane %v2709, 1
      %v2804 = vsel %vm2739, %v2797, %v2803
      %v2805 = vrot.slane %v2710, 1
      %v2806 = vsel %vm2739, %v2799, %v2805
      %v2807 = vrot.slane %v2711, 1
      %v2808 = vsel %vm2739, %v2801, %v2807
      %v2809 = vrot.slane %v2712, 1
      %v2810 = vsel %vm2739, %v2803, %v2809
      %v2811 = vrot.slane %v2713, 1
      %v2812 = vsel %vm2739, %v2805, %v2811
      %v2813 = vrot.slane %v2714, 1
      %v2814 = vsel %vm2739, %v2807, %v2813
      %v2815 = vrot.slane %v2715, 1
      %v2816 = vsel %vm2739, %v2809, %v2815
      %v2817 = vrot.slane %v2716, 1
      %v2818 = vsel %vm2739, %v2811, %v2817
      %v2819 = vrot.slane %v2717, 1
      %v2820 = vsel %vm2739, %v2813, %v2819
      %v2821 = vrot.slane %v2718, 1
      %v2822 = vsel %vm2739, %v2815, %v2821
      %v2823 = vrot.slane %v2719, 1
      %v2824 = vsel %vm2739, %v2817, %v2823
      %v2825 = vrot.slane %v2720, 1
      %v2826 = vsel %vm2739, %v2819, %v2825
      %v2827 = vrot.slane %v2721, 1
      %v2828 = vsel %vm2739, %v2821, %v2827
      %v2829 = vrot.slane %v2722, 1
      %v2830 = vsel %vm2739, %v2823, %v2829
      %v2831 = vrot.slane %v2723, 1
      %v2832 = vsel %vm2739, %v2825, %v2831
      %v2833 = vrot.slane %v2724, 1
      %v2834 = vsel %vm2739, %v2827, %v2833
      %v2835 = vrot.slane %v2725, 1
      %v2836 = vsel %vm2739, %v2829, %v2835
      %v2837 = vrot.slane %v2726, 1
      %v2838 = vsel %vm2739, %v2831, %v2837
      %v2839 = vrot.slane %v2727, 1
      %v2840 = vsel %vm2739, %v2833, %v2839
      %v2841 = vrot.slane %v2728, 1
      %v2842 = vsel %vm2739, %v2835, %v2841
      %v2843 = vrot.slane %v2729, 1
      %v2844 = vsel %vm2739, %v2837, %v2843
      %v2845 = vrot.slane %v2730, 1
      %v2846 = vsel %vm2739, %v2839, %v2845
      %v2847 = vrot.slane %v2731, 1
      %v2848 = vsel %vm2739, %v2841, %v2847
      %v2849 = vrot.slane %v2732, 1
      %v2850 = vsel %vm2739, %v2843, %v2849
      %v2851 = vrot.slane %v2733, 1
      %v2852 = vsel %vm2739, %v2845, %v2851
      %v2853 = vrot.slane %v2734, 1
      %v2854 = vsel %vm2739, %v2847, %v2853
      %v2855 = vrot.slane %v2735, 1
      %v2856 = vsel %vm2739, %v2849, %v2855
      %v2857 = vrot.slane %v2736, 1
      %v2858 = vsel %vm2739, %v2851, %v2857
      %v2859 = vrot.slane %v2737, 1
      %v2860 = vsel %vm2739, %v2853, %v2859
      %v2861 = vrot.slane %v2738, 1
      %v2862 = vsel %vm2739, %v2855, %v2861
      %v2974 = vunpack.c.l.b16 %v2423
      %v2975 = vunpack.c.l.b16 %v2424
      %v2976 = vunpack.c.l.b16 %v2425
      %v2977 = vunpack.c.l.b16 %v2426
      %v2978 = vunpack.c.l.b16 %v2427
      %v2979 = vunpack.c.l.b16 %v2428
      %v2980 = vunpack.c.l.b16 %v2429
      %v2981 = vunpack.c.l.b16 %v2430
      %v2982 = vunpack.c.l.b16 %v2431
      %v2983 = vunpack.c.l.b16 %v2432
      %v2984 = vunpack.c.l.b16 %v2433
      %v2985 = vunpack.c.l.b16 %v2434
      %v2986 = vunpack.c.l.b16 %v2435
      %v2987 = vunpack.c.l.b16 %v2436
      %v2988 = vunpack.c.l.b16 %v2437
      %v2989 = vunpack.c.l.b16 %v2438
      %v2990 = vunpack.c.l.b16 %v2439
      %v2991 = vunpack.c.l.b16 %v2440
      %v2992 = vunpack.c.l.b16 %v2441
      %v2993 = vunpack.c.l.b16 %v2442
      %v2994 = vunpack.c.l.b16 %v2443
      %v2995 = vunpack.c.l.b16 %v2444
      %v2996 = vunpack.c.l.b16 %v2445
      %v2997 = vunpack.c.l.b16 %v2446
      %v2998 = vunpack.c.l.b16 %v2447
      %v2999 = vunpack.c.l.b16 %v2448
      %v3000 = vunpack.c.l.b16 %v2449
      %v3001 = vunpack.c.l.b16 %v2450
      %v3002 = vunpack.c.l.b16 %v2451
      %v3003 = vunpack.c.l.b16 %v2452
      %v3004 = vunpack.c.l.b16 %v2453
      %v3005 = vunpack.c.l.b16 %v2454
      %v3006 = vunpack.c.l.b16 %v2455
      %v3007 = vunpack.c.l.b16 %v2456
      %v3008 = vunpack.c.l.b16 %v2457
      %v3009 = vunpack.c.l.b16 %v2458
      %v3010 = vunpack.c.l.b16 %v2459
      %v3011 = vunpack.c.l.b16 %v2460
      %v3012 = vunpack.c.l.b16 %v2461
      %v3013 = vunpack.c.l.b16 %v2462
      %v3014 = vunpack.c.l.b16 %v2463
      %v3015 = vunpack.c.l.b16 %v2464
      %v3016 = vunpack.c.l.b16 %v2465
      %v3017 = vunpack.c.l.b16 %v2466
      %v3018 = vunpack.c.l.b16 %v2467
      %v3019 = vunpack.c.l.b16 %v2468
      %v3020 = vunpack.c.l.b16 %v2469
      %v3021 = vunpack.c.l.b16 %v2470
      %v3022 = vpack.c.b16 %v2975, %v2974
      %v3023 = vpack.c.b16 %v2977, %v2976
      %v3024 = vpack.c.b16 %v2979, %v2978
      %v3025 = vpack.c.b16 %v2981, %v2980
      %v3026 = vpack.c.b16 %v2983, %v2982
      %v3027 = vpack.c.b16 %v2985, %v2984
      %v3028 = vpack.c.b16 %v2987, %v2986
      %v3029 = vpack.c.b16 %v2989, %v2988
      %v3030 = vpack.c.b16 %v2991, %v2990
      %v3031 = vpack.c.b16 %v2993, %v2992
      %v3032 = vpack.c.b16 %v2995, %v2994
      %v3033 = vpack.c.b16 %v2997, %v2996
      %v3034 = vpack.c.b16 %v2999, %v2998
      %v3035 = vpack.c.b16 %v3001, %v3000
      %v3036 = vpack.c.b16 %v3003, %v3002
      %v3037 = vpack.c.b16 %v3005, %v3004
      %v3038 = vpack.c.b16 %v3007, %v3006
      %v3039 = vpack.c.b16 %v3009, %v3008
      %v3040 = vpack.c.b16 %v3011, %v3010
      %v3041 = vpack.c.b16 %v3013, %v3012
      %v3042 = vpack.c.b16 %v3015, %v3014
      %v3043 = vpack.c.b16 %v3017, %v3016
      %v3044 = vpack.c.b16 %v3019, %v3018
      %v3045 = vpack.c.b16 %v3021, %v3020
      %3070 = vmatprep.subr.bf16.mxu0 0
      %3071 = vmatpush1.bf16.msra.mxu0 %v3022
      %3072 = vmatprep.subr.bf16.mxu0 0
      %3073 = vmatpush1.bf16.msra.mxu0 %v3023
      %3074 = vmatprep.subr.bf16.mxu0 0
      %3075 = vmatpush1.bf16.msra.mxu0 %v3024
      %3076 = vmatprep.subr.bf16.mxu0 0
      %3077 = vmatpush1.bf16.msra.mxu0 %v3025
      %3078 = vmatprep.subr.bf16.mxu0 0
      %3079 = vmatpush1.bf16.msra.mxu0 %v3026
      %3080 = vmatprep.subr.bf16.mxu0 0
      %3081 = vmatpush1.bf16.msra.mxu0 %v3027
      %3082 = vmatprep.subr.bf16.mxu0 0
      %3083 = vmatpush1.bf16.msra.mxu0 %v3028
      %3084 = vmatprep.subr.bf16.mxu0 0
      %3085 = vmatpush1.bf16.msra.mxu0 %v3029
      %3086 = vmatprep.subr.bf16.mxu0 0
      %3087 = vmatpush1.bf16.msra.mxu0 %v3030
      %3088 = vmatprep.subr.bf16.mxu0 0
      %3089 = vmatpush1.bf16.msra.mxu0 %v3031
      %3090 = vmatprep.subr.bf16.mxu0 0
      %3091 = vmatpush1.bf16.msra.mxu0 %v3032
      %3092 = vmatprep.subr.bf16.mxu0 0
      %3093 = vmatpush1.bf16.msra.mxu0 %v3033
      %3094 = vmatprep.subr.bf16.mxu0 0
      %3095 = vmatpush1.bf16.msra.mxu0 %v3034
      %3096 = vmatprep.subr.bf16.mxu0 0
      %3097 = vmatpush1.bf16.msra.mxu0 %v3035
      %3098 = vmatprep.subr.bf16.mxu0 0
      %3099 = vmatpush1.bf16.msra.mxu0 %v3036
      %3100 = vmatprep.subr.bf16.mxu0 0
      %3101 = vmatpush1.bf16.msra.mxu0 %v3037
      %3102 = vmatprep.mubr.bf16.mxu0 %v2745
      %3103 = vmatmul.mubr.bf16.gmra.mrb[0].mxu0 %v2742
      %v3104 = vpop.f32.mrb[0].mxu0
      %v3105 = vadd.f32 0.0, %v3104
      %v3106 = vpop.f32.mrb[0].mxu0
      %v3107 = vpop.f32.mrb[0].mxu0
      %v3108 = vadd.f32 0.0, %v3107
      %v3109 = vpop.f32.mrb[0].mxu0
      %3110 = vmatprep.mubr.bf16.mxu0 %v2752
      %3111 = vmatmul.mubr.bf16.gmra.mrb[0].mxu0 %v2750
      %v3112 = vpop.f32.mrb[0].mxu0
      %v3113 = vadd.f32 0.0, %v3112
      %v3114 = vpop.f32.mrb[0].mxu0
      %v3115 = vpop.f32.mrb[0].mxu0
      %v3116 = vadd.f32 0.0, %v3115
      %v3117 = vpop.f32.mrb[0].mxu0
      %3118 = vmatprep.mubr.bf16.mxu0 %v2758
      %3119 = vmatmul.mubr.bf16.gmra.mrb[0].mxu0 %v2756
      %v3120 = vpop.f32.mrb[0].mxu0
      %v3121 = vadd.f32 0.0, %v3120
      %v3122 = vpop.f32.mrb[0].mxu0
      %v3123 = vpop.f32.mrb[0].mxu0
      %v3124 = vadd.f32 0.0, %v3123
      %v3125 = vpop.f32.mrb[0].mxu0
      %3126 = vmatprep.mubr.bf16.mxu0 %v2764
      %3127 = vmatmul.mubr.bf16.gmra.mrb[0].mxu0 %v2762
      %v3128 = vpop.f32.mrb[0].mxu0
      %v3129 = vadd.f32 0.0, %v3128
      %v3130 = vpop.f32.mrb[0].mxu0
      %v3131 = vpop.f32.mrb[0].mxu0
      %v3132 = vadd.f32 0.0, %v3131
      %v3133 = vpop.f32.mrb[0].mxu0
      %3134 = vmatprep.mubr.bf16.mxu0 %v2770
      %3135 = vmatmul.mubr.bf16.gmra.mrb[0].mxu0 %v2768
      %v3136 = vpop.f32.mrb[0].mxu0
      %v3137 = vadd.f32 0.0, %v3136
      %v3138 = vpop.f32.mrb[0].mxu0
      %v3139 = vpop.f32.mrb[0].mxu0
      %v3140 = vadd.f32 0.0, %v3139
      %v3141 = vpop.f32.mrb[0].mxu0
      %3142 = vmatprep.mubr.bf16.mxu0 %v2776
      %3143 = vmatmul.mubr.bf16.gmra.mrb[0].mxu0 %v2774
      %v3144 = vpop.f32.mrb[0].mxu0
      %v3145 = vadd.f32 0.0, %v3144
      %v3146 = vpop.f32.mrb[0].mxu0
      %v3147 = vpop.f32.mrb[0].mxu0
      %v3148 = vadd.f32 0.0, %v3147
      %v3149 = vpop.f32.mrb[0].mxu0
      %3150 = vmatprep.mubr.bf16.mxu0 %v2782
      %3151 = vmatmul.mubr.bf16.gmra.mrb[0].mxu0 %v2780
      %v3152 = vpop.f32.mrb[0].mxu0
      %v3153 = vadd.f32 0.0, %v3152
      %v3154 = vpop.f32.mrb[0].mxu0
      %v3155 = vpop.f32.mrb[0].mxu0
      %v3156 = vadd.f32 0.0, %v3155
      %v3157 = vpop.f32.mrb[0].mxu0
      %3158 = vmatprep.mubr.bf16.mxu0 %v2788
      %3159 = vmatmul.mubr.bf16.gmra.mrb[0].mxu0 %v2786
      %v3160 = vpop.f32.mrb[0].mxu0
      %v3161 = vadd.f32 0.0, %v3160
      %v3162 = vpop.f32.mrb[0].mxu0
      %v3163 = vpop.f32.mrb[0].mxu0
      %v3164 = vadd.f32 0.0, %v3163
      %v3165 = vpop.f32.mrb[0].mxu0
      %3166 = vmatprep.mubr.bf16.mxu0 %v2794
      %3167 = vmatmul.mubr.bf16.gmra.mrb[0].mxu0 %v2792
      %v3168 = vpop.f32.mrb[0].mxu0
      %v3169 = vadd.f32 0.0, %v3168
      %v3170 = vpop.f32.mrb[0].mxu0
      %v3171 = vpop.f32.mrb[0].mxu0
      %v3172 = vadd.f32 0.0, %v3171
      %v3173 = vpop.f32.mrb[0].mxu0
      %3174 = vmatprep.mubr.bf16.mxu0 %v2800
      %3175 = vmatmul.mubr.bf16.gmra.mrb[0].mxu0 %v2798
      %v3176 = vpop.f32.mrb[0].mxu0
      %v3177 = vadd.f32 0.0, %v3176
      %v3178 = vpop.f32.mrb[0].mxu0
      %v3179 = vpop.f32.mrb[0].mxu0
      %v3180 = vadd.f32 0.0, %v3179
      %v3181 = vpop.f32.mrb[0].mxu0
      %3182 = vmatprep.mubr.bf16.mxu0 %v2806
      %3183 = vmatmul.mubr.bf16.gmra.mrb[0].mxu0 %v2804
      %v3184 = vpop.f32.mrb[0].mxu0
      %v3185 = vadd.f32 0.0, %v3184
      %v3186 = vpop.f32.mrb[0].mxu0
      %v3187 = vpop.f32.mrb[0].mxu0
      %v3188 = vadd.f32 0.0, %v3187
      %v3189 = vpop.f32.mrb[0].mxu0
      %3190 = vmatprep.mubr.bf16.mxu0 %v2812
      %3191 = vmatmul.mubr.bf16.gmra.mrb[0].mxu0 %v2810
      %v3192 = vpop.f32.mrb[0].mxu0
      %v3193 = vadd.f32 0.0, %v3192
      %v3194 = vpop.f32.mrb[0].mxu0
      %v3195 = vpop.f32.mrb[0].mxu0
      %v3196 = vadd.f32 0.0, %v3195
      %v3197 = vpop.f32.mrb[0].mxu0
      %3198 = vmatprep.mubr.bf16.mxu0 %v2818
      %3199 = vmatmul.mubr.bf16.gmra.mrb[0].mxu0 %v2816
      %v3200 = vpop.f32.mrb[0].mxu0
      %v3201 = vadd.f32 0.0, %v3200
      %v3202 = vpop.f32.mrb[0].mxu0
      %v3203 = vpop.f32.mrb[0].mxu0
      %v3204 = vadd.f32 0.0, %v3203
      %v3205 = vpop.f32.mrb[0].mxu0
      %3206 = vmatprep.mubr.bf16.mxu0 %v2824
      %3207 = vmatmul.mubr.bf16.gmra.mrb[0].mxu0 %v2822
      %v3208 = vpop.f32.mrb[0].mxu0
      %v3209 = vadd.f32 0.0, %v3208
      %v3210 = vpop.f32.mrb[0].mxu0
      %v3211 = vpop.f32.mrb[0].mxu0
      %v3212 = vadd.f32 0.0, %v3211
      %v3213 = vpop.f32.mrb[0].mxu0
      %3214 = vmatprep.mubr.bf16.mxu0 %v2830
      %3215 = vmatmul.mubr.bf16.gmra.mrb[0].mxu0 %v2828
      %v3216 = vpop.f32.mrb[0].mxu0
      %v3217 = vadd.f32 0.0, %v3216
      %v3218 = vpop.f32.mrb[0].mxu0
      %v3219 = vpop.f32.mrb[0].mxu0
      %v3220 = vadd.f32 0.0, %v3219
      %v3221 = vpop.f32.mrb[0].mxu0
      %3222 = vmatprep.mubr.bf16.mxu0 %v2836
      %3223 = vmatmul.mubr.bf16.gmra.mrb[0].mxu0 %v2834
      %v3224 = vpop.f32.mrb[0].mxu0
      %v3225 = vadd.f32 0.0, %v3224
      %v3226 = vpop.f32.mrb[0].mxu0
      %v3227 = vpop.f32.mrb[0].mxu0
      %v3228 = vadd.f32 0.0, %v3227
      %v3229 = vpop.f32.mrb[0].mxu0
      %3230 = vmatprep.mubr.bf16.mxu0 %v2842
      %3231 = vmatmul.mubr.bf16.gmra.mrb[0].mxu0 %v2840
      %v3232 = vpop.f32.mrb[0].mxu0
      %v3233 = vadd.f32 0.0, %v3232
      %v3234 = vpop.f32.mrb[0].mxu0
      %v3235 = vpop.f32.mrb[0].mxu0
      %v3236 = vadd.f32 0.0, %v3235
      %v3237 = vpop.f32.mrb[0].mxu0
      %3238 = vmatprep.mubr.bf16.mxu0 %v2848
      %3239 = vmatmul.mubr.bf16.gmra.mrb[0].mxu0 %v2846
      %v3240 = vpop.f32.mrb[0].mxu0
      %v3241 = vadd.f32 0.0, %v3240
      %v3242 = vpop.f32.mrb[0].mxu0
      %v3243 = vpop.f32.mrb[0].mxu0
      %v3244 = vadd.f32 0.0, %v3243
      %v3245 = vpop.f32.mrb[0].mxu0
      %3246 = vmatprep.mubr.bf16.mxu0 %v2854
      %3247 = vmatmul.mubr.bf16.gmra.mrb[0].mxu0 %v2852
      %v3248 = vpop.f32.mrb[0].mxu0
      %v3249 = vadd.f32 0.0, %v3248
      %v3250 = vpop.f32.mrb[0].mxu0
      %v3251 = vpop.f32.mrb[0].mxu0
      %v3252 = vadd.f32 0.0, %v3251
      %v3253 = vpop.f32.mrb[0].mxu0
      %3254 = vmatprep.mubr.bf16.mxu0 %v2860
      %3255 = vmatmul.mubr.bf16.gmra.mrb[0].mxu0 %v2858
      %v3256 = vpop.f32.mrb[0].mxu0
      %v3257 = vadd.f32 0.0, %v3256
      %v3258 = vpop.f32.mrb[0].mxu0
      %v3259 = vpop.f32.mrb[0].mxu0
      %v3260 = vadd.f32 0.0, %v3259
      %v3261 = vpop.f32.mrb[0].mxu0
      %3262 = vmatprep.mubr.bf16.mxu0 %v2859
      %3263 = vmatmul.mubr.bf16.gmra.mrb[0].mxu0 %v2857
      %v3264 = vpop.f32.mrb[0].mxu0
      %v3265 = vadd.f32 0.0, %v3264
      %v3266 = vpop.f32.mrb[0].mxu0
      %v3267 = vpop.f32.mrb[0].mxu0
      %v3268 = vpop.f32.mrb[0].mxu0
      %3269 = vdwg.mxu0
      %3270 = vmatprep.subr.bf16.mxu0 0
      %3271 = vmatpush1.bf16.msra.mxu0 %v3038
      %3272 = vmatprep.subr.bf16.mxu0 0
      %3273 = vmatpush1.bf16.msra.mxu0 %v3039
      %3274 = vmatprep.subr.bf16.mxu0 0
      %3275 = vmatpush1.bf16.msra.mxu0 %v3040
      %3276 = vmatprep.subr.bf16.mxu0 0
      %3277 = vmatpush1.bf16.msra.mxu0 %v3041
      %3278 = vmatprep.subr.bf16.mxu0 0
      %3279 = vmatpush1.bf16.msra.mxu0 %v3042
      %3280 = vmatprep.subr.bf16.mxu0 0
      %3281 = vmatpush1.bf16.msra.mxu0 %v3043
      %3282 = vmatprep.subr.bf16.mxu0 0
      %3283 = vmatpush1.bf16.msra.mxu0 %v3044
      %3284 = vmatprep.subr.bf16.mxu0 0
      %3285 = vmatpush1.bf16.msra.mxu0 %v3045
      %3286 = vmatprep.subr.bf16.mxu0 0
      %3287 = vmatpush1.bf16.msra.mxu0 0
      %3288 = vmatprep.subr.bf16.mxu0 0
      %3289 = vmatpush1.bf16.msra.mxu0 0
      %3290 = vmatprep.subr.bf16.mxu0 0
      %3291 = vmatpush1.bf16.msra.mxu0 0
      %3292 = vmatprep.subr.bf16.mxu0 0
      %3293 = vmatpush1.bf16.msra.mxu0 0
      %3294 = vmatprep.subr.bf16.mxu0 0
      %3295 = vmatpush1.bf16.msra.mxu0 0
      %3296 = vmatprep.subr.bf16.mxu0 0
      %3297 = vmatpush1.bf16.msra.mxu0 0
      %3298 = vmatprep.subr.bf16.mxu0 0
      %3299 = vmatpush1.bf16.msra.mxu0 0
      %3300 = vmatprep.subr.bf16.mxu0 0
      %3301 = vmatpush1.bf16.msra.mxu0 0
      %3302 = vmatprep.mubr.bf16.mxu0 0
      %3303 = vmatmul.mubr.bf16.gmra.mrb[0].mxu0 %v2748
      %v3304 = vpop.f32.mrb[0].mxu0
      %v3305 = vadd.f32 %v3105, %v3304
      %v3306 = vpop.f32.mrb[0].mxu0
      %v3307 = vpop.f32.mrb[0].mxu0
      %v3308 = vadd.f32 %v3108, %v3307
      %v3309 = vpop.f32.mrb[0].mxu0
      %3310 = vmatprep.mubr.bf16.mxu0 0
      %3311 = vmatmul.mubr.bf16.gmra.mrb[0].mxu0 %v2754
      %v3312 = vpop.f32.mrb[0].mxu0
      %v3313 = vadd.f32 %v3113, %v3312
      %v3314 = vpop.f32.mrb[0].mxu0
      %v3315 = vpop.f32.mrb[0].mxu0
      %v3316 = vadd.f32 %v3116, %v3315
      %v3317 = vpop.f32.mrb[0].mxu0
      %3318 = vmatprep.mubr.bf16.mxu0 0
      %3319 = vmatmul.mubr.bf16.gmra.mrb[0].mxu0 %v2760
      %v3320 = vpop.f32.mrb[0].mxu0
      %v3321 = vadd.f32 %v3121, %v3320
      %v3322 = vpop.f32.mrb[0].mxu0
      %v3323 = vpop.f32.mrb[0].mxu0
      %v3324 = vadd.f32 %v3124, %v3323
      %v3325 = vpop.f32.mrb[0].mxu0
      %3326 = vmatprep.mubr.bf16.mxu0 0
      %3327 = vmatmul.mubr.bf16.gmra.mrb[0].mxu0 %v2766
      %v3328 = vpop.f32.mrb[0].mxu0
      %v3329 = vadd.f32 %v3129, %v3328
      %v3330 = vpop.f32.mrb[0].mxu0
      %v3331 = vpop.f32.mrb[0].mxu0
      %v3332 = vadd.f32 %v3132, %v3331
      %v3333 = vpop.f32.mrb[0].mxu0
      %3334 = vmatprep.mubr.bf16.mxu0 0
      %3335 = vmatmul.mubr.bf16.gmra.mrb[0].mxu0 %v2772
      %v3336 = vpop.f32.mrb[0].mxu0
      %v3337 = vadd.f32 %v3137, %v3336
      %v3338 = vpop.f32.mrb[0].mxu0
      %v3339 = vpop.f32.mrb[0].mxu0
      %v3340 = vadd.f32 %v3140, %v3339
      %v3341 = vpop.f32.mrb[0].mxu0
      %3342 = vmatprep.mubr.bf16.mxu0 0
      %3343 = vmatmul.mubr.bf16.gmra.mrb[0].mxu0 %v2778
      %v3344 = vpop.f32.mrb[0].mxu0
      %v3345 = vadd.f32 %v3145, %v3344
      %v3346 = vpop.f32.mrb[0].mxu0
      %v3347 = vpop.f32.mrb[0].mxu0
      %v3348 = vadd.f32 %v3148, %v3347
      %v3349 = vpop.f32.mrb[0].mxu0
      %3350 = vmatprep.mubr.bf16.mxu0 0
      %3351 = vmatmul.mubr.bf16.gmra.mrb[0].mxu0 %v2784
      %v3352 = vpop.f32.mrb[0].mxu0
      %v3353 = vadd.f32 %v3153, %v3352
      %v3354 = vpop.f32.mrb[0].mxu0
      %v3355 = vpop.f32.mrb[0].mxu0
      %v3356 = vadd.f32 %v3156, %v3355
      %v3357 = vpop.f32.mrb[0].mxu0
      %3358 = vmatprep.mubr.bf16.mxu0 0
      %3359 = vmatmul.mubr.bf16.gmra.mrb[0].mxu0 %v2790
      %v3360 = vpop.f32.mrb[0].mxu0
      %v3361 = vadd.f32 %v3161, %v3360
      %v3362 = vpop.f32.mrb[0].mxu0
      %v3363 = vpop.f32.mrb[0].mxu0
      %v3364 = vadd.f32 %v3164, %v3363
      %v3365 = vpop.f32.mrb[0].mxu0
      %3366 = vmatprep.mubr.bf16.mxu0 0
      %3367 = vmatmul.mubr.bf16.gmra.mrb[0].mxu0 %v2796
      %v3368 = vpop.f32.mrb[0].mxu0
      %v3369 = vadd.f32 %v3169, %v3368
      %v3370 = vpop.f32.mrb[0].mxu0
      %v3371 = vpop.f32.mrb[0].mxu0
      %v3372 = vadd.f32 %v3172, %v3371
      %v3373 = vpop.f32.mrb[0].mxu0
      %3374 = vmatprep.mubr.bf16.mxu0 0
      %3375 = vmatmul.mubr.bf16.gmra.mrb[0].mxu0 %v2802
      %v3376 = vpop.f32.mrb[0].mxu0
      %v3377 = vadd.f32 %v3177, %v3376
      %v3378 = vpop.f32.mrb[0].mxu0
      %v3379 = vpop.f32.mrb[0].mxu0
      %v3380 = vadd.f32 %v3180, %v3379
      %v3381 = vpop.f32.mrb[0].mxu0
      %3382 = vmatprep.mubr.bf16.mxu0 0
      %3383 = vmatmul.mubr.bf16.gmra.mrb[0].mxu0 %v2808
      %v3384 = vpop.f32.mrb[0].mxu0
      %v3385 = vadd.f32 %v3185, %v3384
      %v3386 = vpop.f32.mrb[0].mxu0
      %v3387 = vpop.f32.mrb[0].mxu0
      %v3388 = vadd.f32 %v3188, %v3387
      %v3389 = vpop.f32.mrb[0].mxu0
      %3390 = vmatprep.mubr.bf16.mxu0 0
      %3391 = vmatmul.mubr.bf16.gmra.mrb[0].mxu0 %v2814
      %v3392 = vpop.f32.mrb[0].mxu0
      %v3393 = vadd.f32 %v3193, %v3392
      %v3394 = vpop.f32.mrb[0].mxu0
      %v3395 = vpop.f32.mrb[0].mxu0
      %v3396 = vadd.f32 %v3196, %v3395
      %v3397 = vpop.f32.mrb[0].mxu0
      %3398 = vmatprep.mubr.bf16.mxu0 0
      %3399 = vmatmul.mubr.bf16.gmra.mrb[0].mxu0 %v2820
      %v3400 = vpop.f32.mrb[0].mxu0
      %v3401 = vadd.f32 %v3201, %v3400
      %v3402 = vpop.f32.mrb[0].mxu0
      %v3403 = vpop.f32.mrb[0].mxu0
      %v3404 = vadd.f32 %v3204, %v3403
      %v3405 = vpop.f32.mrb[0].mxu0
      %3406 = vmatprep.mubr.bf16.mxu0 0
      %3407 = vmatmul.mubr.bf16.gmra.mrb[0].mxu0 %v2826
      %v3408 = vpop.f32.mrb[0].mxu0
      %v3409 = vadd.f32 %v3209, %v3408
      %v3410 = vpop.f32.mrb[0].mxu0
      %v3411 = vpop.f32.mrb[0].mxu0
      %v3412 = vadd.f32 %v3212, %v3411
      %v3413 = vpop.f32.mrb[0].mxu0
      %3414 = vmatprep.mubr.bf16.mxu0 0
      %3415 = vmatmul.mubr.bf16.gmra.mrb[0].mxu0 %v2832
      %v3416 = vpop.f32.mrb[0].mxu0
      %v3417 = vadd.f32 %v3217, %v3416
      %v3418 = vpop.f32.mrb[0].mxu0
      %v3419 = vpop.f32.mrb[0].mxu0
      %v3420 = vadd.f32 %v3220, %v3419
      %v3421 = vpop.f32.mrb[0].mxu0
      %3422 = vmatprep.mubr.bf16.mxu0 0
      %3423 = vmatmul.mubr.bf16.gmra.mrb[0].mxu0 %v2838
      %v3424 = vpop.f32.mrb[0].mxu0
      %v3425 = vadd.f32 %v3225, %v3424
      %v3426 = vpop.f32.mrb[0].mxu0
      %v3427 = vpop.f32.mrb[0].mxu0
      %v3428 = vadd.f32 %v3228, %v3427
      %v3429 = vpop.f32.mrb[0].mxu0
      %3430 = vmatprep.mubr.bf16.mxu0 0
      %3431 = vmatmul.mubr.bf16.gmra.mrb[0].mxu0 %v2844
      %v3432 = vpop.f32.mrb[0].mxu0
      %v3433 = vadd.f32 %v3233, %v3432
      %v3434 = vpop.f32.mrb[0].mxu0
      %v3435 = vpop.f32.mrb[0].mxu0
      %v3436 = vadd.f32 %v3236, %v3435
      %v3437 = vpop.f32.mrb[0].mxu0
      %3438 = vmatprep.mubr.bf16.mxu0 0
      %3439 = vmatmul.mubr.bf16.gmra.mrb[0].mxu0 %v2850
      %v3440 = vpop.f32.mrb[0].mxu0
      %v3441 = vadd.f32 %v3241, %v3440
      %v3442 = vpop.f32.mrb[0].mxu0
      %v3443 = vpop.f32.mrb[0].mxu0
      %v3444 = vadd.f32 %v3244, %v3443
      %v3445 = vpop.f32.mrb[0].mxu0
      %3446 = vmatprep.mubr.bf16.mxu0 0
      %3447 = vmatmul.mubr.bf16.gmra.mrb[0].mxu0 %v2856
      %v3448 = vpop.f32.mrb[0].mxu0
      %v3449 = vadd.f32 %v3249, %v3448
      %v3450 = vpop.f32.mrb[0].mxu0
      %v3451 = vpop.f32.mrb[0].mxu0
      %v3452 = vadd.f32 %v3252, %v3451
      %v3453 = vpop.f32.mrb[0].mxu0
      %3454 = vmatprep.mubr.bf16.mxu0 0
      %3455 = vmatmul.mubr.bf16.gmra.mrb[0].mxu0 %v2862
      %v3456 = vpop.f32.mrb[0].mxu0
      %v3457 = vadd.f32 %v3257, %v3456
      %v3458 = vpop.f32.mrb[0].mxu0
      %v3459 = vpop.f32.mrb[0].mxu0
      %v3460 = vadd.f32 %v3260, %v3459
      %v3461 = vpop.f32.mrb[0].mxu0
      %3462 = vmatprep.mubr.bf16.mxu0 0
      %3463 = vmatmul.mubr.bf16.gmra.mrb[0].mxu0 %v2861
      %v3464 = vpop.f32.mrb[0].mxu0
      %v3465 = vadd.f32 %v3265, %v3464
      %v3466 = vpop.f32.mrb[0].mxu0
      %v3467 = vpop.f32.mrb[0].mxu0
      %v3468 = vpop.f32.mrb[0].mxu0
      %3469 = vdwg.mxu0
      %v3478 = vunpack.c.l.b16 %v2284
      %v3479 = vunpack.c.h.b16 %v2284
      %v3480 = vunpack.c.l.b16 %v2285
      %v3481 = vunpack.c.l.b16 %v2286
      %v3482 = vunpack.c.h.b16 %v2286
      %v3483 = vunpack.c.l.b16 %v2287
      %v3484 = vunpack.c.l.b16 %v2288
      %v3485 = vunpack.c.h.b16 %v2288
      %v3486 = vunpack.c.l.b16 %v2289
      %v3487 = vunpack.c.l.b16 %v2364
      %v3488 = vunpack.c.h.b16 %v2364
      %v3489 = vunpack.c.l.b16 %v2365
      %v3490 = vpack.c.b16 %v3481, %v3478
      %v3491 = vpack.c.b16 %v3482, %v3479
      %v3492 = vpack.c.b16 %v3483, %v3480
      %v3493 = vpack.c.b16 %v2556, %v3484
      %v3494 = vpack.c.b16 %v2557, %v3485
      %v3495 = vpack.c.b16 %v2558, %v3486
      %v3496 = vpack.c.b16 %v3487, %v3487
      %v3497 = vpack.c.b16 %v3488, %v3488
      %v3498 = vpack.c.b16 %v3489, %v3489
      %v3610 = vunpack.c.l.b16 %v2366
      %v3611 = vunpack.c.l.b16 %v2367
      %v3612 = vunpack.c.l.b16 %v2368
      %v3613 = vunpack.c.l.b16 %v2369
      %v3614 = vunpack.c.l.b16 %v2370
      %v3615 = vunpack.c.l.b16 %v2371
      %v3616 = vunpack.c.l.b16 %v2372
      %v3617 = vunpack.c.l.b16 %v2373
      %v3618 = vunpack.c.l.b16 %v2374
      %v3619 = vunpack.c.l.b16 %v2375
      %v3620 = vunpack.c.l.b16 %v2376
      %v3621 = vunpack.c.l.b16 %v2377
      %v3622 = vunpack.c.l.b16 %v2378
      %v3623 = vunpack.c.l.b16 %v2379
      %v3624 = vunpack.c.l.b16 %v2380
      %v3625 = vunpack.c.l.b16 %v2381
      %v3626 = vunpack.c.l.b16 %v2382
      %v3627 = vunpack.c.l.b16 %v2383
      %v3628 = vunpack.c.l.b16 %v2384
      %v3629 = vunpack.c.l.b16 %v2385
      %v3630 = vunpack.c.l.b16 %v2386
      %v3631 = vunpack.c.l.b16 %v2387
      %v3632 = vunpack.c.l.b16 %v2388
      %v3633 = vunpack.c.l.b16 %v2389
      %v3634 = vunpack.c.l.b16 %v2390
      %v3635 = vunpack.c.l.b16 %v2391
      %v3636 = vunpack.c.l.b16 %v2392
      %v3637 = vunpack.c.l.b16 %v2393
      %v3638 = vunpack.c.l.b16 %v2394
      %v3639 = vunpack.c.l.b16 %v2395
      %v3640 = vunpack.c.l.b16 %v2396
      %v3641 = vunpack.c.l.b16 %v2397
      %v3642 = vunpack.c.l.b16 %v2398
      %v3643 = vunpack.c.l.b16 %v2399
      %v3644 = vunpack.c.l.b16 %v2400
      %v3645 = vunpack.c.l.b16 %v2401
      %v3646 = vunpack.c.l.b16 %v2402
      %v3647 = vunpack.c.l.b16 %v2403
      %v3648 = vunpack.c.l.b16 %v2404
      %v3649 = vunpack.c.l.b16 %v2405
      %v3650 = vunpack.c.l.b16 %v2406
      %v3651 = vunpack.c.l.b16 %v2407
      %v3652 = vunpack.c.l.b16 %v2408
      %v3653 = vunpack.c.l.b16 %v2409
      %v3654 = vunpack.c.l.b16 %v2410
      %v3655 = vunpack.c.l.b16 %v2411
      %v3656 = vunpack.c.l.b16 %v2412
      %v3657 = vunpack.c.l.b16 %v2413
      %v3658 = vpack.c.b16 %v3611, %v3610
      %v3659 = vpack.c.b16 %v3613, %v3612
      %v3660 = vpack.c.b16 %v3615, %v3614
      %v3661 = vpack.c.b16 %v3617, %v3616
      %v3662 = vpack.c.b16 %v3619, %v3618
      %v3663 = vpack.c.b16 %v3621, %v3620
      %v3664 = vpack.c.b16 %v3623, %v3622
      %v3665 = vpack.c.b16 %v3625, %v3624
      %v3666 = vpack.c.b16 %v3627, %v3626
      %v3667 = vpack.c.b16 %v3629, %v3628
      %v3668 = vpack.c.b16 %v3631, %v3630
      %v3669 = vpack.c.b16 %v3633, %v3632
      %v3670 = vpack.c.b16 %v3635, %v3634
      %v3671 = vpack.c.b16 %v3637, %v3636
      %v3672 = vpack.c.b16 %v3639, %v3638
      %v3673 = vpack.c.b16 %v3641, %v3640
      %v3674 = vpack.c.b16 %v3643, %v3642
      %v3675 = vpack.c.b16 %v3645, %v3644
      %v3676 = vpack.c.b16 %v3647, %v3646
      %v3677 = vpack.c.b16 %v3649, %v3648
      %v3678 = vpack.c.b16 %v3651, %v3650
      %v3679 = vpack.c.b16 %v3653, %v3652
      %v3680 = vpack.c.b16 %v3655, %v3654
      %v3681 = vpack.c.b16 %v3657, %v3656
      %3706 = vmatprep.subr.bf16.mxu0 0
      %3707 = vmatpush1.bf16.msra.mxu0 %v3658
      %3708 = vmatprep.subr.bf16.mxu0 0
      %3709 = vmatpush1.bf16.msra.mxu0 %v3659
      %3710 = vmatprep.subr.bf16.mxu0 0
      %3711 = vmatpush1.bf16.msra.mxu0 %v3660
      %3712 = vmatprep.subr.bf16.mxu0 0
      %3713 = vmatpush1.bf16.msra.mxu0 %v3661
      %3714 = vmatprep.subr.bf16.mxu0 0
      %3715 = vmatpush1.bf16.msra.mxu0 %v3662
      %3716 = vmatprep.subr.bf16.mxu0 0
      %3717 = vmatpush1.bf16.msra.mxu0 %v3663
      %3718 = vmatprep.subr.bf16.mxu0 0
      %3719 = vmatpush1.bf16.msra.mxu0 %v3664
      %3720 = vmatprep.subr.bf16.mxu0 0
      %3721 = vmatpush1.bf16.msra.mxu0 %v3665
      %3722 = vmatprep.subr.bf16.mxu0 0
      %3723 = vmatpush1.bf16.msra.mxu0 %v3666
      %3724 = vmatprep.subr.bf16.mxu0 0
      %3725 = vmatpush1.bf16.msra.mxu0 %v3667
      %3726 = vmatprep.subr.bf16.mxu0 0
      %3727 = vmatpush1.bf16.msra.mxu0 %v3668
      %3728 = vmatprep.subr.bf16.mxu0 0
      %3729 = vmatpush1.bf16.msra.mxu0 %v3669
      %3730 = vmatprep.subr.bf16.mxu0 0
      %3731 = vmatpush1.bf16.msra.mxu0 %v3670
      %3732 = vmatprep.subr.bf16.mxu0 0
      %3733 = vmatpush1.bf16.msra.mxu0 %v3671
      %3734 = vmatprep.subr.bf16.mxu0 0
      %3735 = vmatpush1.bf16.msra.mxu0 %v3672
      %3736 = vmatprep.subr.bf16.mxu0 0
      %3737 = vmatpush1.bf16.msra.mxu0 %v3673
      %3738 = vmatprep.mubr.bf16.mxu0 %v3491
      %3739 = vmatmul.mubr.bf16.gmra.mrb[0].mxu0 %v3490
      %v3740 = vpop.f32.mrb[0].mxu0
      %v3741 = vadd.f32 %v3305, %v3740
      %v3742 = vpop.f32.mrb[0].mxu0
      %v3743 = vpop.f32.mrb[0].mxu0
      %v3744 = vadd.f32 %v3308, %v3743
      %v3745 = vpop.f32.mrb[0].mxu0
      %3746 = vmatprep.mubr.bf16.mxu0 %v3494
      %3747 = vmatmul.mubr.bf16.gmra.mrb[0].mxu0 %v3493
      %v3748 = vpop.f32.mrb[0].mxu0
      %v3749 = vadd.f32 %v3313, %v3748
      %v3750 = vpop.f32.mrb[0].mxu0
      %v3751 = vpop.f32.mrb[0].mxu0
      %v3752 = vadd.f32 %v3316, %v3751
      %v3753 = vpop.f32.mrb[0].mxu0
      %3754 = vmatprep.mubr.bf16.mxu0 %v2680
      %3755 = vmatmul.mubr.bf16.gmra.mrb[0].mxu0 %v2679
      %v3756 = vpop.f32.mrb[0].mxu0
      %v3757 = vadd.f32 %v3321, %v3756
      %v3758 = vpop.f32.mrb[0].mxu0
      %v3759 = vpop.f32.mrb[0].mxu0
      %v3760 = vadd.f32 %v3324, %v3759
      %v3761 = vpop.f32.mrb[0].mxu0
      %3762 = vmatprep.mubr.bf16.mxu0 %v2683
      %3763 = vmatmul.mubr.bf16.gmra.mrb[0].mxu0 %v2682
      %v3764 = vpop.f32.mrb[0].mxu0
      %v3765 = vadd.f32 %v3329, %v3764
      %v3766 = vpop.f32.mrb[0].mxu0
      %v3767 = vpop.f32.mrb[0].mxu0
      %v3768 = vadd.f32 %v3332, %v3767
      %v3769 = vpop.f32.mrb[0].mxu0
      %3770 = vmatprep.mubr.bf16.mxu0 %v2686
      %3771 = vmatmul.mubr.bf16.gmra.mrb[0].mxu0 %v2685
      %v3772 = vpop.f32.mrb[0].mxu0
      %v3773 = vadd.f32 %v3337, %v3772
      %v3774 = vpop.f32.mrb[0].mxu0
      %v3775 = vpop.f32.mrb[0].mxu0
      %v3776 = vadd.f32 %v3340, %v3775
      %v3777 = vpop.f32.mrb[0].mxu0
      %3778 = vmatprep.mubr.bf16.mxu0 %v2689
      %3779 = vmatmul.mubr.bf16.gmra.mrb[0].mxu0 %v2688
      %v3780 = vpop.f32.mrb[0].mxu0
      %v3781 = vadd.f32 %v3345, %v3780
      %v3782 = vpop.f32.mrb[0].mxu0
      %v3783 = vpop.f32.mrb[0].mxu0
      %v3784 = vadd.f32 %v3348, %v3783
      %v3785 = vpop.f32.mrb[0].mxu0
      %3786 = vmatprep.mubr.bf16.mxu0 %v2692
      %3787 = vmatmul.mubr.bf16.gmra.mrb[0].mxu0 %v2691
      %v3788 = vpop.f32.mrb[0].mxu0
      %v3789 = vadd.f32 %v3353, %v3788
      %v3790 = vpop.f32.mrb[0].mxu0
      %v3791 = vpop.f32.mrb[0].mxu0
      %v3792 = vadd.f32 %v3356, %v3791
      %v3793 = vpop.f32.mrb[0].mxu0
      %3794 = vmatprep.mubr.bf16.mxu0 %v2695
      %3795 = vmatmul.mubr.bf16.gmra.mrb[0].mxu0 %v2694
      %v3796 = vpop.f32.mrb[0].mxu0
      %v3797 = vadd.f32 %v3361, %v3796
      %v3798 = vpop.f32.mrb[0].mxu0
      %v3799 = vpop.f32.mrb[0].mxu0
      %v3800 = vadd.f32 %v3364, %v3799
      %v3801 = vpop.f32.mrb[0].mxu0
      %3802 = vmatprep.mubr.bf16.mxu0 %v2698
      %3803 = vmatmul.mubr.bf16.gmra.mrb[0].mxu0 %v2697
      %v3804 = vpop.f32.mrb[0].mxu0
      %v3805 = vadd.f32 %v3369, %v3804
      %v3806 = vpop.f32.mrb[0].mxu0
      %v3807 = vpop.f32.mrb[0].mxu0
      %v3808 = vadd.f32 %v3372, %v3807
      %v3809 = vpop.f32.mrb[0].mxu0
      %3810 = vmatprep.mubr.bf16.mxu0 %v2701
      %3811 = vmatmul.mubr.bf16.gmra.mrb[0].mxu0 %v2700
      %v3812 = vpop.f32.mrb[0].mxu0
      %v3813 = vadd.f32 %v3377, %v3812
      %v3814 = vpop.f32.mrb[0].mxu0
      %v3815 = vpop.f32.mrb[0].mxu0
      %v3816 = vadd.f32 %v3380, %v3815
      %v3817 = vpop.f32.mrb[0].mxu0
      %3818 = vmatprep.mubr.bf16.mxu0 %v2704
      %3819 = vmatmul.mubr.bf16.gmra.mrb[0].mxu0 %v2703
      %v3820 = vpop.f32.mrb[0].mxu0
      %v3821 = vadd.f32 %v3385, %v3820
      %v3822 = vpop.f32.mrb[0].mxu0
      %v3823 = vpop.f32.mrb[0].mxu0
      %v3824 = vadd.f32 %v3388, %v3823
      %v3825 = vpop.f32.mrb[0].mxu0
      %3826 = vmatprep.mubr.bf16.mxu0 %v2707
      %3827 = vmatmul.mubr.bf16.gmra.mrb[0].mxu0 %v2706
      %v3828 = vpop.f32.mrb[0].mxu0
      %v3829 = vadd.f32 %v3393, %v3828
      %v3830 = vpop.f32.mrb[0].mxu0
      %v3831 = vpop.f32.mrb[0].mxu0
      %v3832 = vadd.f32 %v3396, %v3831
      %v3833 = vpop.f32.mrb[0].mxu0
      %3834 = vmatprep.mubr.bf16.mxu0 %v2710
      %3835 = vmatmul.mubr.bf16.gmra.mrb[0].mxu0 %v2709
      %v3836 = vpop.f32.mrb[0].mxu0
      %v3837 = vadd.f32 %v3401, %v3836
      %v3838 = vpop.f32.mrb[0].mxu0
      %v3839 = vpop.f32.mrb[0].mxu0
      %v3840 = vadd.f32 %v3404, %v3839
      %v3841 = vpop.f32.mrb[0].mxu0
      %3842 = vmatprep.mubr.bf16.mxu0 %v2713
      %3843 = vmatmul.mubr.bf16.gmra.mrb[0].mxu0 %v2712
      %v3844 = vpop.f32.mrb[0].mxu0
      %v3845 = vadd.f32 %v3409, %v3844
      %v3846 = vpop.f32.mrb[0].mxu0
      %v3847 = vpop.f32.mrb[0].mxu0
      %v3848 = vadd.f32 %v3412, %v3847
      %v3849 = vpop.f32.mrb[0].mxu0
      %3850 = vmatprep.mubr.bf16.mxu0 %v2716
      %3851 = vmatmul.mubr.bf16.gmra.mrb[0].mxu0 %v2715
      %v3852 = vpop.f32.mrb[0].mxu0
      %v3853 = vadd.f32 %v3417, %v3852
      %v3854 = vpop.f32.mrb[0].mxu0
      %v3855 = vpop.f32.mrb[0].mxu0
      %v3856 = vadd.f32 %v3420, %v3855
      %v3857 = vpop.f32.mrb[0].mxu0
      %3858 = vmatprep.mubr.bf16.mxu0 %v2719
      %3859 = vmatmul.mubr.bf16.gmra.mrb[0].mxu0 %v2718
      %v3860 = vpop.f32.mrb[0].mxu0
      %v3861 = vadd.f32 %v3425, %v3860
      %v3862 = vpop.f32.mrb[0].mxu0
      %v3863 = vpop.f32.mrb[0].mxu0
      %v3864 = vadd.f32 %v3428, %v3863
      %v3865 = vpop.f32.mrb[0].mxu0
      %3866 = vmatprep.mubr.bf16.mxu0 %v2722
      %3867 = vmatmul.mubr.bf16.gmra.mrb[0].mxu0 %v2721
      %v3868 = vpop.f32.mrb[0].mxu0
      %v3869 = vadd.f32 %v3433, %v3868
      %v3870 = vpop.f32.mrb[0].mxu0
      %v3871 = vpop.f32.mrb[0].mxu0
      %v3872 = vadd.f32 %v3436, %v3871
      %v3873 = vpop.f32.mrb[0].mxu0
      %3874 = vmatprep.mubr.bf16.mxu0 %v2725
      %3875 = vmatmul.mubr.bf16.gmra.mrb[0].mxu0 %v2724
      %v3876 = vpop.f32.mrb[0].mxu0
      %v3877 = vadd.f32 %v3441, %v3876
      %v3878 = vpop.f32.mrb[0].mxu0
      %v3879 = vpop.f32.mrb[0].mxu0
      %v3880 = vadd.f32 %v3444, %v3879
      %v3881 = vpop.f32.mrb[0].mxu0
      %3882 = vmatprep.mubr.bf16.mxu0 %v2728
      %3883 = vmatmul.mubr.bf16.gmra.mrb[0].mxu0 %v2727
      %v3884 = vpop.f32.mrb[0].mxu0
      %v3885 = vadd.f32 %v3449, %v3884
      %v3886 = vpop.f32.mrb[0].mxu0
      %v3887 = vpop.f32.mrb[0].mxu0
      %v3888 = vadd.f32 %v3452, %v3887
      %v3889 = vpop.f32.mrb[0].mxu0
      %3890 = vmatprep.mubr.bf16.mxu0 %v2731
      %3891 = vmatmul.mubr.bf16.gmra.mrb[0].mxu0 %v2730
      %v3892 = vpop.f32.mrb[0].mxu0
      %v3893 = vadd.f32 %v3457, %v3892
      %v3894 = vpop.f32.mrb[0].mxu0
      %v3895 = vpop.f32.mrb[0].mxu0
      %v3896 = vadd.f32 %v3460, %v3895
      %v3897 = vpop.f32.mrb[0].mxu0
      %3898 = vmatprep.mubr.bf16.mxu0 %v3497
      %3899 = vmatmul.mubr.bf16.gmra.mrb[0].mxu0 %v3496
      %v3900 = vpop.f32.mrb[0].mxu0
      %v3901 = vadd.f32 %v3465, %v3900
      %v3902 = vpop.f32.mrb[0].mxu0
      %v3903 = vpop.f32.mrb[0].mxu0
      %v3904 = vpop.f32.mrb[0].mxu0
      %3905 = vdwg.mxu0
      %3906 = vmatprep.subr.bf16.mxu0 0
      %3907 = vmatpush1.bf16.msra.mxu0 %v3674
      %3908 = vmatprep.subr.bf16.mxu0 0
      %3909 = vmatpush1.bf16.msra.mxu0 %v3675
      %3910 = vmatprep.subr.bf16.mxu0 0
      %3911 = vmatpush1.bf16.msra.mxu0 %v3676
      %3912 = vmatprep.subr.bf16.mxu0 0
      %3913 = vmatpush1.bf16.msra.mxu0 %v3677
      %3914 = vmatprep.subr.bf16.mxu0 0
      %3915 = vmatpush1.bf16.msra.mxu0 %v3678
      %3916 = vmatprep.subr.bf16.mxu0 0
      %3917 = vmatpush1.bf16.msra.mxu0 %v3679
      %3918 = vmatprep.subr.bf16.mxu0 0
      %3919 = vmatpush1.bf16.msra.mxu0 %v3680
      %3920 = vmatprep.subr.bf16.mxu0 0
      %3921 = vmatpush1.bf16.msra.mxu0 %v3681
      %3922 = vmatprep.subr.bf16.mxu0 0
      %3923 = vmatpush1.bf16.msra.mxu0 0
      %3924 = vmatprep.subr.bf16.mxu0 0
      %3925 = vmatpush1.bf16.msra.mxu0 0
      %3926 = vmatprep.subr.bf16.mxu0 0
      %3927 = vmatpush1.bf16.msra.mxu0 0
      %3928 = vmatprep.subr.bf16.mxu0 0
      %3929 = vmatpush1.bf16.msra.mxu0 0
      %3930 = vmatprep.subr.bf16.mxu0 0
      %3931 = vmatpush1.bf16.msra.mxu0 0
      %3932 = vmatprep.subr.bf16.mxu0 0
      %3933 = vmatpush1.bf16.msra.mxu0 0
      %3934 = vmatprep.subr.bf16.mxu0 0
      %3935 = vmatpush1.bf16.msra.mxu0 0
      %3936 = vmatprep.subr.bf16.mxu0 0
      %3937 = vmatpush1.bf16.msra.mxu0 0
      %3938 = vmatprep.mubr.bf16.mxu0 0
      %3939 = vmatmul.mubr.bf16.gmra.mrb[0].mxu0 %v3492
      %v3940 = vpop.f32.mrb[0].mxu0
      %v3941 = vadd.f32 %v3741, %v3940
      %v3942 = vpop.f32.mrb[0].mxu0
      %v3943 = vpop.f32.mrb[0].mxu0
      %v3944 = vadd.f32 %v3744, %v3943
      %v3945 = vpop.f32.mrb[0].mxu0
      %3946 = vmatprep.mubr.bf16.mxu0 0
      %3947 = vmatmul.mubr.bf16.gmra.mrb[0].mxu0 %v3495
      %v3948 = vpop.f32.mrb[0].mxu0
      %v3949 = vadd.f32 %v3749, %v3948
      %v3950 = vpop.f32.mrb[0].mxu0
      %v3951 = vpop.f32.mrb[0].mxu0
      %v3952 = vadd.f32 %v3752, %v3951
      %v3953 = vpop.f32.mrb[0].mxu0
      %3954 = vmatprep.mubr.bf16.mxu0 0
      %3955 = vmatmul.mubr.bf16.gmra.mrb[0].mxu0 %v2681
      %v3956 = vpop.f32.mrb[0].mxu0
      %v3957 = vadd.f32 %v3757, %v3956
      %v3958 = vpop.f32.mrb[0].mxu0
      %v3959 = vpop.f32.mrb[0].mxu0
      %v3960 = vadd.f32 %v3760, %v3959
      %v3961 = vpop.f32.mrb[0].mxu0
      %3962 = vmatprep.mubr.bf16.mxu0 0
      %3963 = vmatmul.mubr.bf16.gmra.mrb[0].mxu0 %v2684
      %v3964 = vpop.f32.mrb[0].mxu0
      %v3965 = vadd.f32 %v3765, %v3964
      %v3966 = vpop.f32.mrb[0].mxu0
      %v3967 = vpop.f32.mrb[0].mxu0
      %v3968 = vadd.f32 %v3768, %v3967
      %v3969 = vpop.f32.mrb[0].mxu0
      %3970 = vmatprep.mubr.bf16.mxu0 0
      %3971 = vmatmul.mubr.bf16.gmra.mrb[0].mxu0 %v2687
      %v3972 = vpop.f32.mrb[0].mxu0
      %v3973 = vadd.f32 %v3773, %v3972
      %v3974 = vpop.f32.mrb[0].mxu0
      %v3975 = vpop.f32.mrb[0].mxu0
      %v3976 = vadd.f32 %v3776, %v3975
      %v3977 = vpop.f32.mrb[0].mxu0
      %3978 = vmatprep.mubr.bf16.mxu0 0
      %3979 = vmatmul.mubr.bf16.gmra.mrb[0].mxu0 %v2690
      %v3980 = vpop.f32.mrb[0].mxu0
      %v3981 = vadd.f32 %v3781, %v3980
      %v3982 = vpop.f32.mrb[0].mxu0
      %v3983 = vpop.f32.mrb[0].mxu0
      %v3984 = vadd.f32 %v3784, %v3983
      %v3985 = vpop.f32.mrb[0].mxu0
      %3986 = vmatprep.mubr.bf16.mxu0 0
      %3987 = vmatmul.mubr.bf16.gmra.mrb[0].mxu0 %v2693
      %v3988 = vpop.f32.mrb[0].mxu0
      %v3989 = vadd.f32 %v3789, %v3988
      %v3990 = vpop.f32.mrb[0].mxu0
      %v3991 = vpop.f32.mrb[0].mxu0
      %v3992 = vadd.f32 %v3792, %v3991
      %v3993 = vpop.f32.mrb[0].mxu0
      %3994 = vmatprep.mubr.bf16.mxu0 0
      %3995 = vmatmul.mubr.bf16.gmra.mrb[0].mxu0 %v2696
      %v3996 = vpop.f32.mrb[0].mxu0
      %v3997 = vadd.f32 %v3797, %v3996
      %v3998 = vpop.f32.mrb[0].mxu0
      %v3999 = vpop.f32.mrb[0].mxu0
      %v4000 = vadd.f32 %v3800, %v3999
      %v4001 = vpop.f32.mrb[0].mxu0
      %4002 = vmatprep.mubr.bf16.mxu0 0
      %4003 = vmatmul.mubr.bf16.gmra.mrb[0].mxu0 %v2699
      %v4004 = vpop.f32.mrb[0].mxu0
      %v4005 = vadd.f32 %v3805, %v4004
      %v4006 = vpop.f32.mrb[0].mxu0
      %v4007 = vpop.f32.mrb[0].mxu0
      %v4008 = vadd.f32 %v3808, %v4007
      %v4009 = vpop.f32.mrb[0].mxu0
      %4010 = vmatprep.mubr.bf16.mxu0 0
      %4011 = vmatmul.mubr.bf16.gmra.mrb[0].mxu0 %v2702
      %v4012 = vpop.f32.mrb[0].mxu0
      %v4013 = vadd.f32 %v3813, %v4012
      %v4014 = vpop.f32.mrb[0].mxu0
      %v4015 = vpop.f32.mrb[0].mxu0
      %v4016 = vadd.f32 %v3816, %v4015
      %v4017 = vpop.f32.mrb[0].mxu0
      %4018 = vmatprep.mubr.bf16.mxu0 0
      %4019 = vmatmul.mubr.bf16.gmra.mrb[0].mxu0 %v2705
      %v4020 = vpop.f32.mrb[0].mxu0
      %v4021 = vadd.f32 %v3821, %v4020
      %v4022 = vpop.f32.mrb[0].mxu0
      %v4023 = vpop.f32.mrb[0].mxu0
      %v4024 = vadd.f32 %v3824, %v4023
      %v4025 = vpop.f32.mrb[0].mxu0
      %4026 = vmatprep.mubr.bf16.mxu0 0
      %4027 = vmatmul.mubr.bf16.gmra.mrb[0].mxu0 %v2708
      %v4028 = vpop.f32.mrb[0].mxu0
      %v4029 = vadd.f32 %v3829, %v4028
      %v4030 = vpop.f32.mrb[0].mxu0
      %v4031 = vpop.f32.mrb[0].mxu0
      %v4032 = vadd.f32 %v3832, %v4031
      %v4033 = vpop.f32.mrb[0].mxu0
      %4034 = vmatprep.mubr.bf16.mxu0 0
      %4035 = vmatmul.mubr.bf16.gmra.mrb[0].mxu0 %v2711
      %v4036 = vpop.f32.mrb[0].mxu0
      %v4037 = vadd.f32 %v3837, %v4036
      %v4038 = vpop.f32.mrb[0].mxu0
      %v4039 = vpop.f32.mrb[0].mxu0
      %v4040 = vadd.f32 %v3840, %v4039
      %v4041 = vpop.f32.mrb[0].mxu0
      %4042 = vmatprep.mubr.bf16.mxu0 0
      %4043 = vmatmul.mubr.bf16.gmra.mrb[0].mxu0 %v2714
      %v4044 = vpop.f32.mrb[0].mxu0
      %v4045 = vadd.f32 %v3845, %v4044
      %v4046 = vpop.f32.mrb[0].mxu0
      %v4047 = vpop.f32.mrb[0].mxu0
      %v4048 = vadd.f32 %v3848, %v4047
      %v4049 = vpop.f32.mrb[0].mxu0
      %4050 = vmatprep.mubr.bf16.mxu0 0
      %4051 = vmatmul.mubr.bf16.gmra.mrb[0].mxu0 %v2717
      %v4052 = vpop.f32.mrb[0].mxu0
      %v4053 = vadd.f32 %v3853, %v4052
      %v4054 = vpop.f32.mrb[0].mxu0
      %v4055 = vpop.f32.mrb[0].mxu0
      %v4056 = vadd.f32 %v3856, %v4055
      %v4057 = vpop.f32.mrb[0].mxu0
      %4058 = vmatprep.mubr.bf16.mxu0 0
      %4059 = vmatmul.mubr.bf16.gmra.mrb[0].mxu0 %v2720
      %v4060 = vpop.f32.mrb[0].mxu0
      %v4061 = vadd.f32 %v3861, %v4060
      %v4062 = vpop.f32.mrb[0].mxu0
      %v4063 = vpop.f32.mrb[0].mxu0
      %v4064 = vadd.f32 %v3864, %v4063
      %v4065 = vpop.f32.mrb[0].mxu0
      %4066 = vmatprep.mubr.bf16.mxu0 0
      %4067 = vmatmul.mubr.bf16.gmra.mrb[0].mxu0 %v2723
      %v4068 = vpop.f32.mrb[0].mxu0
      %v4069 = vadd.f32 %v3869, %v4068
      %v4070 = vpop.f32.mrb[0].mxu0
      %v4071 = vpop.f32.mrb[0].mxu0
      %v4072 = vadd.f32 %v3872, %v4071
      %v4073 = vpop.f32.mrb[0].mxu0
      %4074 = vmatprep.mubr.bf16.mxu0 0
      %4075 = vmatmul.mubr.bf16.gmra.mrb[0].mxu0 %v2726
      %v4076 = vpop.f32.mrb[0].mxu0
      %v4077 = vadd.f32 %v3877, %v4076
      %v4078 = vpop.f32.mrb[0].mxu0
      %v4079 = vpop.f32.mrb[0].mxu0
      %v4080 = vadd.f32 %v3880, %v4079
      %v4081 = vpop.f32.mrb[0].mxu0
      %4082 = vmatprep.mubr.bf16.mxu0 0
      %4083 = vmatmul.mubr.bf16.gmra.mrb[0].mxu0 %v2729
      %v4084 = vpop.f32.mrb[0].mxu0
      %v4085 = vadd.f32 %v3885, %v4084
      %v4086 = vpop.f32.mrb[0].mxu0
      %v4087 = vpop.f32.mrb[0].mxu0
      %v4088 = vadd.f32 %v3888, %v4087
      %v4089 = vpop.f32.mrb[0].mxu0
      %4090 = vmatprep.mubr.bf16.mxu0 0
      %4091 = vmatmul.mubr.bf16.gmra.mrb[0].mxu0 %v2732
      %v4092 = vpop.f32.mrb[0].mxu0
      %v4093 = vadd.f32 %v3893, %v4092
      %v4094 = vpop.f32.mrb[0].mxu0
      %v4095 = vpop.f32.mrb[0].mxu0
      %v4096 = vadd.f32 %v3896, %v4095
      %v4097 = vpop.f32.mrb[0].mxu0
      %4098 = vmatprep.mubr.bf16.mxu0 0
      %4099 = vmatmul.mubr.bf16.gmra.mrb[0].mxu0 %v3498
      %v4100 = vpop.f32.mrb[0].mxu0
      %v4101 = vadd.f32 %v3901, %v4100
      %v4102 = vpop.f32.mrb[0].mxu0
      %v4103 = vpop.f32.mrb[0].mxu0
      %v4104 = vpop.f32.mrb[0].mxu0
      %4105 = vdwg.mxu0
      %v4106 = vld [vmem:[#allocation2 + $0x30] sm:$0xcc]
      %v4107 = vld [vmem:[#allocation2 + $0x38] sm:$0xc]
      %v4108 = vld [vmem:[#allocation2 + $0x3c] sm:$0xff]
      %v4109 = vld [vmem:[#allocation2 + $0x44] sm:$0xf]
      %v4110 = vld [vmem:[#allocation2 + $0x48] sm:$0xff]
      %v4111 = vld [vmem:[#allocation2 + $0x50] sm:$0xf]
      %v4112 = vld [vmem:[#allocation2 + $0x54] sm:$0xff]
      %v4113 = vld [vmem:[#allocation2 + $0x5c] sm:$0xf]
      %v4114 = vld [vmem:[#allocation2 + $0x60] sm:$0xff]
      %v4115 = vld [vmem:[#allocation2 + $0x68] sm:$0xf]
      %v4116 = vld [vmem:[#allocation2 + $0x6c] sm:$0xff]
      %v4117 = vld [vmem:[#allocation2 + $0x74] sm:$0xf]
      %v4118 = vld [vmem:[#allocation2 + $0x78] sm:$0xff]
      %v4119 = vld [vmem:[#allocation2 + $0x80] sm:$0xf]
      %v4120 = vld [vmem:[#allocation2 + $0x84] sm:$0xff]
      %v4121 = vld [vmem:[#allocation2 + $0x8c] sm:$0xf]
      %v4122 = vld [vmem:[#allocation2 + $0x90] sm:$0xff]
      %v4123 = vld [vmem:[#allocation2 + $0x98] sm:$0xf]
      %v4124 = vld [vmem:[#allocation2 + $0x9c] sm:$0xff]
      %v4125 = vld [vmem:[#allocation2 + $0xa4] sm:$0xf]
      %v4126 = vld [vmem:[#allocation2 + $0xa8] sm:$0xff]
      %v4127 = vld [vmem:[#allocation2 + $0xb0] sm:$0xf]
      %v4128 = vld [vmem:[#allocation2 + $0xb4] sm:$0xff]
      %v4129 = vld [vmem:[#allocation2 + $0xbc] sm:$0xf]
      %v4130 = vld [vmem:[#allocation2 + $0xc0] sm:$0xff]
      %v4131 = vld [vmem:[#allocation2 + $0xc8] sm:$0xf]
      %v4132 = vld [vmem:[#allocation2 + $0xcc] sm:$0xff]
      %v4133 = vld [vmem:[#allocation2 + $0xd4] sm:$0xf]
      %v4134 = vld [vmem:[#allocation2 + $0xd8] sm:$0xff]
      %v4135 = vld [vmem:[#allocation2 + $0xe0] sm:$0xf]
      %v4136 = vld [vmem:[#allocation2 + $0xe4] sm:$0xff]
      %v4137 = vld [vmem:[#allocation2 + $0xec] sm:$0xf]
      %v4138 = vld [vmem:[#allocation2 + $0xf0] sm:$0xff]
      %v4139 = vld [vmem:[#allocation2 + $0xf8] sm:$0xf]
      %v4140 = vld [vmem:[#allocation2 + $0xfc] sm:$0xff]
      %v4141 = vld [vmem:[#allocation2 + $0x104] sm:$0xf]
      %v4142 = vld [vmem:[#allocation2 + $0x108] sm:$0xff]
      %v4143 = vld [vmem:[#allocation2 + $0x110] sm:$0xf]
      %v4144 = vld [vmem:[#allocation2 + $0x114] sm:$0xff]
      %v4145 = vld [vmem:[#allocation2 + $0x11c] sm:$0xf]
      %v4146 = vld [vmem:[#allocation2 + $0x120] sm:$0xff]
      %v4147 = vld [vmem:[#allocation2 + $0x128] sm:$0xf]
      %v4148 = vld [vmem:[#allocation2 + $0x12c] sm:$0xff]
      %v4149 = vld [vmem:[#allocation2 + $0x134] sm:$0xf]
      %v4150 = vld [vmem:[#allocation2 + $0x138] sm:$0xff]
      %v4151 = vld [vmem:[#allocation2 + $0x140] sm:$0xf]
      %v4152 = vld [vmem:[#allocation2 + $0x144] sm:$0xff]
      %v4153 = vld [vmem:[#allocation2 + $0x14c] sm:$0xf]
      %v4154 = vld [vmem:[#allocation2 + $0x150] sm:$0xff]
      %v4155 = vld [vmem:[#allocation2 + $0x158] sm:$0xf]
      %v4156 = vld [vmem:[#allocation2 + $0x15c] sm:$0xff]
      %v4157 = vld [vmem:[#allocation2 + $0x164] sm:$0xf]
      %v4158 = vld [vmem:[#allocation2 + $0x168] sm:$0xff]
      %v4159 = vld [vmem:[#allocation2 + $0x170] sm:$0xf]
      %v4160 = vld [vmem:[#allocation2 + $0x174] sm:$0xff]
      %v4161 = vld [vmem:[#allocation2 + $0x17c] sm:$0xf]
      %v4162 = vld [vmem:[#allocation2 + $0x180] sm:$0xff]
      %v4163 = vld [vmem:[#allocation2 + $0x188] sm:$0xf]
      %v4164 = vld [vmem:[#allocation2 + $0x18c] sm:$0xff]
      %v4165 = vld [vmem:[#allocation2 + $0x194] sm:$0xf]
      %v4166 = vld [vmem:[#allocation2 + $0x198] sm:$0xff]
      %v4167 = vld [vmem:[#allocation2 + $0x1a0] sm:$0xf]
      %v4168 = vld [vmem:[#allocation2 + $0x1a4] sm:$0xff]
      %v4169 = vld [vmem:[#allocation2 + $0x1ac] sm:$0xf]
      %v4170 = vld [vmem:[#allocation2 + $0x1b0] sm:$0xff]
      %v4171 = vld [vmem:[#allocation2 + $0x1b8] sm:$0xf]
      %v4172 = vld [vmem:[#allocation2 + $0x1bc] sm:$0xff]
      %v4173 = vld [vmem:[#allocation2 + $0x1c4] sm:$0xf]
      %v4174 = vld [vmem:[#allocation2 + $0x1c8] sm:$0xff]
      %v4175 = vld [vmem:[#allocation2 + $0x1d0] sm:$0xf]
      %v4176 = vld [vmem:[#allocation2 + $0x1d4] sm:$0xff]
      %v4177 = vld [vmem:[#allocation2 + $0x1dc] sm:$0xf]
      %v4178 = vld [vmem:[#allocation2 + $0x1e0] sm:$0xff]
      %v4179 = vld [vmem:[#allocation2 + $0x1e8] sm:$0xf]
      %v4180 = vld [vmem:[#allocation2 + $0x1ec] sm:$0xff]
      %v4181 = vld [vmem:[#allocation2 + $0x1f4] sm:$0xf]
      %v4182 = vld [vmem:[#allocation2 + $0x1f8] sm:$0xff]
      %v4183 = vld [vmem:[#allocation2 + $0x200] sm:$0xf]
      %v4184 = vld [vmem:[#allocation2 + $0x204] sm:$0xff]
      %v4185 = vld [vmem:[#allocation2 + $0x20c] sm:$0xf]
      %v4186 = vld [vmem:[#allocation2 + $0x210] sm:$0xff]
      %v4187 = vld [vmem:[#allocation2 + $0x218] sm:$0xf]
      %s4188 = scalar_lea.vmem %s5, 384
      %v4189 = vld [vmem:[%s4188] sm:$0xf]
      %v4190 = vld [vmem:[%s4188 + $0x4] sm:$0xf]
      %v4191 = vld [vmem:[%s4188 + $0x8] sm:$0xf]
      %v4192 = vld [vmem:[%s4188 + $0xc] sm:$0xf]
      %v4193 = vld [vmem:[%s4188 + $0x10] sm:$0xf]
      %v4194 = vld [vmem:[%s4188 + $0x14] sm:$0xf]
      %v4195 = vld [vmem:[%s4188 + $0x18] sm:$0xf]
      %v4196 = vld [vmem:[%s4188 + $0x1c] sm:$0xf]
      %v4197 = vld [vmem:[%s4188 + $0x20] sm:$0xf]
      %v4198 = vld [vmem:[%s4188 + $0x24] sm:$0xf]
      %v4199 = vld [vmem:[%s4188 + $0x28] sm:$0xf]
      %v4200 = vld [vmem:[%s4188 + $0x2c] sm:$0xf]
      %v4201 = vld [vmem:[%s4188 + $0x30] sm:$0xf]
      %v4202 = vld [vmem:[%s4188 + $0x34] sm:$0xf]
      %v4203 = vld [vmem:[%s4188 + $0x38] sm:$0xf]
      %v4204 = vld [vmem:[%s4188 + $0x3c] sm:$0xf]
      %v4205 = vld [vmem:[%s4188 + $0x40] sm:$0xf]
      %v4206 = vld [vmem:[%s4188 + $0x44] sm:$0xf]
      %v4207 = vld [vmem:[%s4188 + $0x48] sm:$0xf]
      %v4208 = vld [vmem:[%s4188 + $0x4c] sm:$0xf]
      %v4209 = vld [vmem:[%s4188 + $0x50] sm:$0xf]
      %v4210 = vld [vmem:[%s4188 + $0x54] sm:$0xf]
      %v4211 = vld [vmem:[%s4188 + $0x58] sm:$0xf]
      %v4212 = vld [vmem:[%s4188 + $0x5c] sm:$0xf]
      %v4213 = vld [vmem:[%s4188 + $0x60] sm:$0xf]
      %v4214 = vld [vmem:[%s4188 + $0x64] sm:$0xf]
      %v4215 = vld [vmem:[%s4188 + $0x68] sm:$0xf]
      %v4216 = vld [vmem:[%s4188 + $0x6c] sm:$0xf]
      %v4217 = vld [vmem:[%s4188 + $0x70] sm:$0xf]
      %v4218 = vld [vmem:[%s4188 + $0x74] sm:$0xf]
      %v4219 = vld [vmem:[%s4188 + $0x78] sm:$0xf]
      %v4220 = vld [vmem:[%s4188 + $0x7c] sm:$0xf]
      %v4221 = vld [vmem:[%s4188 + $0x80] sm:$0xf]
      %v4222 = vld [vmem:[%s4188 + $0x84] sm:$0xf]
      %v4223 = vld [vmem:[%s4188 + $0x88] sm:$0xf]
      %v4224 = vld [vmem:[%s4188 + $0x8c] sm:$0xf]
      %v4225 = vld [vmem:[%s4188 + $0x90] sm:$0xf]
      %v4226 = vld [vmem:[%s4188 + $0x94] sm:$0xf]
      %v4227 = vld [vmem:[%s4188 + $0x98] sm:$0xf]
      %v4228 = vld [vmem:[%s4188 + $0x9c] sm:$0xf]
      %v4229 = vld [vmem:[%s4188 + $0xa0] sm:$0xf]
      %v4230 = vld [vmem:[%s4188 + $0xa4] sm:$0xf]
      %v4231 = vld [vmem:[%s4188 + $0xa8] sm:$0xf]
      %v4232 = vld [vmem:[%s4188 + $0xac] sm:$0xf]
      %v4233 = vld [vmem:[%s4188 + $0xb0] sm:$0xf]
      %v4234 = vld [vmem:[%s4188 + $0xb4] sm:$0xf]
      %v4235 = vld [vmem:[%s4188 + $0xb8] sm:$0xf]
      %v4236 = vld [vmem:[%s4188 + $0xbc] sm:$0xf]
      %v4319 = vunpack.c.l.b16 %v4106
      %v4320 = vunpack.c.h.b16 %v4106
      %v4321 = vunpack.c.l.b16 %v4107
      %v4322 = vunpack.c.l.b16 %v4108
      %v4323 = vunpack.c.h.b16 %v4108
      %v4324 = vunpack.c.l.b16 %v4109
      %v4325 = vunpack.c.l.b16 %v4110
      %v4326 = vunpack.c.h.b16 %v4110
      %v4327 = vunpack.c.l.b16 %v4111
      %v4328 = vunpack.c.l.b16 %v4112
      %v4329 = vunpack.c.h.b16 %v4112
      %v4330 = vunpack.c.l.b16 %v4113
      %v4331 = vunpack.c.l.b16 %v4114
      %v4332 = vunpack.c.h.b16 %v4114
      %v4333 = vunpack.c.l.b16 %v4115
      %v4334 = vunpack.c.l.b16 %v4116
      %v4335 = vunpack.c.h.b16 %v4116
      %v4336 = vunpack.c.l.b16 %v4117
      %v4337 = vunpack.c.l.b16 %v4118
      %v4338 = vunpack.c.h.b16 %v4118
      %v4339 = vunpack.c.l.b16 %v4119
      %v4340 = vunpack.c.l.b16 %v4120
      %v4341 = vunpack.c.h.b16 %v4120
      %v4342 = vunpack.c.l.b16 %v4121
      %v4343 = vunpack.c.l.b16 %v4122
      %v4344 = vunpack.c.h.b16 %v4122
      %v4345 = vunpack.c.l.b16 %v4123
      %v4346 = vunpack.c.l.b16 %v4124
      %v4347 = vunpack.c.h.b16 %v4124
      %v4348 = vunpack.c.l.b16 %v4125
      %v4349 = vunpack.c.l.b16 %v4126
      %v4350 = vunpack.c.h.b16 %v4126
      %v4351 = vunpack.c.l.b16 %v4127
      %v4352 = vunpack.c.l.b16 %v4128
      %v4353 = vunpack.c.h.b16 %v4128
      %v4354 = vunpack.c.l.b16 %v4129
      %v4355 = vunpack.c.l.b16 %v4130
      %v4356 = vunpack.c.h.b16 %v4130
      %v4357 = vunpack.c.l.b16 %v4131
      %v4358 = vunpack.c.l.b16 %v4132
      %v4359 = vunpack.c.h.b16 %v4132
      %v4360 = vunpack.c.l.b16 %v4133
      %v4361 = vunpack.c.l.b16 %v4134
      %v4362 = vunpack.c.h.b16 %v4134
      %v4363 = vunpack.c.l.b16 %v4135
      %v4364 = vunpack.c.l.b16 %v4136
      %v4365 = vunpack.c.h.b16 %v4136
      %v4366 = vunpack.c.l.b16 %v4137
      %v4367 = vunpack.c.l.b16 %v4138
      %v4368 = vunpack.c.h.b16 %v4138
      %v4369 = vunpack.c.l.b16 %v4139
      %v4370 = vunpack.c.l.b16 %v4140
      %v4371 = vunpack.c.h.b16 %v4140
      %v4372 = vunpack.c.l.b16 %v4141
      %v4373 = vunpack.c.l.b16 %v4142
      %v4374 = vunpack.c.h.b16 %v4142
      %v4375 = vunpack.c.l.b16 %v4143
      %v4376 = vunpack.c.l.b16 %v4144
      %v4377 = vunpack.c.h.b16 %v4144
      %v4378 = vunpack.c.l.b16 %v4145
      %v4379 = vunpack.c.l.b16 %v4146
      %v4380 = vunpack.c.h.b16 %v4146
      %v4381 = vunpack.c.l.b16 %v4147
      %v4382 = vunpack.c.l.b16 %v4148
      %v4383 = vunpack.c.h.b16 %v4148
      %v4384 = vunpack.c.l.b16 %v4149
      %v4385 = vunpack.c.l.b16 %v4150
      %v4386 = vunpack.c.h.b16 %v4150
      %v4387 = vunpack.c.l.b16 %v4151
      %v4388 = vunpack.c.l.b16 %v4152
      %v4389 = vunpack.c.h.b16 %v4152
      %v4390 = vunpack.c.l.b16 %v4153
      %v4391 = vunpack.c.l.b16 %v4154
      %v4392 = vunpack.c.h.b16 %v4154
      %v4393 = vunpack.c.l.b16 %v4155
      %v4394 = vunpack.c.l.b16 %v4156
      %v4395 = vunpack.c.h.b16 %v4156
      %v4396 = vunpack.c.l.b16 %v4157
      %v4397 = vunpack.c.l.b16 %v4158
      %v4398 = vunpack.c.h.b16 %v4158
      %v4399 = vunpack.c.l.b16 %v4159
      %v4400 = vunpack.c.l.b16 %v4160
      %v4401 = vunpack.c.h.b16 %v4160
      %v4402 = vunpack.c.l.b16 %v4161
      %v4403 = vunpack.c.l.b16 %v4162
      %v4404 = vunpack.c.h.b16 %v4162
      %v4405 = vunpack.c.l.b16 %v4163
      %v4406 = vunpack.c.l.b16 %v4164
      %v4407 = vunpack.c.h.b16 %v4164
      %v4408 = vunpack.c.l.b16 %v4165
      %v4409 = vunpack.c.l.b16 %v4166
      %v4410 = vunpack.c.h.b16 %v4166
      %v4411 = vunpack.c.l.b16 %v4167
      %v4412 = vunpack.c.l.b16 %v4168
      %v4413 = vunpack.c.h.b16 %v4168
      %v4414 = vunpack.c.l.b16 %v4169
      %v4415 = vunpack.c.l.b16 %v4170
      %v4416 = vunpack.c.h.b16 %v4170
      %v4417 = vunpack.c.l.b16 %v4171
      %v4418 = vunpack.c.l.b16 %v4172
      %v4419 = vunpack.c.h.b16 %v4172
      %v4420 = vunpack.c.l.b16 %v4173
      %v4421 = vunpack.c.l.b16 %v4174
      %v4422 = vunpack.c.h.b16 %v4174
      %v4423 = vunpack.c.l.b16 %v4175
      %v4424 = vunpack.c.l.b16 %v4176
      %v4425 = vunpack.c.h.b16 %v4176
      %v4426 = vunpack.c.l.b16 %v4177
      %v4427 = vunpack.c.l.b16 %v4178
      %v4428 = vunpack.c.h.b16 %v4178
      %v4429 = vunpack.c.l.b16 %v4179
      %v4430 = vunpack.c.l.b16 %v4180
      %v4431 = vunpack.c.h.b16 %v4180
      %v4432 = vunpack.c.l.b16 %v4181
      %v4433 = vunpack.c.l.b16 %v4182
      %v4434 = vunpack.c.h.b16 %v4182
      %v4435 = vunpack.c.l.b16 %v4183
      %v4436 = vunpack.c.l.b16 %v4184
      %v4437 = vunpack.c.h.b16 %v4184
      %v4438 = vunpack.c.l.b16 %v4185
      %v4439 = vunpack.c.l.b16 %v4186
      %v4440 = vunpack.c.h.b16 %v4186
      %v4441 = vunpack.c.l.b16 %v4187
      %v4442 = vpack.c.b16 %v4322, %v4319
      %v4443 = vpack.c.b16 %v4323, %v4320
      %v4444 = vpack.c.b16 %v4324, %v4321
      %v4445 = vpack.c.b16 %v4328, %v4325
      %v4446 = vpack.c.b16 %v4329, %v4326
      %v4447 = vpack.c.b16 %v4330, %v4327
      %v4448 = vpack.c.b16 %v4334, %v4331
      %v4449 = vpack.c.b16 %v4335, %v4332
      %v4450 = vpack.c.b16 %v4336, %v4333
      %v4451 = vpack.c.b16 %v4340, %v4337
      %v4452 = vpack.c.b16 %v4341, %v4338
      %v4453 = vpack.c.b16 %v4342, %v4339
      %v4454 = vpack.c.b16 %v4346, %v4343
      %v4455 = vpack.c.b16 %v4347, %v4344
      %v4456 = vpack.c.b16 %v4348, %v4345
      %v4457 = vpack.c.b16 %v4352, %v4349
      %v4458 = vpack.c.b16 %v4353, %v4350
      %v4459 = vpack.c.b16 %v4354, %v4351
      %v4460 = vpack.c.b16 %v4358, %v4355
      %v4461 = vpack.c.b16 %v4359, %v4356
      %v4462 = vpack.c.b16 %v4360, %v4357
      %v4463 = vpack.c.b16 %v4364, %v4361
      %v4464 = vpack.c.b16 %v4365, %v4362
      %v4465 = vpack.c.b16 %v4366, %v4363
      %v4466 = vpack.c.b16 %v4370, %v4367
      %v4467 = vpack.c.b16 %v4371, %v4368
      %v4468 = vpack.c.b16 %v4372, %v4369
      %v4469 = vpack.c.b16 %v4376, %v4373
      %v4470 = vpack.c.b16 %v4377, %v4374
      %v4471 = vpack.c.b16 %v4378, %v4375
      %v4472 = vpack.c.b16 %v4382, %v4379
      %v4473 = vpack.c.b16 %v4383, %v4380
      %v4474 = vpack.c.b16 %v4384, %v4381
      %v4475 = vpack.c.b16 %v4388, %v4385
      %v4476 = vpack.c.b16 %v4389, %v4386
      %v4477 = vpack.c.b16 %v4390, %v4387
      %v4478 = vpack.c.b16 %v4394, %v4391
      %v4479 = vpack.c.b16 %v4395, %v4392
      %v4480 = vpack.c.b16 %v4396, %v4393
      %v4481 = vpack.c.b16 %v4400, %v4397
      %v4482 = vpack.c.b16 %v4401, %v4398
      %v4483 = vpack.c.b16 %v4402, %v4399
      %v4484 = vpack.c.b16 %v4406, %v4403
      %v4485 = vpack.c.b16 %v4407, %v4404
      %v4486 = vpack.c.b16 %v4408, %v4405
      %v4487 = vpack.c.b16 %v4412, %v4409
      %v4488 = vpack.c.b16 %v4413, %v4410
      %v4489 = vpack.c.b16 %v4414, %v4411
      %v4490 = vpack.c.b16 %v4418, %v4415
      %v4491 = vpack.c.b16 %v4419, %v4416
      %v4492 = vpack.c.b16 %v4420, %v4417
      %v4493 = vpack.c.b16 %v4424, %v4421
      %v4494 = vpack.c.b16 %v4425, %v4422
      %v4495 = vpack.c.b16 %v4426, %v4423
      %v4496 = vpack.c.b16 %v4430, %v4427
      %v4497 = vpack.c.b16 %v4431, %v4428
      %v4498 = vpack.c.b16 %v4432, %v4429
      %v4499 = vpack.c.b16 %v4436, %v4433
      %v4500 = vpack.c.b16 %v4437, %v4434
      %v4501 = vpack.c.b16 %v4438, %v4435
      %v4502 = vpack.c.b16 %v4439, %v4439
      %v4503 = vpack.c.b16 %v4440, %v4440
      %v4504 = vpack.c.b16 %v4441, %v4441
      %vm4505 = vcmask 1045504
      %v4506 = vrot.slane %v4442, 2
      %v4507 = vrot.slane %v4445, 2
      %v4508 = vsel %vm4505, %v4506, %v4507
      %v4509 = vrot.slane %v4443, 2
      %v4510 = vrot.slane %v4446, 2
      %v4511 = vsel %vm4505, %v4509, %v4510
      %v4512 = vrot.slane %v4444, 2
      %v4513 = vrot.slane %v4447, 2
      %v4514 = vsel %vm4505, %v4512, %v4513
      %v4515 = vrot.slane %v4448, 2
      %v4516 = vsel %vm4505, %v4507, %v4515
      %v4517 = vrot.slane %v4449, 2
      %v4518 = vsel %vm4505, %v4510, %v4517
      %v4519 = vrot.slane %v4450, 2
      %v4520 = vsel %vm4505, %v4513, %v4519
      %v4521 = vrot.slane %v4451, 2
      %v4522 = vsel %vm4505, %v4515, %v4521
      %v4523 = vrot.slane %v4452, 2
      %v4524 = vsel %vm4505, %v4517, %v4523
      %v4525 = vrot.slane %v4453, 2
      %v4526 = vsel %vm4505, %v4519, %v4525
      %v4527 = vrot.slane %v4454, 2
      %v4528 = vsel %vm4505, %v4521, %v4527
      %v4529 = vrot.slane %v4455, 2
      %v4530 = vsel %vm4505, %v4523, %v4529
      %v4531 = vrot.slane %v4456, 2
      %v4532 = vsel %vm4505, %v4525, %v4531
      %v4533 = vrot.slane %v4457, 2
      %v4534 = vsel %vm4505, %v4527, %v4533
      %v4535 = vrot.slane %v4458, 2
      %v4536 = vsel %vm4505, %v4529, %v4535
      %v4537 = vrot.slane %v4459, 2
      %v4538 = vsel %vm4505, %v4531, %v4537
      %v4539 = vrot.slane %v4460, 2
      %v4540 = vsel %vm4505, %v4533, %v4539
      %v4541 = vrot.slane %v4461, 2
      %v4542 = vsel %vm4505, %v4535, %v4541
      %v4543 = vrot.slane %v4462, 2
      %v4544 = vsel %vm4505, %v4537, %v4543
      %v4545 = vrot.slane %v4463, 2
      %v4546 = vsel %vm4505, %v4539, %v4545
      %v4547 = vrot.slane %v4464, 2
      %v4548 = vsel %vm4505, %v4541, %v4547
      %v4549 = vrot.slane %v4465, 2
      %v4550 = vsel %vm4505, %v4543, %v4549
      %v4551 = vrot.slane %v4466, 2
      %v4552 = vsel %vm4505, %v4545, %v4551
      %v4553 = vrot.slane %v4467, 2
      %v4554 = vsel %vm4505, %v4547, %v4553
      %v4555 = vrot.slane %v4468, 2
      %v4556 = vsel %vm4505, %v4549, %v4555
      %v4557 = vrot.slane %v4469, 2
      %v4558 = vsel %vm4505, %v4551, %v4557
      %v4559 = vrot.slane %v4470, 2
      %v4560 = vsel %vm4505, %v4553, %v4559
      %v4561 = vrot.slane %v4471, 2
      %v4562 = vsel %vm4505, %v4555, %v4561
      %v4563 = vrot.slane %v4472, 2
      %v4564 = vsel %vm4505, %v4557, %v4563
      %v4565 = vrot.slane %v4473, 2
      %v4566 = vsel %vm4505, %v4559, %v4565
      %v4567 = vrot.slane %v4474, 2
      %v4568 = vsel %vm4505, %v4561, %v4567
      %v4569 = vrot.slane %v4475, 2
      %v4570 = vsel %vm4505, %v4563, %v4569
      %v4571 = vrot.slane %v4476, 2
      %v4572 = vsel %vm4505, %v4565, %v4571
      %v4573 = vrot.slane %v4477, 2
      %v4574 = vsel %vm4505, %v4567, %v4573
      %v4575 = vrot.slane %v4478, 2
      %v4576 = vsel %vm4505, %v4569, %v4575
      %v4577 = vrot.slane %v4479, 2
      %v4578 = vsel %vm4505, %v4571, %v4577
      %v4579 = vrot.slane %v4480, 2
      %v4580 = vsel %vm4505, %v4573, %v4579
      %v4581 = vrot.slane %v4481, 2
      %v4582 = vsel %vm4505, %v4575, %v4581
      %v4583 = vrot.slane %v4482, 2
      %v4584 = vsel %vm4505, %v4577, %v4583
      %v4585 = vrot.slane %v4483, 2
      %v4586 = vsel %vm4505, %v4579, %v4585
      %v4587 = vrot.slane %v4484, 2
      %v4588 = vsel %vm4505, %v4581, %v4587
      %v4589 = vrot.slane %v4485, 2
      %v4590 = vsel %vm4505, %v4583, %v4589
      %v4591 = vrot.slane %v4486, 2
      %v4592 = vsel %vm4505, %v4585, %v4591
      %v4593 = vrot.slane %v4487, 2
      %v4594 = vsel %vm4505, %v4587, %v4593
      %v4595 = vrot.slane %v4488, 2
      %v4596 = vsel %vm4505, %v4589, %v4595
      %v4597 = vrot.slane %v4489, 2
      %v4598 = vsel %vm4505, %v4591, %v4597
      %v4599 = vrot.slane %v4490, 2
      %v4600 = vsel %vm4505, %v4593, %v4599
      %v4601 = vrot.slane %v4491, 2
      %v4602 = vsel %vm4505, %v4595, %v4601
      %v4603 = vrot.slane %v4492, 2
      %v4604 = vsel %vm4505, %v4597, %v4603
      %v4605 = vrot.slane %v4493, 2
      %v4606 = vsel %vm4505, %v4599, %v4605
      %v4607 = vrot.slane %v4494, 2
      %v4608 = vsel %vm4505, %v4601, %v4607
      %v4609 = vrot.slane %v4495, 2
      %v4610 = vsel %vm4505, %v4603, %v4609
      %v4611 = vrot.slane %v4496, 2
      %v4612 = vsel %vm4505, %v4605, %v4611
      %v4613 = vrot.slane %v4497, 2
      %v4614 = vsel %vm4505, %v4607, %v4613
      %v4615 = vrot.slane %v4498, 2
      %v4616 = vsel %vm4505, %v4609, %v4615
      %v4617 = vrot.slane %v4499, 2
      %v4618 = vsel %vm4505, %v4611, %v4617
      %v4619 = vrot.slane %v4500, 2
      %v4620 = vsel %vm4505, %v4613, %v4619
      %v4621 = vrot.slane %v4501, 2
      %v4622 = vsel %vm4505, %v4615, %v4621
      %v4623 = vrot.slane %v4502, 2
      %v4624 = vsel %vm4505, %v4617, %v4623
      %v4625 = vrot.slane %v4503, 2
      %v4626 = vsel %vm4505, %v4619, %v4625
      %v4627 = vrot.slane %v4504, 2
      %v4628 = vsel %vm4505, %v4621, %v4627
      %v4740 = vunpack.c.l.b16 %v4189
      %v4741 = vunpack.c.l.b16 %v4190
      %v4742 = vunpack.c.l.b16 %v4191
      %v4743 = vunpack.c.l.b16 %v4192
      %v4744 = vunpack.c.l.b16 %v4193
      %v4745 = vunpack.c.l.b16 %v4194
      %v4746 = vunpack.c.l.b16 %v4195
      %v4747 = vunpack.c.l.b16 %v4196
      %v4748 = vunpack.c.l.b16 %v4197
      %v4749 = vunpack.c.l.b16 %v4198
      %v4750 = vunpack.c.l.b16 %v4199
      %v4751 = vunpack.c.l.b16 %v4200
      %v4752 = vunpack.c.l.b16 %v4201
      %v4753 = vunpack.c.l.b16 %v4202
      %v4754 = vunpack.c.l.b16 %v4203
      %v4755 = vunpack.c.l.b16 %v4204
      %v4756 = vunpack.c.l.b16 %v4205
      %v4757 = vunpack.c.l.b16 %v4206
      %v4758 = vunpack.c.l.b16 %v4207
      %v4759 = vunpack.c.l.b16 %v4208
      %v4760 = vunpack.c.l.b16 %v4209
      %v4761 = vunpack.c.l.b16 %v4210
      %v4762 = vunpack.c.l.b16 %v4211
      %v4763 = vunpack.c.l.b16 %v4212
      %v4764 = vunpack.c.l.b16 %v4213
      %v4765 = vunpack.c.l.b16 %v4214
      %v4766 = vunpack.c.l.b16 %v4215
      %v4767 = vunpack.c.l.b16 %v4216
      %v4768 = vunpack.c.l.b16 %v4217
      %v4769 = vunpack.c.l.b16 %v4218
      %v4770 = vunpack.c.l.b16 %v4219
      %v4771 = vunpack.c.l.b16 %v4220
      %v4772 = vunpack.c.l.b16 %v4221
      %v4773 = vunpack.c.l.b16 %v4222
      %v4774 = vunpack.c.l.b16 %v4223
      %v4775 = vunpack.c.l.b16 %v4224
      %v4776 = vunpack.c.l.b16 %v4225
      %v4777 = vunpack.c.l.b16 %v4226
      %v4778 = vunpack.c.l.b16 %v4227
      %v4779 = vunpack.c.l.b16 %v4228
      %v4780 = vunpack.c.l.b16 %v4229
      %v4781 = vunpack.c.l.b16 %v4230
      %v4782 = vunpack.c.l.b16 %v4231
      %v4783 = vunpack.c.l.b16 %v4232
      %v4784 = vunpack.c.l.b16 %v4233
      %v4785 = vunpack.c.l.b16 %v4234
      %v4786 = vunpack.c.l.b16 %v4235
      %v4787 = vunpack.c.l.b16 %v4236
      %v4788 = vpack.c.b16 %v4741, %v4740
      %v4789 = vpack.c.b16 %v4743, %v4742
      %v4790 = vpack.c.b16 %v4745, %v4744
      %v4791 = vpack.c.b16 %v4747, %v4746
      %v4792 = vpack.c.b16 %v4749, %v4748
      %v4793 = vpack.c.b16 %v4751, %v4750
      %v4794 = vpack.c.b16 %v4753, %v4752
      %v4795 = vpack.c.b16 %v4755, %v4754
      %v4796 = vpack.c.b16 %v4757, %v4756
      %v4797 = vpack.c.b16 %v4759, %v4758
      %v4798 = vpack.c.b16 %v4761, %v4760
      %v4799 = vpack.c.b16 %v4763, %v4762
      %v4800 = vpack.c.b16 %v4765, %v4764
      %v4801 = vpack.c.b16 %v4767, %v4766
      %v4802 = vpack.c.b16 %v4769, %v4768
      %v4803 = vpack.c.b16 %v4771, %v4770
      %v4804 = vpack.c.b16 %v4773, %v4772
      %v4805 = vpack.c.b16 %v4775, %v4774
      %v4806 = vpack.c.b16 %v4777, %v4776
      %v4807 = vpack.c.b16 %v4779, %v4778
      %v4808 = vpack.c.b16 %v4781, %v4780
      %v4809 = vpack.c.b16 %v4783, %v4782
      %v4810 = vpack.c.b16 %v4785, %v4784
      %v4811 = vpack.c.b16 %v4787, %v4786
      %4836 = vmatprep.subr.bf16.mxu0 0
      %4837 = vmatpush1.bf16.msra.mxu0 %v4788
      %4838 = vmatprep.subr.bf16.mxu0 0
      %4839 = vmatpush1.bf16.msra.mxu0 %v4789
      %4840 = vmatprep.subr.bf16.mxu0 0
      %4841 = vmatpush1.bf16.msra.mxu0 %v4790
      %4842 = vmatprep.subr.bf16.mxu0 0
      %4843 = vmatpush1.bf16.msra.mxu0 %v4791
      %4844 = vmatprep.subr.bf16.mxu0 0
      %4845 = vmatpush1.bf16.msra.mxu0 %v4792
      %4846 = vmatprep.subr.bf16.mxu0 0
      %4847 = vmatpush1.bf16.msra.mxu0 %v4793
      %4848 = vmatprep.subr.bf16.mxu0 0
      %4849 = vmatpush1.bf16.msra.mxu0 %v4794
      %4850 = vmatprep.subr.bf16.mxu0 0
      %4851 = vmatpush1.bf16.msra.mxu0 %v4795
      %4852 = vmatprep.subr.bf16.mxu0 0
      %4853 = vmatpush1.bf16.msra.mxu0 %v4796
      %4854 = vmatprep.subr.bf16.mxu0 0
      %4855 = vmatpush1.bf16.msra.mxu0 %v4797
      %4856 = vmatprep.subr.bf16.mxu0 0
      %4857 = vmatpush1.bf16.msra.mxu0 %v4798
      %4858 = vmatprep.subr.bf16.mxu0 0
      %4859 = vmatpush1.bf16.msra.mxu0 %v4799
      %4860 = vmatprep.subr.bf16.mxu0 0
      %4861 = vmatpush1.bf16.msra.mxu0 %v4800
      %4862 = vmatprep.subr.bf16.mxu0 0
      %4863 = vmatpush1.bf16.msra.mxu0 %v4801
      %4864 = vmatprep.subr.bf16.mxu0 0
      %4865 = vmatpush1.bf16.msra.mxu0 %v4802
      %4866 = vmatprep.subr.bf16.mxu0 0
      %4867 = vmatpush1.bf16.msra.mxu0 %v4803
      %4868 = vmatprep.mubr.bf16.mxu0 %v4511
      %4869 = vmatmul.mubr.bf16.gmra.mrb[0].mxu0 %v4508
      %v4870 = vpop.f32.mrb[0].mxu0
      %v4871 = vadd.f32 0.0, %v4870
      %v4872 = vpop.f32.mrb[0].mxu0
      %v4873 = vpop.f32.mrb[0].mxu0
      %v4874 = vadd.f32 0.0, %v4873
      %v4875 = vpop.f32.mrb[0].mxu0
      %4876 = vmatprep.mubr.bf16.mxu0 %v4518
      %4877 = vmatmul.mubr.bf16.gmra.mrb[0].mxu0 %v4516
      %v4878 = vpop.f32.mrb[0].mxu0
      %v4879 = vadd.f32 0.0, %v4878
      %v4880 = vpop.f32.mrb[0].mxu0
      %v4881 = vpop.f32.mrb[0].mxu0
      %v4882 = vadd.f32 0.0, %v4881
      %v4883 = vpop.f32.mrb[0].mxu0
      %4884 = vmatprep.mubr.bf16.mxu0 %v4524
      %4885 = vmatmul.mubr.bf16.gmra.mrb[0].mxu0 %v4522
      %v4886 = vpop.f32.mrb[0].mxu0
      %v4887 = vadd.f32 0.0, %v4886
      %v4888 = vpop.f32.mrb[0].mxu0
      %v4889 = vpop.f32.mrb[0].mxu0
      %v4890 = vadd.f32 0.0, %v4889
      %v4891 = vpop.f32.mrb[0].mxu0
      %4892 = vmatprep.mubr.bf16.mxu0 %v4530
      %4893 = vmatmul.mubr.bf16.gmra.mrb[0].mxu0 %v4528
      %v4894 = vpop.f32.mrb[0].mxu0
      %v4895 = vadd.f32 0.0, %v4894
      %v4896 = vpop.f32.mrb[0].mxu0
      %v4897 = vpop.f32.mrb[0].mxu0
      %v4898 = vadd.f32 0.0, %v4897
      %v4899 = vpop.f32.mrb[0].mxu0
      %4900 = vmatprep.mubr.bf16.mxu0 %v4536
      %4901 = vmatmul.mubr.bf16.gmra.mrb[0].mxu0 %v4534
      %v4902 = vpop.f32.mrb[0].mxu0
      %v4903 = vadd.f32 0.0, %v4902
      %v4904 = vpop.f32.mrb[0].mxu0
      %v4905 = vpop.f32.mrb[0].mxu0
      %v4906 = vadd.f32 0.0, %v4905
      %v4907 = vpop.f32.mrb[0].mxu0
      %4908 = vmatprep.mubr.bf16.mxu0 %v4542
      %4909 = vmatmul.mubr.bf16.gmra.mrb[0].mxu0 %v4540
      %v4910 = vpop.f32.mrb[0].mxu0
      %v4911 = vadd.f32 0.0, %v4910
      %v4912 = vpop.f32.mrb[0].mxu0
      %v4913 = vpop.f32.mrb[0].mxu0
      %v4914 = vadd.f32 0.0, %v4913
      %v4915 = vpop.f32.mrb[0].mxu0
      %4916 = vmatprep.mubr.bf16.mxu0 %v4548
      %4917 = vmatmul.mubr.bf16.gmra.mrb[0].mxu0 %v4546
      %v4918 = vpop.f32.mrb[0].mxu0
      %v4919 = vadd.f32 0.0, %v4918
      %v4920 = vpop.f32.mrb[0].mxu0
      %v4921 = vpop.f32.mrb[0].mxu0
      %v4922 = vadd.f32 0.0, %v4921
      %v4923 = vpop.f32.mrb[0].mxu0
      %4924 = vmatprep.mubr.bf16.mxu0 %v4554
      %4925 = vmatmul.mubr.bf16.gmra.mrb[0].mxu0 %v4552
      %v4926 = vpop.f32.mrb[0].mxu0
      %v4927 = vadd.f32 0.0, %v4926
      %v4928 = vpop.f32.mrb[0].mxu0
      %v4929 = vpop.f32.mrb[0].mxu0
      %v4930 = vadd.f32 0.0, %v4929
      %v4931 = vpop.f32.mrb[0].mxu0
      %4932 = vmatprep.mubr.bf16.mxu0 %v4560
      %4933 = vmatmul.mubr.bf16.gmra.mrb[0].mxu0 %v4558
      %v4934 = vpop.f32.mrb[0].mxu0
      %v4935 = vadd.f32 0.0, %v4934
      %v4936 = vpop.f32.mrb[0].mxu0
      %v4937 = vpop.f32.mrb[0].mxu0
      %v4938 = vadd.f32 0.0, %v4937
      %v4939 = vpop.f32.mrb[0].mxu0
      %4940 = vmatprep.mubr.bf16.mxu0 %v4566
      %4941 = vmatmul.mubr.bf16.gmra.mrb[0].mxu0 %v4564
      %v4942 = vpop.f32.mrb[0].mxu0
      %v4943 = vadd.f32 0.0, %v4942
      %v4944 = vpop.f32.mrb[0].mxu0
      %v4945 = vpop.f32.mrb[0].mxu0
      %v4946 = vadd.f32 0.0, %v4945
      %v4947 = vpop.f32.mrb[0].mxu0
      %4948 = vmatprep.mubr.bf16.mxu0 %v4572
      %4949 = vmatmul.mubr.bf16.gmra.mrb[0].mxu0 %v4570
      %v4950 = vpop.f32.mrb[0].mxu0
      %v4951 = vadd.f32 0.0, %v4950
      %v4952 = vpop.f32.mrb[0].mxu0
      %v4953 = vpop.f32.mrb[0].mxu0
      %v4954 = vadd.f32 0.0, %v4953
      %v4955 = vpop.f32.mrb[0].mxu0
      %4956 = vmatprep.mubr.bf16.mxu0 %v4578
      %4957 = vmatmul.mubr.bf16.gmra.mrb[0].mxu0 %v4576
      %v4958 = vpop.f32.mrb[0].mxu0
      %v4959 = vadd.f32 0.0, %v4958
      %v4960 = vpop.f32.mrb[0].mxu0
      %v4961 = vpop.f32.mrb[0].mxu0
      %v4962 = vadd.f32 0.0, %v4961
      %v4963 = vpop.f32.mrb[0].mxu0
      %4964 = vmatprep.mubr.bf16.mxu0 %v4584
      %4965 = vmatmul.mubr.bf16.gmra.mrb[0].mxu0 %v4582
      %v4966 = vpop.f32.mrb[0].mxu0
      %v4967 = vadd.f32 0.0, %v4966
      %v4968 = vpop.f32.mrb[0].mxu0
      %v4969 = vpop.f32.mrb[0].mxu0
      %v4970 = vadd.f32 0.0, %v4969
      %v4971 = vpop.f32.mrb[0].mxu0
      %4972 = vmatprep.mubr.bf16.mxu0 %v4590
      %4973 = vmatmul.mubr.bf16.gmra.mrb[0].mxu0 %v4588
      %v4974 = vpop.f32.mrb[0].mxu0
      %v4975 = vadd.f32 0.0, %v4974
      %v4976 = vpop.f32.mrb[0].mxu0
      %v4977 = vpop.f32.mrb[0].mxu0
      %v4978 = vadd.f32 0.0, %v4977
      %v4979 = vpop.f32.mrb[0].mxu0
      %4980 = vmatprep.mubr.bf16.mxu0 %v4596
      %4981 = vmatmul.mubr.bf16.gmra.mrb[0].mxu0 %v4594
      %v4982 = vpop.f32.mrb[0].mxu0
      %v4983 = vadd.f32 0.0, %v4982
      %v4984 = vpop.f32.mrb[0].mxu0
      %v4985 = vpop.f32.mrb[0].mxu0
      %v4986 = vadd.f32 0.0, %v4985
      %v4987 = vpop.f32.mrb[0].mxu0
      %4988 = vmatprep.mubr.bf16.mxu0 %v4602
      %4989 = vmatmul.mubr.bf16.gmra.mrb[0].mxu0 %v4600
      %v4990 = vpop.f32.mrb[0].mxu0
      %v4991 = vadd.f32 0.0, %v4990
      %v4992 = vpop.f32.mrb[0].mxu0
      %v4993 = vpop.f32.mrb[0].mxu0
      %v4994 = vadd.f32 0.0, %v4993
      %v4995 = vpop.f32.mrb[0].mxu0
      %4996 = vmatprep.mubr.bf16.mxu0 %v4608
      %4997 = vmatmul.mubr.bf16.gmra.mrb[0].mxu0 %v4606
      %v4998 = vpop.f32.mrb[0].mxu0
      %v4999 = vadd.f32 0.0, %v4998
      %v5000 = vpop.f32.mrb[0].mxu0
      %v5001 = vpop.f32.mrb[0].mxu0
      %v5002 = vadd.f32 0.0, %v5001
      %v5003 = vpop.f32.mrb[0].mxu0
      %5004 = vmatprep.mubr.bf16.mxu0 %v4614
      %5005 = vmatmul.mubr.bf16.gmra.mrb[0].mxu0 %v4612
      %v5006 = vpop.f32.mrb[0].mxu0
      %v5007 = vadd.f32 0.0, %v5006
      %v5008 = vpop.f32.mrb[0].mxu0
      %v5009 = vpop.f32.mrb[0].mxu0
      %v5010 = vadd.f32 0.0, %v5009
      %v5011 = vpop.f32.mrb[0].mxu0
      %5012 = vmatprep.mubr.bf16.mxu0 %v4620
      %5013 = vmatmul.mubr.bf16.gmra.mrb[0].mxu0 %v4618
      %v5014 = vpop.f32.mrb[0].mxu0
      %v5015 = vadd.f32 0.0, %v5014
      %v5016 = vpop.f32.mrb[0].mxu0
      %v5017 = vpop.f32.mrb[0].mxu0
      %v5018 = vadd.f32 0.0, %v5017
      %v5019 = vpop.f32.mrb[0].mxu0
      %5020 = vmatprep.mubr.bf16.mxu0 %v4626
      %5021 = vmatmul.mubr.bf16.gmra.mrb[0].mxu0 %v4624
      %v5022 = vpop.f32.mrb[0].mxu0
      %v5023 = vadd.f32 0.0, %v5022
      %v5024 = vpop.f32.mrb[0].mxu0
      %v5025 = vpop.f32.mrb[0].mxu0
      %v5026 = vadd.f32 0.0, %v5025
      %v5027 = vpop.f32.mrb[0].mxu0
      %5028 = vmatprep.mubr.bf16.mxu0 %v4625
      %5029 = vmatmul.mubr.bf16.gmra.mrb[0].mxu0 %v4623
      %v5030 = vpop.f32.mrb[0].mxu0
      %v5031 = vadd.f32 0.0, %v5030
      %v5032 = vpop.f32.mrb[0].mxu0
      %v5033 = vpop.f32.mrb[0].mxu0
      %v5034 = vpop.f32.mrb[0].mxu0
      %5035 = vdwg.mxu0
      %5036 = vmatprep.subr.bf16.mxu0 0
      %5037 = vmatpush1.bf16.msra.mxu0 %v4804
      %5038 = vmatprep.subr.bf16.mxu0 0
      %5039 = vmatpush1.bf16.msra.mxu0 %v4805
      %5040 = vmatprep.subr.bf16.mxu0 0
      %5041 = vmatpush1.bf16.msra.mxu0 %v4806
      %5042 = vmatprep.subr.bf16.mxu0 0
      %5043 = vmatpush1.bf16.msra.mxu0 %v4807
      %5044 = vmatprep.subr.bf16.mxu0 0
      %5045 = vmatpush1.bf16.msra.mxu0 %v4808
      %5046 = vmatprep.subr.bf16.mxu0 0
      %5047 = vmatpush1.bf16.msra.mxu0 %v4809
      %5048 = vmatprep.subr.bf16.mxu0 0
      %5049 = vmatpush1.bf16.msra.mxu0 %v4810
      %5050 = vmatprep.subr.bf16.mxu0 0
      %5051 = vmatpush1.bf16.msra.mxu0 %v4811
      %5052 = vmatprep.subr.bf16.mxu0 0
      %5053 = vmatpush1.bf16.msra.mxu0 0
      %5054 = vmatprep.subr.bf16.mxu0 0
      %5055 = vmatpush1.bf16.msra.mxu0 0
      %5056 = vmatprep.subr.bf16.mxu0 0
      %5057 = vmatpush1.bf16.msra.mxu0 0
      %5058 = vmatprep.subr.bf16.mxu0 0
      %5059 = vmatpush1.bf16.msra.mxu0 0
      %5060 = vmatprep.subr.bf16.mxu0 0
      %5061 = vmatpush1.bf16.msra.mxu0 0
      %5062 = vmatprep.subr.bf16.mxu0 0
      %5063 = vmatpush1.bf16.msra.mxu0 0
      %5064 = vmatprep.subr.bf16.mxu0 0
      %5065 = vmatpush1.bf16.msra.mxu0 0
      %5066 = vmatprep.subr.bf16.mxu0 0
      %5067 = vmatpush1.bf16.msra.mxu0 0
      %5068 = vmatprep.mubr.bf16.mxu0 0
      %5069 = vmatmul.mubr.bf16.gmra.mrb[0].mxu0 %v4514
      %v5070 = vpop.f32.mrb[0].mxu0
      %v5071 = vadd.f32 %v4871, %v5070
      %v5072 = vpop.f32.mrb[0].mxu0
      %v5073 = vpop.f32.mrb[0].mxu0
      %v5074 = vadd.f32 %v4874, %v5073
      %v5075 = vpop.f32.mrb[0].mxu0
      %5076 = vmatprep.mubr.bf16.mxu0 0
      %5077 = vmatmul.mubr.bf16.gmra.mrb[0].mxu0 %v4520
      %v5078 = vpop.f32.mrb[0].mxu0
      %v5079 = vadd.f32 %v4879, %v5078
      %v5080 = vpop.f32.mrb[0].mxu0
      %v5081 = vpop.f32.mrb[0].mxu0
      %v5082 = vadd.f32 %v4882, %v5081
      %v5083 = vpop.f32.mrb[0].mxu0
      %5084 = vmatprep.mubr.bf16.mxu0 0
      %5085 = vmatmul.mubr.bf16.gmra.mrb[0].mxu0 %v4526
      %v5086 = vpop.f32.mrb[0].mxu0
      %v5087 = vadd.f32 %v4887, %v5086
      %v5088 = vpop.f32.mrb[0].mxu0
      %v5089 = vpop.f32.mrb[0].mxu0
      %v5090 = vadd.f32 %v4890, %v5089
      %v5091 = vpop.f32.mrb[0].mxu0
      %5092 = vmatprep.mubr.bf16.mxu0 0
      %5093 = vmatmul.mubr.bf16.gmra.mrb[0].mxu0 %v4532
      %v5094 = vpop.f32.mrb[0].mxu0
      %v5095 = vadd.f32 %v4895, %v5094
      %v5096 = vpop.f32.mrb[0].mxu0
      %v5097 = vpop.f32.mrb[0].mxu0
      %v5098 = vadd.f32 %v4898, %v5097
      %v5099 = vpop.f32.mrb[0].mxu0
      %5100 = vmatprep.mubr.bf16.mxu0 0
      %5101 = vmatmul.mubr.bf16.gmra.mrb[0].mxu0 %v4538
      %v5102 = vpop.f32.mrb[0].mxu0
      %v5103 = vadd.f32 %v4903, %v5102
      %v5104 = vpop.f32.mrb[0].mxu0
      %v5105 = vpop.f32.mrb[0].mxu0
      %v5106 = vadd.f32 %v4906, %v5105
      %v5107 = vpop.f32.mrb[0].mxu0
      %5108 = vmatprep.mubr.bf16.mxu0 0
      %5109 = vmatmul.mubr.bf16.gmra.mrb[0].mxu0 %v4544
      %v5110 = vpop.f32.mrb[0].mxu0
      %v5111 = vadd.f32 %v4911, %v5110
      %v5112 = vpop.f32.mrb[0].mxu0
      %v5113 = vpop.f32.mrb[0].mxu0
      %v5114 = vadd.f32 %v4914, %v5113
      %v5115 = vpop.f32.mrb[0].mxu0
      %5116 = vmatprep.mubr.bf16.mxu0 0
      %5117 = vmatmul.mubr.bf16.gmra.mrb[0].mxu0 %v4550
      %v5118 = vpop.f32.mrb[0].mxu0
      %v5119 = vadd.f32 %v4919, %v5118
      %v5120 = vpop.f32.mrb[0].mxu0
      %v5121 = vpop.f32.mrb[0].mxu0
      %v5122 = vadd.f32 %v4922, %v5121
      %v5123 = vpop.f32.mrb[0].mxu0
      %5124 = vmatprep.mubr.bf16.mxu0 0
      %5125 = vmatmul.mubr.bf16.gmra.mrb[0].mxu0 %v4556
      %v5126 = vpop.f32.mrb[0].mxu0
      %v5127 = vadd.f32 %v4927, %v5126
      %v5128 = vpop.f32.mrb[0].mxu0
      %v5129 = vpop.f32.mrb[0].mxu0
      %v5130 = vadd.f32 %v4930, %v5129
      %v5131 = vpop.f32.mrb[0].mxu0
      %5132 = vmatprep.mubr.bf16.mxu0 0
      %5133 = vmatmul.mubr.bf16.gmra.mrb[0].mxu0 %v4562
      %v5134 = vpop.f32.mrb[0].mxu0
      %v5135 = vadd.f32 %v4935, %v5134
      %v5136 = vpop.f32.mrb[0].mxu0
      %v5137 = vpop.f32.mrb[0].mxu0
      %v5138 = vadd.f32 %v4938, %v5137
      %v5139 = vpop.f32.mrb[0].mxu0
      %5140 = vmatprep.mubr.bf16.mxu0 0
      %5141 = vmatmul.mubr.bf16.gmra.mrb[0].mxu0 %v4568
      %v5142 = vpop.f32.mrb[0].mxu0
      %v5143 = vadd.f32 %v4943, %v5142
      %v5144 = vpop.f32.mrb[0].mxu0
      %v5145 = vpop.f32.mrb[0].mxu0
      %v5146 = vadd.f32 %v4946, %v5145
      %v5147 = vpop.f32.mrb[0].mxu0
      %5148 = vmatprep.mubr.bf16.mxu0 0
      %5149 = vmatmul.mubr.bf16.gmra.mrb[0].mxu0 %v4574
      %v5150 = vpop.f32.mrb[0].mxu0
      %v5151 = vadd.f32 %v4951, %v5150
      %v5152 = vpop.f32.mrb[0].mxu0
      %v5153 = vpop.f32.mrb[0].mxu0
      %v5154 = vadd.f32 %v4954, %v5153
      %v5155 = vpop.f32.mrb[0].mxu0
      %5156 = vmatprep.mubr.bf16.mxu0 0
      %5157 = vmatmul.mubr.bf16.gmra.mrb[0].mxu0 %v4580
      %v5158 = vpop.f32.mrb[0].mxu0
      %v5159 = vadd.f32 %v4959, %v5158
      %v5160 = vpop.f32.mrb[0].mxu0
      %v5161 = vpop.f32.mrb[0].mxu0
      %v5162 = vadd.f32 %v4962, %v5161
      %v5163 = vpop.f32.mrb[0].mxu0
      %5164 = vmatprep.mubr.bf16.mxu0 0
      %5165 = vmatmul.mubr.bf16.gmra.mrb[0].mxu0 %v4586
      %v5166 = vpop.f32.mrb[0].mxu0
      %v5167 = vadd.f32 %v4967, %v5166
      %v5168 = vpop.f32.mrb[0].mxu0
      %v5169 = vpop.f32.mrb[0].mxu0
      %v5170 = vadd.f32 %v4970, %v5169
      %v5171 = vpop.f32.mrb[0].mxu0
      %5172 = vmatprep.mubr.bf16.mxu0 0
      %5173 = vmatmul.mubr.bf16.gmra.mrb[0].mxu0 %v4592
      %v5174 = vpop.f32.mrb[0].mxu0
      %v5175 = vadd.f32 %v4975, %v5174
      %v5176 = vpop.f32.mrb[0].mxu0
      %v5177 = vpop.f32.mrb[0].mxu0
      %v5178 = vadd.f32 %v4978, %v5177
      %v5179 = vpop.f32.mrb[0].mxu0
      %5180 = vmatprep.mubr.bf16.mxu0 0
      %5181 = vmatmul.mubr.bf16.gmra.mrb[0].mxu0 %v4598
      %v5182 = vpop.f32.mrb[0].mxu0
      %v5183 = vadd.f32 %v4983, %v5182
      %v5184 = vpop.f32.mrb[0].mxu0
      %v5185 = vpop.f32.mrb[0].mxu0
      %v5186 = vadd.f32 %v4986, %v5185
      %v5187 = vpop.f32.mrb[0].mxu0
      %5188 = vmatprep.mubr.bf16.mxu0 0
      %5189 = vmatmul.mubr.bf16.gmra.mrb[0].mxu0 %v4604
      %v5190 = vpop.f32.mrb[0].mxu0
      %v5191 = vadd.f32 %v4991, %v5190
      %v5192 = vpop.f32.mrb[0].mxu0
      %v5193 = vpop.f32.mrb[0].mxu0
      %v5194 = vadd.f32 %v4994, %v5193
      %v5195 = vpop.f32.mrb[0].mxu0
      %5196 = vmatprep.mubr.bf16.mxu0 0
      %5197 = vmatmul.mubr.bf16.gmra.mrb[0].mxu0 %v4610
      %v5198 = vpop.f32.mrb[0].mxu0
      %v5199 = vadd.f32 %v4999, %v5198
      %v5200 = vpop.f32.mrb[0].mxu0
      %v5201 = vpop.f32.mrb[0].mxu0
      %v5202 = vadd.f32 %v5002, %v5201
      %v5203 = vpop.f32.mrb[0].mxu0
      %5204 = vmatprep.mubr.bf16.mxu0 0
      %5205 = vmatmul.mubr.bf16.gmra.mrb[0].mxu0 %v4616
      %v5206 = vpop.f32.mrb[0].mxu0
      %v5207 = vadd.f32 %v5007, %v5206
      %v5208 = vpop.f32.mrb[0].mxu0
      %v5209 = vpop.f32.mrb[0].mxu0
      %v5210 = vadd.f32 %v5010, %v5209
      %v5211 = vpop.f32.mrb[0].mxu0
      %5212 = vmatprep.mubr.bf16.mxu0 0
      %5213 = vmatmul.mubr.bf16.gmra.mrb[0].mxu0 %v4622
      %v5214 = vpop.f32.mrb[0].mxu0
      %v5215 = vadd.f32 %v5015, %v5214
      %v5216 = vpop.f32.mrb[0].mxu0
      %v5217 = vpop.f32.mrb[0].mxu0
      %v5218 = vadd.f32 %v5018, %v5217
      %v5219 = vpop.f32.mrb[0].mxu0
      %5220 = vmatprep.mubr.bf16.mxu0 0
      %5221 = vmatmul.mubr.bf16.gmra.mrb[0].mxu0 %v4628
      %v5222 = vpop.f32.mrb[0].mxu0
      %v5223 = vadd.f32 %v5023, %v5222
      %v5224 = vpop.f32.mrb[0].mxu0
      %v5225 = vpop.f32.mrb[0].mxu0
      %v5226 = vadd.f32 %v5026, %v5225
      %v5227 = vpop.f32.mrb[0].mxu0
      %5228 = vmatprep.mubr.bf16.mxu0 0
      %5229 = vmatmul.mubr.bf16.gmra.mrb[0].mxu0 %v4627
      %v5230 = vpop.f32.mrb[0].mxu0
      %v5231 = vadd.f32 %v5031, %v5230
      %v5232 = vpop.f32.mrb[0].mxu0
      %v5233 = vpop.f32.mrb[0].mxu0
      %v5234 = vpop.f32.mrb[0].mxu0
      %5235 = vdwg.mxu0
      %v5236 = vadd.f32 %v3941, %v5071
      %v5237 = vadd.f32 %v3944, %v5074
      %v5238 = vadd.f32 %v3949, %v5079
      %v5239 = vadd.f32 %v3952, %v5082
      %v5240 = vadd.f32 %v3957, %v5087
      %v5241 = vadd.f32 %v3960, %v5090
      %v5242 = vadd.f32 %v3965, %v5095
      %v5243 = vadd.f32 %v3968, %v5098
      %v5244 = vadd.f32 %v3973, %v5103
      %v5245 = vadd.f32 %v3976, %v5106
      %v5246 = vadd.f32 %v3981, %v5111
      %v5247 = vadd.f32 %v3984, %v5114
      %v5248 = vadd.f32 %v3989, %v5119
      %v5249 = vadd.f32 %v3992, %v5122
      %v5250 = vadd.f32 %v3997, %v5127
      %v5251 = vadd.f32 %v4000, %v5130
      %v5252 = vadd.f32 %v4005, %v5135
      %v5253 = vadd.f32 %v4008, %v5138
      %v5254 = vadd.f32 %v4013, %v5143
      %v5255 = vadd.f32 %v4016, %v5146
      %v5256 = vadd.f32 %v4021, %v5151
      %v5257 = vadd.f32 %v4024, %v5154
      %v5258 = vadd.f32 %v4029, %v5159
      %v5259 = vadd.f32 %v4032, %v5162
      %v5260 = vadd.f32 %v4037, %v5167
      %v5261 = vadd.f32 %v4040, %v5170
      %v5262 = vadd.f32 %v4045, %v5175
      %v5263 = vadd.f32 %v4048, %v5178
      %v5264 = vadd.f32 %v4053, %v5183
      %v5265 = vadd.f32 %v4056, %v5186
      %v5266 = vadd.f32 %v4061, %v5191
      %v5267 = vadd.f32 %v4064, %v5194
      %v5268 = vadd.f32 %v4069, %v5199
      %v5269 = vadd.f32 %v4072, %v5202
      %v5270 = vadd.f32 %v4077, %v5207
      %v5271 = vadd.f32 %v4080, %v5210
      %v5272 = vadd.f32 %v4085, %v5215
      %v5273 = vadd.f32 %v4088, %v5218
      %v5274 = vadd.f32 %v4093, %v5223
      %v5275 = vadd.f32 %v4096, %v5226
      %v5276 = vadd.f32 %v4101, %v5231
      %v5277 = vld [vmem:[%s6] sm:$0x1]
      %v5279 = vlaneseq
      %v5280 = vshrl.u32 %v5279, 7
      %v5281 = vsub.s32 0, %v5280
      %v5282 = vrot.slane %v5277, %v5281
      %v5284 = vadd.f32 %v5236, %v5282
      %v5285 = vadd.f32 %v5237, %v5282
      %v5286 = vadd.f32 %v5238, %v5282
      %v5287 = vadd.f32 %v5239, %v5282
      %v5288 = vadd.f32 %v5240, %v5282
      %v5289 = vadd.f32 %v5241, %v5282
      %v5290 = vadd.f32 %v5242, %v5282
      %v5291 = vadd.f32 %v5243, %v5282
      %v5292 = vadd.f32 %v5244, %v5282
      %v5293 = vadd.f32 %v5245, %v5282
      %v5294 = vadd.f32 %v5246, %v5282
      %v5295 = vadd.f32 %v5247, %v5282
      %v5296 = vadd.f32 %v5248, %v5282
      %v5297 = vadd.f32 %v5249, %v5282
      %v5298 = vadd.f32 %v5250, %v5282
      %v5299 = vadd.f32 %v5251, %v5282
      %v5300 = vadd.f32 %v5252, %v5282
      %v5301 = vadd.f32 %v5253, %v5282
      %v5302 = vadd.f32 %v5254, %v5282
      %v5303 = vadd.f32 %v5255, %v5282
      %v5304 = vadd.f32 %v5256, %v5282
      %v5305 = vadd.f32 %v5257, %v5282
      %v5306 = vadd.f32 %v5258, %v5282
      %v5307 = vadd.f32 %v5259, %v5282
      %v5308 = vadd.f32 %v5260, %v5282
      %v5309 = vadd.f32 %v5261, %v5282
      %v5310 = vadd.f32 %v5262, %v5282
      %v5311 = vadd.f32 %v5263, %v5282
      %v5312 = vadd.f32 %v5264, %v5282
      %v5313 = vadd.f32 %v5265, %v5282
      %v5314 = vadd.f32 %v5266, %v5282
      %v5315 = vadd.f32 %v5267, %v5282
      %v5316 = vadd.f32 %v5268, %v5282
      %v5317 = vadd.f32 %v5269, %v5282
      %v5318 = vadd.f32 %v5270, %v5282
      %v5319 = vadd.f32 %v5271, %v5282
      %v5320 = vadd.f32 %v5272, %v5282
      %v5321 = vadd.f32 %v5273, %v5282
      %v5322 = vadd.f32 %v5274, %v5282
      %v5323 = vadd.f32 %v5275, %v5282
      %v5324 = vadd.f32 %v5276, %v5282
      %v5325 = vmax.f32 %v5284, 0.0
      %v5326 = vmax.f32 %v5285, 0.0
      %v5327 = vmax.f32 %v5286, 0.0
      %v5328 = vmax.f32 %v5287, 0.0
      %v5329 = vmax.f32 %v5288, 0.0
      %v5330 = vmax.f32 %v5289, 0.0
      %v5331 = vmax.f32 %v5290, 0.0
      %v5332 = vmax.f32 %v5291, 0.0
      %v5333 = vmax.f32 %v5292, 0.0
      %v5334 = vmax.f32 %v5293, 0.0
      %v5335 = vmax.f32 %v5294, 0.0
      %v5336 = vmax.f32 %v5295, 0.0
      %v5337 = vmax.f32 %v5296, 0.0
      %v5338 = vmax.f32 %v5297, 0.0
      %v5339 = vmax.f32 %v5298, 0.0
      %v5340 = vmax.f32 %v5299, 0.0
      %v5341 = vmax.f32 %v5300, 0.0
      %v5342 = vmax.f32 %v5301, 0.0
      %v5343 = vmax.f32 %v5302, 0.0
      %v5344 = vmax.f32 %v5303, 0.0
      %v5345 = vmax.f32 %v5304, 0.0
      %v5346 = vmax.f32 %v5305, 0.0
      %v5347 = vmax.f32 %v5306, 0.0
      %v5348 = vmax.f32 %v5307, 0.0
      %v5349 = vmax.f32 %v5308, 0.0
      %v5350 = vmax.f32 %v5309, 0.0
      %v5351 = vmax.f32 %v5310, 0.0
      %v5352 = vmax.f32 %v5311, 0.0
      %v5353 = vmax.f32 %v5312, 0.0
      %v5354 = vmax.f32 %v5313, 0.0
      %v5355 = vmax.f32 %v5314, 0.0
      %v5356 = vmax.f32 %v5315, 0.0
      %v5357 = vmax.f32 %v5316, 0.0
      %v5358 = vmax.f32 %v5317, 0.0
      %v5359 = vmax.f32 %v5318, 0.0
      %v5360 = vmax.f32 %v5319, 0.0
      %v5361 = vmax.f32 %v5320, 0.0
      %v5362 = vmax.f32 %v5321, 0.0
      %v5363 = vmax.f32 %v5322, 0.0
      %v5364 = vmax.f32 %v5323, 0.0
      %v5365 = vmax.f32 %v5324, 0.0
      %v5366 = vpack.c.bf16 %v5326, %v5325
      %v5367 = vpack.c.bf16 %v5328, %v5327
      %v5368 = vpack.c.bf16 %v5330, %v5329
      %v5369 = vpack.c.bf16 %v5332, %v5331
      %v5370 = vpack.c.bf16 %v5334, %v5333
      %v5371 = vpack.c.bf16 %v5336, %v5335
      %v5372 = vpack.c.bf16 %v5338, %v5337
      %v5373 = vpack.c.bf16 %v5340, %v5339
      %v5374 = vpack.c.bf16 %v5342, %v5341
      %v5375 = vpack.c.bf16 %v5344, %v5343
      %v5376 = vpack.c.bf16 %v5346, %v5345
      %v5377 = vpack.c.bf16 %v5348, %v5347
      %v5378 = vpack.c.bf16 %v5350, %v5349
      %v5379 = vpack.c.bf16 %v5352, %v5351
      %v5380 = vpack.c.bf16 %v5354, %v5353
      %v5381 = vpack.c.bf16 %v5356, %v5355
      %v5382 = vpack.c.bf16 %v5358, %v5357
      %v5383 = vpack.c.bf16 %v5360, %v5359
      %v5384 = vpack.c.bf16 %v5362, %v5361
      %v5385 = vpack.c.bf16 %v5364, %v5363
      %v5386 = vpack.c.bf16 %v5365, %v5365
      %v5387 = vld [vmem:[%s7] sm:$0xf]
      %v5388 = vld [vmem:[%s7 + $0x4] sm:$0xf]
      %v5389 = vld [vmem:[%s7 + $0x8] sm:$0xf]
      %v5390 = vld [vmem:[%s7 + $0xc] sm:$0xf]
      %v5391 = vld [vmem:[%s7 + $0x10] sm:$0xf]
      %v5392 = vld [vmem:[%s7 + $0x14] sm:$0xf]
      %v5393 = vld [vmem:[%s7 + $0x18] sm:$0xf]
      %v5394 = vld [vmem:[%s7 + $0x1c] sm:$0xf]
      %v5395 = vld [vmem:[%s7 + $0x20] sm:$0xf]
      %v5396 = vld [vmem:[%s7 + $0x24] sm:$0xf]
      %v5397 = vld [vmem:[%s7 + $0x28] sm:$0xf]
      %v5398 = vld [vmem:[%s7 + $0x2c] sm:$0xf]
      %v5399 = vld [vmem:[%s7 + $0x30] sm:$0xf]
      %v5400 = vld [vmem:[%s7 + $0x34] sm:$0xf]
      %v5401 = vld [vmem:[%s7 + $0x38] sm:$0xf]
      %v5402 = vld [vmem:[%s7 + $0x3c] sm:$0xf]
      %v5403 = vld [vmem:[%s8] sm:$0x3]
      %v5404 = vlaneseq
      %v5405 = vshrl.u32 %v5404, 7
      %v5406 = vsub.s32 0, %v5405
      %v5407 = vrot.slane %v5403, %v5406
      %v5408 = vmul.f32 %v402, %v5407
      %v5409 = vmul.f32 %v403, %v5407
      %v5410 = vmul.f32 %v404, %v5407
      %v5411 = vmul.f32 %v405, %v5407
      %v5412 = vmul.f32 %v406, %v5407
      %v5413 = vmul.f32 %v407, %v5407
      %v5414 = vmul.f32 %v408, %v5407
      %v5415 = vmul.f32 %v409, %v5407
      %v5416 = vmul.f32 %v410, %v5407
      %v5417 = vmul.f32 %v411, %v5407
      %v5418 = vmul.f32 %v412, %v5407
      %v5419 = vmul.f32 %v413, %v5407
      %v5420 = vmul.f32 %v414, %v5407
      %v5421 = vmul.f32 %v415, %v5407
      %v5422 = vmul.f32 %v416, %v5407
      %v5423 = vmul.f32 %v417, %v5407
      %v5424 = vmul.f32 %v418, %v5407
      %v5425 = vmul.f32 %v419, %v5407
      %v5426 = vmul.f32 %v420, %v5407
      %v5427 = vmul.f32 %v421, %v5407
      %v5428 = vmul.f32 %v422, %v5407
      %v5429 = vmul.f32 %v423, %v5407
      %v5430 = vmul.f32 %v424, %v5407
      %v5431 = vmul.f32 %v425, %v5407
      %v5432 = vmul.f32 %v426, %v5407
      %v5433 = vmul.f32 %v427, %v5407
      %v5434 = vmul.f32 %v428, %v5407
      %v5435 = vmul.f32 %v429, %v5407
      %v5436 = vmul.f32 %v430, %v5407
      %v5437 = vmul.f32 %v431, %v5407
      %v5438 = vmul.f32 %v432, %v5407
      %v5439 = vmul.f32 %v433, %v5407
      %v5440 = vmul.f32 %v434, %v5407
      %v5441 = vmul.f32 %v435, %v5407
      %v5442 = vmul.f32 %v436, %v5407
      %v5443 = vmul.f32 %v437, %v5407
      %v5444 = vmul.f32 %v438, %v5407
      %v5445 = vmul.f32 %v439, %v5407
      %v5446 = vmul.f32 %v440, %v5407
      %v5447 = vmul.f32 %v441, %v5407
      %v5448 = vmul.f32 %v442, %v5407
      %v5449 = vlaneseq
      %v5450 = vshrl.u32 %v5449, 7
      %v5451 = vsub.s32 1, %v5450
      %v5452 = vrot.slane %v5403, %v5451
      %v5453 = vadd.f32 %v5408, %v5452
      %v5454 = vadd.f32 %v5409, %v5452
      %v5455 = vadd.f32 %v5410, %v5452
      %v5456 = vadd.f32 %v5411, %v5452
      %v5457 = vadd.f32 %v5412, %v5452
      %v5458 = vadd.f32 %v5413, %v5452
      %v5459 = vadd.f32 %v5414, %v5452
      %v5460 = vadd.f32 %v5415, %v5452
      %v5461 = vadd.f32 %v5416, %v5452
      %v5462 = vadd.f32 %v5417, %v5452
      %v5463 = vadd.f32 %v5418, %v5452
      %v5464 = vadd.f32 %v5419, %v5452
      %v5465 = vadd.f32 %v5420, %v5452
      %v5466 = vadd.f32 %v5421, %v5452
      %v5467 = vadd.f32 %v5422, %v5452
      %v5468 = vadd.f32 %v5423, %v5452
      %v5469 = vadd.f32 %v5424, %v5452
      %v5470 = vadd.f32 %v5425, %v5452
      %v5471 = vadd.f32 %v5426, %v5452
      %v5472 = vadd.f32 %v5427, %v5452
      %v5473 = vadd.f32 %v5428, %v5452
      %v5474 = vadd.f32 %v5429, %v5452
      %v5475 = vadd.f32 %v5430, %v5452
      %v5476 = vadd.f32 %v5431, %v5452
      %v5477 = vadd.f32 %v5432, %v5452
      %v5478 = vadd.f32 %v5433, %v5452
      %v5479 = vadd.f32 %v5434, %v5452
      %v5480 = vadd.f32 %v5435, %v5452
      %v5481 = vadd.f32 %v5436, %v5452
      %v5482 = vadd.f32 %v5437, %v5452
      %v5483 = vadd.f32 %v5438, %v5452
      %v5484 = vadd.f32 %v5439, %v5452
      %v5485 = vadd.f32 %v5440, %v5452
      %v5486 = vadd.f32 %v5441, %v5452
      %v5487 = vadd.f32 %v5442, %v5452
      %v5488 = vadd.f32 %v5443, %v5452
      %v5489 = vadd.f32 %v5444, %v5452
      %v5490 = vadd.f32 %v5445, %v5452
      %v5491 = vadd.f32 %v5446, %v5452
      %v5492 = vadd.f32 %v5447, %v5452
      %v5493 = vadd.f32 %v5448, %v5452
      %v5494 = vmax.f32 %v5453, 0.0
      %v5495 = vmax.f32 %v5454, 0.0
      %v5496 = vmax.f32 %v5455, 0.0
      %v5497 = vmax.f32 %v5456, 0.0
      %v5498 = vmax.f32 %v5457, 0.0
      %v5499 = vmax.f32 %v5458, 0.0
      %v5500 = vmax.f32 %v5459, 0.0
      %v5501 = vmax.f32 %v5460, 0.0
      %v5502 = vmax.f32 %v5461, 0.0
      %v5503 = vmax.f32 %v5462, 0.0
      %v5504 = vmax.f32 %v5463, 0.0
      %v5505 = vmax.f32 %v5464, 0.0
      %v5506 = vmax.f32 %v5465, 0.0
      %v5507 = vmax.f32 %v5466, 0.0
      %v5508 = vmax.f32 %v5467, 0.0
      %v5509 = vmax.f32 %v5468, 0.0
      %v5510 = vmax.f32 %v5469, 0.0
      %v5511 = vmax.f32 %v5470, 0.0
      %v5512 = vmax.f32 %v5471, 0.0
      %v5513 = vmax.f32 %v5472, 0.0
      %v5514 = vmax.f32 %v5473, 0.0
      %v5515 = vmax.f32 %v5474, 0.0
      %v5516 = vmax.f32 %v5475, 0.0
      %v5517 = vmax.f32 %v5476, 0.0
      %v5518 = vmax.f32 %v5477, 0.0
      %v5519 = vmax.f32 %v5478, 0.0
      %v5520 = vmax.f32 %v5479, 0.0
      %v5521 = vmax.f32 %v5480, 0.0
      %v5522 = vmax.f32 %v5481, 0.0
      %v5523 = vmax.f32 %v5482, 0.0
      %v5524 = vmax.f32 %v5483, 0.0
      %v5525 = vmax.f32 %v5484, 0.0
      %v5526 = vmax.f32 %v5485, 0.0
      %v5527 = vmax.f32 %v5486, 0.0
      %v5528 = vmax.f32 %v5487, 0.0
      %v5529 = vmax.f32 %v5488, 0.0
      %v5530 = vmax.f32 %v5489, 0.0
      %v5531 = vmax.f32 %v5490, 0.0
      %v5532 = vmax.f32 %v5491, 0.0
      %v5533 = vmax.f32 %v5492, 0.0
      %v5534 = vmax.f32 %v5493, 0.0
      %v5535 = vpack.c.bf16 %v5495, %v5494
      %v5536 = vpack.c.bf16 %v5497, %v5496
      %v5537 = vpack.c.bf16 %v5499, %v5498
      %v5538 = vpack.c.bf16 %v5501, %v5500
      %v5539 = vpack.c.bf16 %v5503, %v5502
      %v5540 = vpack.c.bf16 %v5505, %v5504
      %v5541 = vpack.c.bf16 %v5507, %v5506
      %v5542 = vpack.c.bf16 %v5509, %v5508
      %v5543 = vpack.c.bf16 %v5511, %v5510
      %v5544 = vpack.c.bf16 %v5513, %v5512
      %v5545 = vpack.c.bf16 %v5515, %v5514
      %v5546 = vpack.c.bf16 %v5517, %v5516
      %v5547 = vpack.c.bf16 %v5519, %v5518
      %v5548 = vpack.c.bf16 %v5521, %v5520
      %v5549 = vpack.c.bf16 %v5523, %v5522
      %v5550 = vpack.c.bf16 %v5525, %v5524
      %v5551 = vpack.c.bf16 %v5527, %v5526
      %v5552 = vpack.c.bf16 %v5529, %v5528
      %v5553 = vpack.c.bf16 %v5531, %v5530
      %v5554 = vpack.c.bf16 %v5533, %v5532
      %v5555 = vpack.c.bf16 %v5534, %v5534
      %v5556 = vld [vmem:[%s9] sm:$0xf]
      %v5557 = vld [vmem:[%s9 + $0x4] sm:$0xf]
      %v5558 = vld [vmem:[%s9 + $0x8] sm:$0xf]
      %v5559 = vld [vmem:[%s9 + $0xc] sm:$0xf]
      %v5560 = vld [vmem:[%s9 + $0x10] sm:$0xf]
      %v5561 = vld [vmem:[%s9 + $0x14] sm:$0xf]
      %v5562 = vld [vmem:[%s9 + $0x18] sm:$0xf]
      %v5563 = vld [vmem:[%s9 + $0x1c] sm:$0xf]
      %v5564 = vld [vmem:[%s9 + $0x20] sm:$0xf]
      %v5565 = vld [vmem:[%s9 + $0x24] sm:$0xf]
      %v5566 = vld [vmem:[%s9 + $0x28] sm:$0xf]
      %v5567 = vld [vmem:[%s9 + $0x2c] sm:$0xf]
      %v5568 = vld [vmem:[%s9 + $0x30] sm:$0xf]
      %v5569 = vld [vmem:[%s9 + $0x34] sm:$0xf]
      %v5570 = vld [vmem:[%s9 + $0x38] sm:$0xf]
      %v5571 = vld [vmem:[%s9 + $0x3c] sm:$0xf]
      %v5588 = vunpack.c.l.b16 %v5556
      %v5589 = vunpack.c.l.b16 %v5557
      %v5590 = vunpack.c.l.b16 %v5558
      %v5591 = vunpack.c.l.b16 %v5559
      %v5592 = vunpack.c.l.b16 %v5560
      %v5593 = vunpack.c.l.b16 %v5561
      %v5594 = vunpack.c.l.b16 %v5562
      %v5595 = vunpack.c.l.b16 %v5563
      %v5596 = vunpack.c.l.b16 %v5564
      %v5597 = vunpack.c.l.b16 %v5565
      %v5598 = vunpack.c.l.b16 %v5566
      %v5599 = vunpack.c.l.b16 %v5567
      %v5600 = vunpack.c.l.b16 %v5568
      %v5601 = vunpack.c.l.b16 %v5569
      %v5602 = vunpack.c.l.b16 %v5570
      %v5603 = vunpack.c.l.b16 %v5571
      %v5604 = vpack.c.b16 %v5589, %v5588
      %v5605 = vpack.c.b16 %v5591, %v5590
      %v5606 = vpack.c.b16 %v5593, %v5592
      %v5607 = vpack.c.b16 %v5595, %v5594
      %v5608 = vpack.c.b16 %v5597, %v5596
      %v5609 = vpack.c.b16 %v5599, %v5598
      %v5610 = vpack.c.b16 %v5601, %v5600
      %v5611 = vpack.c.b16 %v5603, %v5602
      %5620 = vmatprep.subr.bf16.mxu0 0
      %5621 = vmatpush1.bf16.msra.mxu0 %v5604
      %5622 = vmatprep.subr.bf16.mxu0 0
      %5623 = vmatpush1.bf16.msra.mxu0 %v5605
      %5624 = vmatprep.subr.bf16.mxu0 0
      %5625 = vmatpush1.bf16.msra.mxu0 %v5606
      %5626 = vmatprep.subr.bf16.mxu0 0
      %5627 = vmatpush1.bf16.msra.mxu0 %v5607
      %5628 = vmatprep.subr.bf16.mxu0 0
      %5629 = vmatpush1.bf16.msra.mxu0 %v5608
      %5630 = vmatprep.subr.bf16.mxu0 0
      %5631 = vmatpush1.bf16.msra.mxu0 %v5609
      %5632 = vmatprep.subr.bf16.mxu0 0
      %5633 = vmatpush1.bf16.msra.mxu0 %v5610
      %5634 = vmatprep.subr.bf16.mxu0 0
      %5635 = vmatpush1.bf16.msra.mxu0 %v5611
      %5636 = vmatprep.subr.bf16.mxu0 0
      %5637 = vmatpush1.bf16.msra.mxu0 0
      %5638 = vmatprep.subr.bf16.mxu0 0
      %5639 = vmatpush1.bf16.msra.mxu0 0
      %5640 = vmatprep.subr.bf16.mxu0 0
      %5641 = vmatpush1.bf16.msra.mxu0 0
      %5642 = vmatprep.subr.bf16.mxu0 0
      %5643 = vmatpush1.bf16.msra.mxu0 0
      %5644 = vmatprep.subr.bf16.mxu0 0
      %5645 = vmatpush1.bf16.msra.mxu0 0
      %5646 = vmatprep.subr.bf16.mxu0 0
      %5647 = vmatpush1.bf16.msra.mxu0 0
      %5648 = vmatprep.subr.bf16.mxu0 0
      %5649 = vmatpush1.bf16.msra.mxu0 0
      %5650 = vmatprep.subr.bf16.mxu0 0
      %5651 = vmatpush1.bf16.msra.mxu0 0
      %5652 = vmatprep.mubr.bf16.mxu0 0
      %5653 = vmatmul.mubr.bf16.gmra.mrb[0].mxu0 %v5535
      %v5654 = vpop.f32.mrb[0].mxu0
      %v5655 = vadd.f32 0.0, %v5654
      %v5656 = vpop.f32.mrb[0].mxu0
      %v5657 = vpop.f32.mrb[0].mxu0
      %v5658 = vadd.f32 0.0, %v5657
      %v5659 = vpop.f32.mrb[0].mxu0
      %5660 = vmatprep.mubr.bf16.mxu0 0
      %5661 = vmatmul.mubr.bf16.gmra.mrb[0].mxu0 %v5536
      %v5662 = vpop.f32.mrb[0].mxu0
      %v5663 = vadd.f32 0.0, %v5662
      %v5664 = vpop.f32.mrb[0].mxu0
      %v5665 = vpop.f32.mrb[0].mxu0
      %v5666 = vadd.f32 0.0, %v5665
      %v5667 = vpop.f32.mrb[0].mxu0
      %5668 = vmatprep.mubr.bf16.mxu0 0
      %5669 = vmatmul.mubr.bf16.gmra.mrb[0].mxu0 %v5537
      %v5670 = vpop.f32.mrb[0].mxu0
      %v5671 = vadd.f32 0.0, %v5670
      %v5672 = vpop.f32.mrb[0].mxu0
      %v5673 = vpop.f32.mrb[0].mxu0
      %v5674 = vadd.f32 0.0, %v5673
      %v5675 = vpop.f32.mrb[0].mxu0
      %5676 = vmatprep.mubr.bf16.mxu0 0
      %5677 = vmatmul.mubr.bf16.gmra.mrb[0].mxu0 %v5538
      %v5678 = vpop.f32.mrb[0].mxu0
      %v5679 = vadd.f32 0.0, %v5678
      %v5680 = vpop.f32.mrb[0].mxu0
      %v5681 = vpop.f32.mrb[0].mxu0
      %v5682 = vadd.f32 0.0, %v5681
      %v5683 = vpop.f32.mrb[0].mxu0
      %5684 = vmatprep.mubr.bf16.mxu0 0
      %5685 = vmatmul.mubr.bf16.gmra.mrb[0].mxu0 %v5539
      %v5686 = vpop.f32.mrb[0].mxu0
      %v5687 = vadd.f32 0.0, %v5686
      %v5688 = vpop.f32.mrb[0].mxu0
      %v5689 = vpop.f32.mrb[0].mxu0
      %v5690 = vadd.f32 0.0, %v5689
      %v5691 = vpop.f32.mrb[0].mxu0
      %5692 = vmatprep.mubr.bf16.mxu0 0
      %5693 = vmatmul.mubr.bf16.gmra.mrb[0].mxu0 %v5540
      %v5694 = vpop.f32.mrb[0].mxu0
      %v5695 = vadd.f32 0.0, %v5694
      %v5696 = vpop.f32.mrb[0].mxu0
      %v5697 = vpop.f32.mrb[0].mxu0
      %v5698 = vadd.f32 0.0, %v5697
      %v5699 = vpop.f32.mrb[0].mxu0
      %5700 = vmatprep.mubr.bf16.mxu0 0
      %5701 = vmatmul.mubr.bf16.gmra.mrb[0].mxu0 %v5541
      %v5702 = vpop.f32.mrb[0].mxu0
      %v5703 = vadd.f32 0.0, %v5702
      %v5704 = vpop.f32.mrb[0].mxu0
      %v5705 = vpop.f32.mrb[0].mxu0
      %v5706 = vadd.f32 0.0, %v5705
      %v5707 = vpop.f32.mrb[0].mxu0
      %5708 = vmatprep.mubr.bf16.mxu0 0
      %5709 = vmatmul.mubr.bf16.gmra.mrb[0].mxu0 %v5542
      %v5710 = vpop.f32.mrb[0].mxu0
      %v5711 = vadd.f32 0.0, %v5710
      %v5712 = vpop.f32.mrb[0].mxu0
      %v5713 = vpop.f32.mrb[0].mxu0
      %v5714 = vadd.f32 0.0, %v5713
      %v5715 = vpop.f32.mrb[0].mxu0
      %5716 = vmatprep.mubr.bf16.mxu0 0
      %5717 = vmatmul.mubr.bf16.gmra.mrb[0].mxu0 %v5543
      %v5718 = vpop.f32.mrb[0].mxu0
      %v5719 = vadd.f32 0.0, %v5718
      %v5720 = vpop.f32.mrb[0].mxu0
      %v5721 = vpop.f32.mrb[0].mxu0
      %v5722 = vadd.f32 0.0, %v5721
      %v5723 = vpop.f32.mrb[0].mxu0
      %5724 = vmatprep.mubr.bf16.mxu0 0
      %5725 = vmatmul.mubr.bf16.gmra.mrb[0].mxu0 %v5544
      %v5726 = vpop.f32.mrb[0].mxu0
      %v5727 = vadd.f32 0.0, %v5726
      %v5728 = vpop.f32.mrb[0].mxu0
      %v5729 = vpop.f32.mrb[0].mxu0
      %v5730 = vadd.f32 0.0, %v5729
      %v5731 = vpop.f32.mrb[0].mxu0
      %5732 = vmatprep.mubr.bf16.mxu0 0
      %5733 = vmatmul.mubr.bf16.gmra.mrb[0].mxu0 %v5545
      %v5734 = vpop.f32.mrb[0].mxu0
      %v5735 = vadd.f32 0.0, %v5734
      %v5736 = vpop.f32.mrb[0].mxu0
      %v5737 = vpop.f32.mrb[0].mxu0
      %v5738 = vadd.f32 0.0, %v5737
      %v5739 = vpop.f32.mrb[0].mxu0
      %5740 = vmatprep.mubr.bf16.mxu0 0
      %5741 = vmatmul.mubr.bf16.gmra.mrb[0].mxu0 %v5546
      %v5742 = vpop.f32.mrb[0].mxu0
      %v5743 = vadd.f32 0.0, %v5742
      %v5744 = vpop.f32.mrb[0].mxu0
      %v5745 = vpop.f32.mrb[0].mxu0
      %v5746 = vadd.f32 0.0, %v5745
      %v5747 = vpop.f32.mrb[0].mxu0
      %5748 = vmatprep.mubr.bf16.mxu0 0
      %5749 = vmatmul.mubr.bf16.gmra.mrb[0].mxu0 %v5547
      %v5750 = vpop.f32.mrb[0].mxu0
      %v5751 = vadd.f32 0.0, %v5750
      %v5752 = vpop.f32.mrb[0].mxu0
      %v5753 = vpop.f32.mrb[0].mxu0
      %v5754 = vadd.f32 0.0, %v5753
      %v5755 = vpop.f32.mrb[0].mxu0
      %5756 = vmatprep.mubr.bf16.mxu0 0
      %5757 = vmatmul.mubr.bf16.gmra.mrb[0].mxu0 %v5548
      %v5758 = vpop.f32.mrb[0].mxu0
      %v5759 = vadd.f32 0.0, %v5758
      %v5760 = vpop.f32.mrb[0].mxu0
      %v5761 = vpop.f32.mrb[0].mxu0
      %v5762 = vadd.f32 0.0, %v5761
      %v5763 = vpop.f32.mrb[0].mxu0
      %5764 = vmatprep.mubr.bf16.mxu0 0
      %5765 = vmatmul.mubr.bf16.gmra.mrb[0].mxu0 %v5549
      %v5766 = vpop.f32.mrb[0].mxu0
      %v5767 = vadd.f32 0.0, %v5766
      %v5768 = vpop.f32.mrb[0].mxu0
      %v5769 = vpop.f32.mrb[0].mxu0
      %v5770 = vadd.f32 0.0, %v5769
      %v5771 = vpop.f32.mrb[0].mxu0
      %5772 = vmatprep.mubr.bf16.mxu0 0
      %5773 = vmatmul.mubr.bf16.gmra.mrb[0].mxu0 %v5550
      %v5774 = vpop.f32.mrb[0].mxu0
      %v5775 = vadd.f32 0.0, %v5774
      %v5776 = vpop.f32.mrb[0].mxu0
      %v5777 = vpop.f32.mrb[0].mxu0
      %v5778 = vadd.f32 0.0, %v5777
      %v5779 = vpop.f32.mrb[0].mxu0
      %5780 = vmatprep.mubr.bf16.mxu0 0
      %5781 = vmatmul.mubr.bf16.gmra.mrb[0].mxu0 %v5551
      %v5782 = vpop.f32.mrb[0].mxu0
      %v5783 = vadd.f32 0.0, %v5782
      %v5784 = vpop.f32.mrb[0].mxu0
      %v5785 = vpop.f32.mrb[0].mxu0
      %v5786 = vadd.f32 0.0, %v5785
      %v5787 = vpop.f32.mrb[0].mxu0
      %5788 = vmatprep.mubr.bf16.mxu0 0
      %5789 = vmatmul.mubr.bf16.gmra.mrb[0].mxu0 %v5552
      %v5790 = vpop.f32.mrb[0].mxu0
      %v5791 = vadd.f32 0.0, %v5790
      %v5792 = vpop.f32.mrb[0].mxu0
      %v5793 = vpop.f32.mrb[0].mxu0
      %v5794 = vadd.f32 0.0, %v5793
      %v5795 = vpop.f32.mrb[0].mxu0
      %5796 = vmatprep.mubr.bf16.mxu0 0
      %5797 = vmatmul.mubr.bf16.gmra.mrb[0].mxu0 %v5553
      %v5798 = vpop.f32.mrb[0].mxu0
      %v5799 = vadd.f32 0.0, %v5798
      %v5800 = vpop.f32.mrb[0].mxu0
      %v5801 = vpop.f32.mrb[0].mxu0
      %v5802 = vadd.f32 0.0, %v5801
      %v5803 = vpop.f32.mrb[0].mxu0
      %5804 = vmatprep.mubr.bf16.mxu0 0
      %5805 = vmatmul.mubr.bf16.gmra.mrb[0].mxu0 %v5554
      %v5806 = vpop.f32.mrb[0].mxu0
      %v5807 = vadd.f32 0.0, %v5806
      %v5808 = vpop.f32.mrb[0].mxu0
      %v5809 = vpop.f32.mrb[0].mxu0
      %v5810 = vadd.f32 0.0, %v5809
      %v5811 = vpop.f32.mrb[0].mxu0
      %5812 = vmatprep.mubr.bf16.mxu0 0
      %5813 = vmatmul.mubr.bf16.gmra.mrb[0].mxu0 %v5555
      %v5814 = vpop.f32.mrb[0].mxu0
      %v5815 = vadd.f32 0.0, %v5814
      %v5816 = vpop.f32.mrb[0].mxu0
      %v5817 = vpop.f32.mrb[0].mxu0
      %v5818 = vpop.f32.mrb[0].mxu0
      %5819 = vdwg.mxu0
      %v5836 = vunpack.c.l.b16 %v5387
      %v5837 = vunpack.c.l.b16 %v5388
      %v5838 = vunpack.c.l.b16 %v5389
      %v5839 = vunpack.c.l.b16 %v5390
      %v5840 = vunpack.c.l.b16 %v5391
      %v5841 = vunpack.c.l.b16 %v5392
      %v5842 = vunpack.c.l.b16 %v5393
      %v5843 = vunpack.c.l.b16 %v5394
      %v5844 = vunpack.c.l.b16 %v5395
      %v5845 = vunpack.c.l.b16 %v5396
      %v5846 = vunpack.c.l.b16 %v5397
      %v5847 = vunpack.c.l.b16 %v5398
      %v5848 = vunpack.c.l.b16 %v5399
      %v5849 = vunpack.c.l.b16 %v5400
      %v5850 = vunpack.c.l.b16 %v5401
      %v5851 = vunpack.c.l.b16 %v5402
      %v5852 = vpack.c.b16 %v5837, %v5836
      %v5853 = vpack.c.b16 %v5839, %v5838
      %v5854 = vpack.c.b16 %v5841, %v5840
      %v5855 = vpack.c.b16 %v5843, %v5842
      %v5856 = vpack.c.b16 %v5845, %v5844
      %v5857 = vpack.c.b16 %v5847, %v5846
      %v5858 = vpack.c.b16 %v5849, %v5848
      %v5859 = vpack.c.b16 %v5851, %v5850
      %5868 = vmatprep.subr.bf16.mxu0 0
      %5869 = vmatpush1.bf16.msra.mxu0 %v5852
      %5870 = vmatprep.subr.bf16.mxu0 0
      %5871 = vmatpush1.bf16.msra.mxu0 %v5853
      %5872 = vmatprep.subr.bf16.mxu0 0
      %5873 = vmatpush1.bf16.msra.mxu0 %v5854
      %5874 = vmatprep.subr.bf16.mxu0 0
      %5875 = vmatpush1.bf16.msra.mxu0 %v5855
      %5876 = vmatprep.subr.bf16.mxu0 0
      %5877 = vmatpush1.bf16.msra.mxu0 %v5856
      %5878 = vmatprep.subr.bf16.mxu0 0
      %5879 = vmatpush1.bf16.msra.mxu0 %v5857
      %5880 = vmatprep.subr.bf16.mxu0 0
      %5881 = vmatpush1.bf16.msra.mxu0 %v5858
      %5882 = vmatprep.subr.bf16.mxu0 0
      %5883 = vmatpush1.bf16.msra.mxu0 %v5859
      %5884 = vmatprep.subr.bf16.mxu0 0
      %5885 = vmatpush1.bf16.msra.mxu0 0
      %5886 = vmatprep.subr.bf16.mxu0 0
      %5887 = vmatpush1.bf16.msra.mxu0 0
      %5888 = vmatprep.subr.bf16.mxu0 0
      %5889 = vmatpush1.bf16.msra.mxu0 0
      %5890 = vmatprep.subr.bf16.mxu0 0
      %5891 = vmatpush1.bf16.msra.mxu0 0
      %5892 = vmatprep.subr.bf16.mxu0 0
      %5893 = vmatpush1.bf16.msra.mxu0 0
      %5894 = vmatprep.subr.bf16.mxu0 0
      %5895 = vmatpush1.bf16.msra.mxu0 0
      %5896 = vmatprep.subr.bf16.mxu0 0
      %5897 = vmatpush1.bf16.msra.mxu0 0
      %5898 = vmatprep.subr.bf16.mxu0 0
      %5899 = vmatpush1.bf16.msra.mxu0 0
      %5900 = vmatprep.mubr.bf16.mxu0 0
      %5901 = vmatmul.mubr.bf16.gmra.mrb[0].mxu0 %v5366
      %v5902 = vpop.f32.mrb[0].mxu0
      %v5903 = vadd.f32 %v5655, %v5902
      %v5904 = vpop.f32.mrb[0].mxu0
      %v5905 = vpop.f32.mrb[0].mxu0
      %v5906 = vadd.f32 %v5658, %v5905
      %v5907 = vpop.f32.mrb[0].mxu0
      %5908 = vmatprep.mubr.bf16.mxu0 0
      %5909 = vmatmul.mubr.bf16.gmra.mrb[0].mxu0 %v5367
      %v5910 = vpop.f32.mrb[0].mxu0
      %v5911 = vadd.f32 %v5663, %v5910
      %v5912 = vpop.f32.mrb[0].mxu0
      %v5913 = vpop.f32.mrb[0].mxu0
      %v5914 = vadd.f32 %v5666, %v5913
      %v5915 = vpop.f32.mrb[0].mxu0
      %5916 = vmatprep.mubr.bf16.mxu0 0
      %5917 = vmatmul.mubr.bf16.gmra.mrb[0].mxu0 %v5368
      %v5918 = vpop.f32.mrb[0].mxu0
      %v5919 = vadd.f32 %v5671, %v5918
      %v5920 = vpop.f32.mrb[0].mxu0
      %v5921 = vpop.f32.mrb[0].mxu0
      %v5922 = vadd.f32 %v5674, %v5921
      %v5923 = vpop.f32.mrb[0].mxu0
      %5924 = vmatprep.mubr.bf16.mxu0 0
      %5925 = vmatmul.mubr.bf16.gmra.mrb[0].mxu0 %v5369
      %v5926 = vpop.f32.mrb[0].mxu0
      %v5927 = vadd.f32 %v5679, %v5926
      %v5928 = vpop.f32.mrb[0].mxu0
      %v5929 = vpop.f32.mrb[0].mxu0
      %v5930 = vadd.f32 %v5682, %v5929
      %v5931 = vpop.f32.mrb[0].mxu0
      %5932 = vmatprep.mubr.bf16.mxu0 0
      %5933 = vmatmul.mubr.bf16.gmra.mrb[0].mxu0 %v5370
      %v5934 = vpop.f32.mrb[0].mxu0
      %v5935 = vadd.f32 %v5687, %v5934
      %v5936 = vpop.f32.mrb[0].mxu0
      %v5937 = vpop.f32.mrb[0].mxu0
      %v5938 = vadd.f32 %v5690, %v5937
      %v5939 = vpop.f32.mrb[0].mxu0
      %5940 = vmatprep.mubr.bf16.mxu0 0
      %5941 = vmatmul.mubr.bf16.gmra.mrb[0].mxu0 %v5371
      %v5942 = vpop.f32.mrb[0].mxu0
      %v5943 = vadd.f32 %v5695, %v5942
      %v5944 = vpop.f32.mrb[0].mxu0
      %v5945 = vpop.f32.mrb[0].mxu0
      %v5946 = vadd.f32 %v5698, %v5945
      %v5947 = vpop.f32.mrb[0].mxu0
      %5948 = vmatprep.mubr.bf16.mxu0 0
      %5949 = vmatmul.mubr.bf16.gmra.mrb[0].mxu0 %v5372
      %v5950 = vpop.f32.mrb[0].mxu0
      %v5951 = vadd.f32 %v5703, %v5950
      %v5952 = vpop.f32.mrb[0].mxu0
      %v5953 = vpop.f32.mrb[0].mxu0
      %v5954 = vadd.f32 %v5706, %v5953
      %v5955 = vpop.f32.mrb[0].mxu0
      %5956 = vmatprep.mubr.bf16.mxu0 0
      %5957 = vmatmul.mubr.bf16.gmra.mrb[0].mxu0 %v5373
      %v5958 = vpop.f32.mrb[0].mxu0
      %v5959 = vadd.f32 %v5711, %v5958
      %v5960 = vpop.f32.mrb[0].mxu0
      %v5961 = vpop.f32.mrb[0].mxu0
      %v5962 = vadd.f32 %v5714, %v5961
      %v5963 = vpop.f32.mrb[0].mxu0
      %5964 = vmatprep.mubr.bf16.mxu0 0
      %5965 = vmatmul.mubr.bf16.gmra.mrb[0].mxu0 %v5374
      %v5966 = vpop.f32.mrb[0].mxu0
      %v5967 = vadd.f32 %v5719, %v5966
      %v5968 = vpop.f32.mrb[0].mxu0
      %v5969 = vpop.f32.mrb[0].mxu0
      %v5970 = vadd.f32 %v5722, %v5969
      %v5971 = vpop.f32.mrb[0].mxu0
      %5972 = vmatprep.mubr.bf16.mxu0 0
      %5973 = vmatmul.mubr.bf16.gmra.mrb[0].mxu0 %v5375
      %v5974 = vpop.f32.mrb[0].mxu0
      %v5975 = vadd.f32 %v5727, %v5974
      %v5976 = vpop.f32.mrb[0].mxu0
      %v5977 = vpop.f32.mrb[0].mxu0
      %v5978 = vadd.f32 %v5730, %v5977
      %v5979 = vpop.f32.mrb[0].mxu0
      %5980 = vmatprep.mubr.bf16.mxu0 0
      %5981 = vmatmul.mubr.bf16.gmra.mrb[0].mxu0 %v5376
      %v5982 = vpop.f32.mrb[0].mxu0
      %v5983 = vadd.f32 %v5735, %v5982
      %v5984 = vpop.f32.mrb[0].mxu0
      %v5985 = vpop.f32.mrb[0].mxu0
      %v5986 = vadd.f32 %v5738, %v5985
      %v5987 = vpop.f32.mrb[0].mxu0
      %5988 = vmatprep.mubr.bf16.mxu0 0
      %5989 = vmatmul.mubr.bf16.gmra.mrb[0].mxu0 %v5377
      %v5990 = vpop.f32.mrb[0].mxu0
      %v5991 = vadd.f32 %v5743, %v5990
      %v5992 = vpop.f32.mrb[0].mxu0
      %v5993 = vpop.f32.mrb[0].mxu0
      %v5994 = vadd.f32 %v5746, %v5993
      %v5995 = vpop.f32.mrb[0].mxu0
      %5996 = vmatprep.mubr.bf16.mxu0 0
      %5997 = vmatmul.mubr.bf16.gmra.mrb[0].mxu0 %v5378
      %v5998 = vpop.f32.mrb[0].mxu0
      %v5999 = vadd.f32 %v5751, %v5998
      %v6000 = vpop.f32.mrb[0].mxu0
      %v6001 = vpop.f32.mrb[0].mxu0
      %v6002 = vadd.f32 %v5754, %v6001
      %v6003 = vpop.f32.mrb[0].mxu0
      %6004 = vmatprep.mubr.bf16.mxu0 0
      %6005 = vmatmul.mubr.bf16.gmra.mrb[0].mxu0 %v5379
      %v6006 = vpop.f32.mrb[0].mxu0
      %v6007 = vadd.f32 %v5759, %v6006
      %v6008 = vpop.f32.mrb[0].mxu0
      %v6009 = vpop.f32.mrb[0].mxu0
      %v6010 = vadd.f32 %v5762, %v6009
      %v6011 = vpop.f32.mrb[0].mxu0
      %6012 = vmatprep.mubr.bf16.mxu0 0
      %6013 = vmatmul.mubr.bf16.gmra.mrb[0].mxu0 %v5380
      %v6014 = vpop.f32.mrb[0].mxu0
      %v6015 = vadd.f32 %v5767, %v6014
      %v6016 = vpop.f32.mrb[0].mxu0
      %v6017 = vpop.f32.mrb[0].mxu0
      %v6018 = vadd.f32 %v5770, %v6017
      %v6019 = vpop.f32.mrb[0].mxu0
      %6020 = vmatprep.mubr.bf16.mxu0 0
      %6021 = vmatmul.mubr.bf16.gmra.mrb[0].mxu0 %v5381
      %v6022 = vpop.f32.mrb[0].mxu0
      %v6023 = vadd.f32 %v5775, %v6022
      %v6024 = vpop.f32.mrb[0].mxu0
      %v6025 = vpop.f32.mrb[0].mxu0
      %v6026 = vadd.f32 %v5778, %v6025
      %v6027 = vpop.f32.mrb[0].mxu0
      %6028 = vmatprep.mubr.bf16.mxu0 0
      %6029 = vmatmul.mubr.bf16.gmra.mrb[0].mxu0 %v5382
      %v6030 = vpop.f32.mrb[0].mxu0
      %v6031 = vadd.f32 %v5783, %v6030
      %v6032 = vpop.f32.mrb[0].mxu0
      %v6033 = vpop.f32.mrb[0].mxu0
      %v6034 = vadd.f32 %v5786, %v6033
      %v6035 = vpop.f32.mrb[0].mxu0
      %6036 = vmatprep.mubr.bf16.mxu0 0
      %6037 = vmatmul.mubr.bf16.gmra.mrb[0].mxu0 %v5383
      %v6038 = vpop.f32.mrb[0].mxu0
      %v6039 = vadd.f32 %v5791, %v6038
      %v6040 = vpop.f32.mrb[0].mxu0
      %v6041 = vpop.f32.mrb[0].mxu0
      %v6042 = vadd.f32 %v5794, %v6041
      %v6043 = vpop.f32.mrb[0].mxu0
      %6044 = vmatprep.mubr.bf16.mxu0 0
      %6045 = vmatmul.mubr.bf16.gmra.mrb[0].mxu0 %v5384
      %v6046 = vpop.f32.mrb[0].mxu0
      %v6047 = vadd.f32 %v5799, %v6046
      %v6048 = vpop.f32.mrb[0].mxu0
      %v6049 = vpop.f32.mrb[0].mxu0
      %v6050 = vadd.f32 %v5802, %v6049
      %v6051 = vpop.f32.mrb[0].mxu0
      %6052 = vmatprep.mubr.bf16.mxu0 0
      %6053 = vmatmul.mubr.bf16.gmra.mrb[0].mxu0 %v5385
      %v6054 = vpop.f32.mrb[0].mxu0
      %v6055 = vadd.f32 %v5807, %v6054
      %v6056 = vpop.f32.mrb[0].mxu0
      %v6057 = vpop.f32.mrb[0].mxu0
      %v6058 = vadd.f32 %v5810, %v6057
      %v6059 = vpop.f32.mrb[0].mxu0
      %6060 = vmatprep.mubr.bf16.mxu0 0
      %6061 = vmatmul.mubr.bf16.gmra.mrb[0].mxu0 %v5386
      %v6062 = vpop.f32.mrb[0].mxu0
      %v6063 = vadd.f32 %v5815, %v6062
      %v6064 = vpop.f32.mrb[0].mxu0
      %v6065 = vpop.f32.mrb[0].mxu0
      %v6066 = vpop.f32.mrb[0].mxu0
      %6067 = vdwg.mxu0
      %6068 = vst [vmem:[%s359] sm:$0xff] %v5903
      %6069 = vst [vmem:[%s359 + $0x8] sm:$0xff] %v5906
      %6070 = vst [vmem:[%s359 + $0x10] sm:$0xff] %v5911
      %6071 = vst [vmem:[%s359 + $0x18] sm:$0xff] %v5914
      %6072 = vst [vmem:[%s359 + $0x20] sm:$0xff] %v5919
      %6073 = vst [vmem:[%s359 + $0x28] sm:$0xff] %v5922
      %6074 = vst [vmem:[%s359 + $0x30] sm:$0xff] %v5927
      %6075 = vst [vmem:[%s359 + $0x38] sm:$0xff] %v5930
      %6076 = vst [vmem:[%s359 + $0x40] sm:$0xff] %v5935
      %6077 = vst [vmem:[%s359 + $0x48] sm:$0xff] %v5938
      %6078 = vst [vmem:[%s359 + $0x50] sm:$0xff] %v5943
      %6079 = vst [vmem:[%s359 + $0x58] sm:$0xff] %v5946
      %6080 = vst [vmem:[%s359 + $0x60] sm:$0xff] %v5951
      %6081 = vst [vmem:[%s359 + $0x68] sm:$0xff] %v5954
      %6082 = vst [vmem:[%s359 + $0x70] sm:$0xff] %v5959
      %6083 = vst [vmem:[%s359 + $0x78] sm:$0xff] %v5962
      %6084 = vst [vmem:[%s359 + $0x80] sm:$0xff] %v5967
      %6085 = vst [vmem:[%s359 + $0x88] sm:$0xff] %v5970
      %6086 = vst [vmem:[%s359 + $0x90] sm:$0xff] %v5975
      %6087 = vst [vmem:[%s359 + $0x98] sm:$0xff] %v5978
      %6088 = vst [vmem:[%s359 + $0xa0] sm:$0xff] %v5983
      %6089 = vst [vmem:[%s359 + $0xa8] sm:$0xff] %v5986
      %6090 = vst [vmem:[%s359 + $0xb0] sm:$0xff] %v5991
      %6091 = vst [vmem:[%s359 + $0xb8] sm:$0xff] %v5994
      %6092 = vst [vmem:[%s359 + $0xc0] sm:$0xff] %v5999
      %6093 = vst [vmem:[%s359 + $0xc8] sm:$0xff] %v6002
      %6094 = vst [vmem:[%s359 + $0xd0] sm:$0xff] %v6007
      %6095 = vst [vmem:[%s359 + $0xd8] sm:$0xff] %v6010
      %6096 = vst [vmem:[%s359 + $0xe0] sm:$0xff] %v6015
      %6097 = vst [vmem:[%s359 + $0xe8] sm:$0xff] %v6018
      %6098 = vst [vmem:[%s359 + $0xf0] sm:$0xff] %v6023
      %6099 = vst [vmem:[%s359 + $0xf8] sm:$0xff] %v6026
      %6100 = vst [vmem:[%s359 + $0x100] sm:$0xff] %v6031
      %6101 = vst [vmem:[%s359 + $0x108] sm:$0xff] %v6034
      %6102 = vst [vmem:[%s359 + $0x110] sm:$0xff] %v6039
      %6103 = vst [vmem:[%s359 + $0x118] sm:$0xff] %v6042
      %6104 = vst [vmem:[%s359 + $0x120] sm:$0xff] %v6047
      %6105 = vst [vmem:[%s359 + $0x128] sm:$0xff] %v6050
      %6106 = vst [vmem:[%s359 + $0x130] sm:$0xff] %v6055
      %6107 = vst [vmem:[%s359 + $0x138] sm:$0xff] %v6058
      %6108 = vst [vmem:[%s359 + $0x140] sm:$0xf] %v6063
      %p6109 = scmp.lt.s32.totalorder %s21, 1
      %s6110 = scalar_select %p6109, %s21, 1
      %s6111 = smul.addr %s6110, 41
      %s6112 = smul.addr %s6111, 8
      %s6113 = scalar_lea.vmem %s10, %s6112
      // Predicated region
      $region61: #{bottleneck_forward.1} parent=59 // pred_check
        %p6114 = pneg %p254
      $region62: #{bottleneck_forward.1} parent=59 // pred_check_branch
        %6116 = sbr.rel (%p6114) target = $region64
      $region63: #{bottleneck_forward.1} parent=59 // pred_region
        _
      $region64: #{bottleneck_forward.1} parent=59 // pred_fallthru
        _
    $region60: #{bottleneck_forward.1} parent=5 // pred_fallthru
      _
    %p6117 = scmp.le.s32.totalorder 2, %s16
    // Predicated region
    $region65: #{bottleneck_forward.1} parent=5 // pred_check
      %p6118 = pneg %p6117
    $region66: #{bottleneck_forward.1} parent=5 // pred_check_branch
      %6120 = sbr.rel (%p6118) target = $region68
    $region67: #{bottleneck_forward.1} parent=5 // pred_region
      %s6121 = ssub.s32 %s16, 2
      // Predicated region
      $region69: #{bottleneck_forward.1} parent=67 // pred_check
        %p6122 = pneg %p260
      $region70: #{bottleneck_forward.1} parent=67 // pred_check_branch
        %6124 = sbr.rel (%p6122) target = $region72
      $region71: #{bottleneck_forward.1} parent=67 // pred_region
        %p6125 = scmp.lt.s32.totalorder %s22, 1
        %s6126 = scalar_select %p6125, %s22, 1
        %s6127 = smul.addr %s6126, 41
        %s6128 = smul.addr %s6127, 8
        %s6129 = scalar_lea.vmem %s10, %s6128
      $region72: #{bottleneck_forward.1} parent=67 // pred_fallthru
        _
    $region68: #{bottleneck_forward.1} parent=5 // pred_fallthru
      _
  $region6: #{bottleneck_forward.1} parent=0 // loop_footer
    %s20 = sadd.s32 1, %s16
  $region7: #{bottleneck_forward.1} parent=0 // loop_footer_branch
    %15 = sbr.rel target = $region3
  $region8: #{bottleneck_forward.1} parent=0 // loop_exit
    _

</llo_original>
